<compile_context>
chip_gen: v5e
topology: v5e:2x2
jax: 0.10.0
libtpu: 0.0.40
codegen_flags: <defaults>
</compile_context>

<pallas_src>
import functools

import jax
import jax.numpy as jnp
from jax.experimental import pallas as pl
from jax.experimental.pallas import tpu as pltpu


# ---------------------------------------------------------------------------
# Fused kernel: conv(KxK, pre-padded) + bias + AdaIN (instance norm + affine) + ReLU
# ---------------------------------------------------------------------------
def _conv_adain_relu_kernel(x_ref, w_ref, bconv_ref, gamma_ref, beta_ref, o_ref,
                            *, K, H_out, W_out, stride, eps):
    """One batch element per grid step.

    x_ref:     (Hp, Wp, Cin)   pre-padded input tile, bf16
    w_ref:     (K*K, Cin, Cout) conv taps, bf16
    bconv_ref: (1, Cout)       conv bias, f32
    gamma_ref: (1, Cout)       AdaIN weight for this sample, f32
    beta_ref:  (1, Cout)       AdaIN bias for this sample, f32
    o_ref:     (H_out, W_out, Cout) output, f32
    """
    cin = x_ref.shape[-1]
    cout = w_ref.shape[-1]
    hw = H_out * W_out

    # --- KxK conv as K*K shifted (HW, Cin) @ (Cin, Cout) bf16 MXU matmuls, f32 acc.
    acc = jnp.zeros((hw, cout), jnp.float32)
    for ky in range(K):
        for kx in range(K):
            if stride == 1:
                xs = x_ref[pl.ds(ky, H_out), pl.ds(kx, W_out), :]
            else:
                xs = x_ref[pl.ds(ky, H_out, stride=stride),
                           pl.ds(kx, W_out, stride=stride), :]
            xs = xs.reshape(hw, cin)
            acc = acc + jnp.dot(xs, w_ref[ky * K + kx],
                                preferred_element_type=jnp.float32)
    acc = acc + bconv_ref[...]                                   # conv bias

    # --- AdaIN: instance statistics over spatial (rows), biased variance.
    mean = jnp.mean(acc, axis=0, keepdims=True)                  # (1, Cout)
    diff = acc - mean
    var = jnp.mean(diff * diff, axis=0, keepdims=True)           # (1, Cout)
    inv = jax.lax.rsqrt(var + eps)                               # EUP
    y = diff * (inv * gamma_ref[...]) + beta_ref[...]

    # --- ReLU + lane-dense store.
    o_ref[...] = jnp.maximum(y, 0.0).reshape(H_out, W_out, cout)


# ---------------------------------------------------------------------------
# Wrapper (public API matches the PyTorch module: NCHW in / NCHW out, f32)
# ---------------------------------------------------------------------------
def conv2d_block_pallas(x, conv_w, conv_b, adain_gamma, adain_beta,
                        *, kernel_size, stride, padding, eps=1e-5):
    """x: (B, Cin, H, W) f32.  conv_w: (Cout, Cin, K, K) (torch OIHW layout).
    adain_gamma / adain_beta: (B, Cout) == torch's (B*Cout,) weight/bias reshaped.
    Returns (B, Cout, H_out, W_out) f32.
    """
    B, Cin, H, W = x.shape
    Cout = conv_w.shape[0]
    K, s, p = kernel_size, stride, padding
    Hp, Wp = H + 2 * p, W + 2 * p
    H_out = (Hp - K) // s + 1
    W_out = (Wp - K) // s + 1

    # NCHW -> NHWC, zero-pad, cast to bf16 (single wrapper pass; halves kernel DMA).
    x_hwc = jnp.transpose(x, (0, 2, 3, 1))
    x_pad = jnp.pad(x_hwc, ((0, 0), (p, p), (p, p), (0, 0))).astype(jnp.bfloat16)

    # OIHW -> (K*K, Cin, Cout) bf16: each tap is a lane-dense (Cin, Cout) MXU operand.
    w_taps = jnp.transpose(conv_w, (2, 3, 1, 0)).reshape(K * K, Cin, Cout)
    w_taps = w_taps.astype(jnp.bfloat16)

    bconv = conv_b.reshape(1, Cout).astype(jnp.float32)
    gamma = adain_gamma.reshape(B, 1, Cout).astype(jnp.float32)
    beta = adain_beta.reshape(B, 1, Cout).astype(jnp.float32)

    kern = functools.partial(_conv_adain_relu_kernel,
                             K=K, H_out=H_out, W_out=W_out, stride=s, eps=eps)

    out_nhwc = pl.pallas_call(
        kern,
        out_shape=jax.ShapeDtypeStruct((B, H_out, W_out, Cout), jnp.float32),
        grid=(B,),
        in_specs=[
            pl.BlockSpec((None, Hp, Wp, Cin), lambda b: (b, 0, 0, 0)),
            pl.BlockSpec((K * K, Cin, Cout), lambda b: (0, 0, 0)),
            pl.BlockSpec((1, Cout), lambda b: (0, 0)),
            pl.BlockSpec((None, 1, Cout), lambda b: (b, 0, 0)),
            pl.BlockSpec((None, 1, Cout), lambda b: (b, 0, 0)),
        ],
        out_specs=pl.BlockSpec((None, H_out, W_out, Cout), lambda b: (b, 0, 0, 0)),
        compiler_params=pltpu.CompilerParams(
            dimension_semantics=("parallel",)),
    )(x_pad, w_taps, bconv, gamma, beta)

    return jnp.transpose(out_nhwc, (0, 3, 1, 2))                 # NHWC -> NCHW


# ---------------------------------------------------------------------------
# Pure-JAX reference mirroring the PyTorch forward exactly (f32), for validation
# ---------------------------------------------------------------------------
def reference_forward(x, conv_w, conv_b, gamma, beta,
                      *, kernel_size, stride, padding, eps=1e-5):
    s, p = stride, padding
    y = jax.lax.conv_general_dilated(
        x, conv_w, window_strides=(s, s), padding=((p, p), (p, p)),
        dimension_numbers=('NCHW', 'OIHW', 'NCHW'))
    y = y + conv_b[None, :, None, None]
    # AdaIN == F.batch_norm over the (1, B*C, H, W) view with training=True:
    # per-(b, c) spatial statistics, biased variance, then per-(b, c) affine.
    mean = jnp.mean(y, axis=(2, 3), keepdims=True)
    var = jnp.mean((y - mean) ** 2, axis=(2, 3), keepdims=True)
    yn = (y - mean) * jax.lax.rsqrt(var + eps)
    yn = yn * gamma[:, :, None, None] + beta[:, :, None, None]
    return jnp.maximum(yn, 0.0)


if __name__ == "__main__":
    B, Cin, Cout, H, W = 2, 128, 128, 16, 16
    K, S, P = 3, 1, 1

    key = jax.random.PRNGKey(0)
    k_x, k_w, k_b, k_g, k_be = jax.random.split(key, 5)
    x = jax.random.normal(k_x, (B, Cin, H, W), jnp.float32)
    conv_w = jax.random.normal(k_w, (Cout, Cin, K, K), jnp.float32) * 0.05
    conv_b = jax.random.normal(k_b, (Cout,), jnp.float32) * 0.05
    # AdaIN weight/bias are assigned externally in the PyTorch module (shape (B*Cout,));
    # generated deterministically here as (B, Cout).
    adain_gamma = 1.0 + 0.1 * jax.random.normal(k_g, (B, Cout), jnp.float32)
    adain_beta = 0.1 * jax.random.normal(k_be, (B, Cout), jnp.float32)

    fwd = jax.jit(functools.partial(conv2d_block_pallas,
                                    kernel_size=K, stride=S, padding=P))
    out = jax.block_until_ready(fwd(x, conv_w, conv_b, adain_gamma, adain_beta))

    ref = jax.block_until_ready(reference_forward(
        x, conv_w, conv_b, adain_gamma, adain_beta,
        kernel_size=K, stride=S, padding=P))

    assert out.shape == (B, Cout, H, W), out.shape
    scale = float(jnp.max(jnp.abs(ref))) + 1e-6
    max_err = float(jnp.max(jnp.abs(out - ref)))
    mean_err = float(jnp.mean(jnp.abs(out - ref)))
    assert max_err <= 5e-2 * scale, (max_err, scale)
    assert mean_err <= 5e-3 * scale, (mean_err, scale)
    print("KERNEL_OK")
</pallas_src>

<mosaic_0001>
module attributes {stable_mosaic.version = 11 : i64} {
  func.func @_conv_adain_relu_kernel(%arg0: i32, %arg1: memref<1x18x18x128xbf16, #tpu.memory_space<vmem>>, %arg2: memref<9x128x128xbf16, #tpu.memory_space<vmem>>, %arg3: memref<1x128xf32, #tpu.memory_space<vmem>>, %arg4: memref<1x1x128xf32, #tpu.memory_space<vmem>>, %arg5: memref<1x1x128xf32, #tpu.memory_space<vmem>>, %arg6: memref<1x16x16x128xf32, #tpu.memory_space<vmem>>) attributes {dimension_semantics = [#tpu.dimension_semantics<parallel>], iteration_bounds = array<i64: 2>, scalar_prefetch = 0 : i64, scratch_operands = 0 : i64, tpu.core_type = #tpu.core_type<tc>, window_params = [{transform_indices = @transform_0, window_bounds = array<i64: 1, 18, 18, 128>}, {pipeline_mode = #tpu.pipeline_mode<synchronous>, transform_indices = @transform_1, window_bounds = array<i64: 9, 128, 128>}, {pipeline_mode = #tpu.pipeline_mode<synchronous>, transform_indices = @transform_2, window_bounds = array<i64: 1, 128>}, {transform_indices = @transform_3, window_bounds = array<i64: 1, 1, 128>}, {transform_indices = @transform_4, window_bounds = array<i64: 1, 1, 128>}, {transform_indices = @transform_5, window_bounds = array<i64: 1, 16, 16, 128>}]} {
    %cst = arith.constant 0.000000e+00 : f32
    %0 = vector.broadcast %cst : f32 to vector<256x128xf32>
    %c0 = arith.constant 0 : index
    %c0_0 = arith.constant 0 : index
    %c0_1 = arith.constant 0 : index
    %c0_2 = arith.constant 0 : index
    %1 = vector.load %arg1[%c0, %c0_0, %c0_1, %c0_2] : memref<1x18x18x128xbf16, #tpu.memory_space<vmem>>, vector<1x16x16x128xbf16>
    %2 = vector.shape_cast %1 : vector<1x16x16x128xbf16> to vector<16x16x128xbf16>
    %3 = vector.shape_cast %2 : vector<16x16x128xbf16> to vector<256x128xbf16>
    %c0_3 = arith.constant 0 : index
    %c0_4 = arith.constant 0 : index
    %c0_5 = arith.constant 0 : index
    %4 = vector.load %arg2[%c0_3, %c0_4, %c0_5] : memref<9x128x128xbf16, #tpu.memory_space<vmem>>, vector<1x128x128xbf16>
    %5 = vector.shape_cast %4 : vector<1x128x128xbf16> to vector<128x128xbf16>
    %cst_6 = arith.constant dense<0.000000e+00> : vector<256x128xf32>
    %6 = tpu.matmul %3, %5, %cst_6 {dimension_numbers = #tpu.dot_dimension_numbers<[1], [0], [0], [1], [0, 0, 1, 1], [], []>} : vector<256x128xbf16>, vector<128x128xbf16>, vector<256x128xf32> -> vector<256x128xf32>
    %7 = arith.addf %0, %6 : vector<256x128xf32>
    %c0_7 = arith.constant 0 : index
    %c0_8 = arith.constant 0 : index
    %c1 = arith.constant 1 : index
    %c0_9 = arith.constant 0 : index
    %8 = vector.load %arg1[%c0_7, %c0_8, %c1, %c0_9] : memref<1x18x18x128xbf16, #tpu.memory_space<vmem>>, vector<1x16x16x128xbf16>
    %9 = vector.shape_cast %8 : vector<1x16x16x128xbf16> to vector<16x16x128xbf16>
    %10 = vector.shape_cast %9 : vector<16x16x128xbf16> to vector<256x128xbf16>
    %c1_10 = arith.constant 1 : index
    %c0_11 = arith.constant 0 : index
    %c0_12 = arith.constant 0 : index
    %11 = vector.load %arg2[%c1_10, %c0_11, %c0_12] : memref<9x128x128xbf16, #tpu.memory_space<vmem>>, vector<1x128x128xbf16>
    %12 = vector.shape_cast %11 : vector<1x128x128xbf16> to vector<128x128xbf16>
    %cst_13 = arith.constant dense<0.000000e+00> : vector<256x128xf32>
    %13 = tpu.matmul %10, %12, %cst_13 {dimension_numbers = #tpu.dot_dimension_numbers<[1], [0], [0], [1], [0, 0, 1, 1], [], []>} : vector<256x128xbf16>, vector<128x128xbf16>, vector<256x128xf32> -> vector<256x128xf32>
    %14 = arith.addf %7, %13 : vector<256x128xf32>
    %c0_14 = arith.constant 0 : index
    %c0_15 = arith.constant 0 : index
    %c2 = arith.constant 2 : index
    %c0_16 = arith.constant 0 : index
    %15 = vector.load %arg1[%c0_14, %c0_15, %c2, %c0_16] : memref<1x18x18x128xbf16, #tpu.memory_space<vmem>>, vector<1x16x16x128xbf16>
    %16 = vector.shape_cast %15 : vector<1x16x16x128xbf16> to vector<16x16x128xbf16>
    %17 = vector.shape_cast %16 : vector<16x16x128xbf16> to vector<256x128xbf16>
    %c2_17 = arith.constant 2 : index
    %c0_18 = arith.constant 0 : index
    %c0_19 = arith.constant 0 : index
    %18 = vector.load %arg2[%c2_17, %c0_18, %c0_19] : memref<9x128x128xbf16, #tpu.memory_space<vmem>>, vector<1x128x128xbf16>
    %19 = vector.shape_cast %18 : vector<1x128x128xbf16> to vector<128x128xbf16>
    %cst_20 = arith.constant dense<0.000000e+00> : vector<256x128xf32>
    %20 = tpu.matmul %17, %19, %cst_20 {dimension_numbers = #tpu.dot_dimension_numbers<[1], [0], [0], [1], [0, 0, 1, 1], [], []>} : vector<256x128xbf16>, vector<128x128xbf16>, vector<256x128xf32> -> vector<256x128xf32>
    %21 = arith.addf %14, %20 : vector<256x128xf32>
    %c0_21 = arith.constant 0 : index
    %c1_22 = arith.constant 1 : index
    %c0_23 = arith.constant 0 : index
    %c0_24 = arith.constant 0 : index
    %22 = vector.load %arg1[%c0_21, %c1_22, %c0_23, %c0_24] : memref<1x18x18x128xbf16, #tpu.memory_space<vmem>>, vector<1x16x16x128xbf16>
    %23 = vector.shape_cast %22 : vector<1x16x16x128xbf16> to vector<16x16x128xbf16>
    %24 = vector.shape_cast %23 : vector<16x16x128xbf16> to vector<256x128xbf16>
    %c3 = arith.constant 3 : index
    %c0_25 = arith.constant 0 : index
    %c0_26 = arith.constant 0 : index
    %25 = vector.load %arg2[%c3, %c0_25, %c0_26] : memref<9x128x128xbf16, #tpu.memory_space<vmem>>, vector<1x128x128xbf16>
    %26 = vector.shape_cast %25 : vector<1x128x128xbf16> to vector<128x128xbf16>
    %cst_27 = arith.constant dense<0.000000e+00> : vector<256x128xf32>
    %27 = tpu.matmul %24, %26, %cst_27 {dimension_numbers = #tpu.dot_dimension_numbers<[1], [0], [0], [1], [0, 0, 1, 1], [], []>} : vector<256x128xbf16>, vector<128x128xbf16>, vector<256x128xf32> -> vector<256x128xf32>
    %28 = arith.addf %21, %27 : vector<256x128xf32>
    %c0_28 = arith.constant 0 : index
    %c1_29 = arith.constant 1 : index
    %c1_30 = arith.constant 1 : index
    %c0_31 = arith.constant 0 : index
    %29 = vector.load %arg1[%c0_28, %c1_29, %c1_30, %c0_31] : memref<1x18x18x128xbf16, #tpu.memory_space<vmem>>, vector<1x16x16x128xbf16>
    %30 = vector.shape_cast %29 : vector<1x16x16x128xbf16> to vector<16x16x128xbf16>
    %31 = vector.shape_cast %30 : vector<16x16x128xbf16> to vector<256x128xbf16>
    %c4 = arith.constant 4 : index
    %c0_32 = arith.constant 0 : index
    %c0_33 = arith.constant 0 : index
    %32 = vector.load %arg2[%c4, %c0_32, %c0_33] : memref<9x128x128xbf16, #tpu.memory_space<vmem>>, vector<1x128x128xbf16>
    %33 = vector.shape_cast %32 : vector<1x128x128xbf16> to vector<128x128xbf16>
    %cst_34 = arith.constant dense<0.000000e+00> : vector<256x128xf32>
    %34 = tpu.matmul %31, %33, %cst_34 {dimension_numbers = #tpu.dot_dimension_numbers<[1], [0], [0], [1], [0, 0, 1, 1], [], []>} : vector<256x128xbf16>, vector<128x128xbf16>, vector<256x128xf32> -> vector<256x128xf32>
    %35 = arith.addf %28, %34 : vector<256x128xf32>
    %c0_35 = arith.constant 0 : index
    %c1_36 = arith.constant 1 : index
    %c2_37 = arith.constant 2 : index
    %c0_38 = arith.constant 0 : index
    %36 = vector.load %arg1[%c0_35, %c1_36, %c2_37, %c0_38] : memref<1x18x18x128xbf16, #tpu.memory_space<vmem>>, vector<1x16x16x128xbf16>
    %37 = vector.shape_cast %36 : vector<1x16x16x128xbf16> to vector<16x16x128xbf16>
    %38 = vector.shape_cast %37 : vector<16x16x128xbf16> to vector<256x128xbf16>
    %c5 = arith.constant 5 : index
    %c0_39 = arith.constant 0 : index
    %c0_40 = arith.constant 0 : index
    %39 = vector.load %arg2[%c5, %c0_39, %c0_40] : memref<9x128x128xbf16, #tpu.memory_space<vmem>>, vector<1x128x128xbf16>
    %40 = vector.shape_cast %39 : vector<1x128x128xbf16> to vector<128x128xbf16>
    %cst_41 = arith.constant dense<0.000000e+00> : vector<256x128xf32>
    %41 = tpu.matmul %38, %40, %cst_41 {dimension_numbers = #tpu.dot_dimension_numbers<[1], [0], [0], [1], [0, 0, 1, 1], [], []>} : vector<256x128xbf16>, vector<128x128xbf16>, vector<256x128xf32> -> vector<256x128xf32>
    %42 = arith.addf %35, %41 : vector<256x128xf32>
    %c0_42 = arith.constant 0 : index
    %c2_43 = arith.constant 2 : index
    %c0_44 = arith.constant 0 : index
    %c0_45 = arith.constant 0 : index
    %43 = vector.load %arg1[%c0_42, %c2_43, %c0_44, %c0_45] : memref<1x18x18x128xbf16, #tpu.memory_space<vmem>>, vector<1x16x16x128xbf16>
    %44 = vector.shape_cast %43 : vector<1x16x16x128xbf16> to vector<16x16x128xbf16>
    %45 = vector.shape_cast %44 : vector<16x16x128xbf16> to vector<256x128xbf16>
    %c6 = arith.constant 6 : index
    %c0_46 = arith.constant 0 : index
    %c0_47 = arith.constant 0 : index
    %46 = vector.load %arg2[%c6, %c0_46, %c0_47] : memref<9x128x128xbf16, #tpu.memory_space<vmem>>, vector<1x128x128xbf16>
    %47 = vector.shape_cast %46 : vector<1x128x128xbf16> to vector<128x128xbf16>
    %cst_48 = arith.constant dense<0.000000e+00> : vector<256x128xf32>
    %48 = tpu.matmul %45, %47, %cst_48 {dimension_numbers = #tpu.dot_dimension_numbers<[1], [0], [0], [1], [0, 0, 1, 1], [], []>} : vector<256x128xbf16>, vector<128x128xbf16>, vector<256x128xf32> -> vector<256x128xf32>
    %49 = arith.addf %42, %48 : vector<256x128xf32>
    %c0_49 = arith.constant 0 : index
    %c2_50 = arith.constant 2 : index
    %c1_51 = arith.constant 1 : index
    %c0_52 = arith.constant 0 : index
    %50 = vector.load %arg1[%c0_49, %c2_50, %c1_51, %c0_52] : memref<1x18x18x128xbf16, #tpu.memory_space<vmem>>, vector<1x16x16x128xbf16>
    %51 = vector.shape_cast %50 : vector<1x16x16x128xbf16> to vector<16x16x128xbf16>
    %52 = vector.shape_cast %51 : vector<16x16x128xbf16> to vector<256x128xbf16>
    %c7 = arith.constant 7 : index
    %c0_53 = arith.constant 0 : index
    %c0_54 = arith.constant 0 : index
    %53 = vector.load %arg2[%c7, %c0_53, %c0_54] : memref<9x128x128xbf16, #tpu.memory_space<vmem>>, vector<1x128x128xbf16>
    %54 = vector.shape_cast %53 : vector<1x128x128xbf16> to vector<128x128xbf16>
    %cst_55 = arith.constant dense<0.000000e+00> : vector<256x128xf32>
    %55 = tpu.matmul %52, %54, %cst_55 {dimension_numbers = #tpu.dot_dimension_numbers<[1], [0], [0], [1], [0, 0, 1, 1], [], []>} : vector<256x128xbf16>, vector<128x128xbf16>, vector<256x128xf32> -> vector<256x128xf32>
    %56 = arith.addf %49, %55 : vector<256x128xf32>
    %c0_56 = arith.constant 0 : index
    %c2_57 = arith.constant 2 : index
    %c2_58 = arith.constant 2 : index
    %c0_59 = arith.constant 0 : index
    %57 = vector.load %arg1[%c0_56, %c2_57, %c2_58, %c0_59] : memref<1x18x18x128xbf16, #tpu.memory_space<vmem>>, vector<1x16x16x128xbf16>
    %58 = vector.shape_cast %57 : vector<1x16x16x128xbf16> to vector<16x16x128xbf16>
    %59 = vector.shape_cast %58 : vector<16x16x128xbf16> to vector<256x128xbf16>
    %c8 = arith.constant 8 : index
    %c0_60 = arith.constant 0 : index
    %c0_61 = arith.constant 0 : index
    %60 = vector.load %arg2[%c8, %c0_60, %c0_61] : memref<9x128x128xbf16, #tpu.memory_space<vmem>>, vector<1x128x128xbf16>
    %61 = vector.shape_cast %60 : vector<1x128x128xbf16> to vector<128x128xbf16>
    %cst_62 = arith.constant dense<0.000000e+00> : vector<256x128xf32>
    %62 = tpu.matmul %59, %61, %cst_62 {dimension_numbers = #tpu.dot_dimension_numbers<[1], [0], [0], [1], [0, 0, 1, 1], [], []>} : vector<256x128xbf16>, vector<128x128xbf16>, vector<256x128xf32> -> vector<256x128xf32>
    %63 = arith.addf %56, %62 : vector<256x128xf32>
    %c0_63 = arith.constant 0 : index
    %c0_64 = arith.constant 0 : index
    %64 = vector.load %arg3[%c0_63, %c0_64] : memref<1x128xf32, #tpu.memory_space<vmem>>, vector<1x128xf32>
    %65 = vector.broadcast %64 : vector<1x128xf32> to vector<256x128xf32>
    %66 = arith.addf %63, %65 : vector<256x128xf32>
    %cst_65 = arith.constant dense<0.000000e+00> : vector<128xf32>
    %67 = vector.multi_reduction <add>, %66, %cst_65 [0] : vector<256x128xf32> to vector<128xf32>
    %68 = vector.shape_cast %67 : vector<128xf32> to vector<1x128xf32>
    %cst_66 = arith.constant 2.560000e+02 : f32
    %69 = vector.broadcast %cst_66 : f32 to vector<1x128xf32>
    %70 = arith.divf %68, %69 : vector<1x128xf32>
    %71 = vector.broadcast %70 : vector<1x128xf32> to vector<256x128xf32>
    %72 = arith.subf %66, %71 : vector<256x128xf32>
    %73 = arith.mulf %72, %72 : vector<256x128xf32>
    %cst_67 = arith.constant dense<0.000000e+00> : vector<128xf32>
    %74 = vector.multi_reduction <add>, %73, %cst_67 [0] : vector<256x128xf32> to vector<128xf32>
    %75 = vector.shape_cast %74 : vector<128xf32> to vector<1x128xf32>
    %cst_68 = arith.constant 2.560000e+02 : f32
    %76 = vector.broadcast %cst_68 : f32 to vector<1x128xf32>
    %77 = arith.divf %75, %76 : vector<1x128xf32>
    %cst_69 = arith.constant 9.99999974E-6 : f32
    %78 = vector.broadcast %cst_69 : f32 to vector<1x128xf32>
    %79 = arith.addf %77, %78 : vector<1x128xf32>
    %80 = math.rsqrt %79 : vector<1x128xf32>
    %c0_70 = arith.constant 0 : index
    %c0_71 = arith.constant 0 : index
    %c0_72 = arith.constant 0 : index
    %81 = vector.load %arg4[%c0_70, %c0_71, %c0_72] : memref<1x1x128xf32, #tpu.memory_space<vmem>>, vector<1x1x128xf32>
    %82 = vector.shape_cast %81 : vector<1x1x128xf32> to vector<1x128xf32>
    %83 = arith.mulf %80, %82 : vector<1x128xf32>
    %84 = vector.broadcast %83 : vector<1x128xf32> to vector<256x128xf32>
    %85 = arith.mulf %72, %84 : vector<256x128xf32>
    %c0_73 = arith.constant 0 : index
    %c0_74 = arith.constant 0 : index
    %c0_75 = arith.constant 0 : index
    %86 = vector.load %arg5[%c0_73, %c0_74, %c0_75] : memref<1x1x128xf32, #tpu.memory_space<vmem>>, vector<1x1x128xf32>
    %87 = vector.shape_cast %86 : vector<1x1x128xf32> to vector<1x128xf32>
    %88 = vector.broadcast %87 : vector<1x128xf32> to vector<256x128xf32>
    %89 = arith.addf %85, %88 : vector<256x128xf32>
    %cst_76 = arith.constant 0.000000e+00 : f32
    %90 = vector.broadcast %cst_76 : f32 to vector<256x128xf32>
    %91 = arith.maximumf %89, %90 : vector<256x128xf32>
    %92 = vector.shape_cast %91 : vector<256x128xf32> to vector<16x16x128xf32>
    %c0_77 = arith.constant 0 : index
    %c0_78 = arith.constant 0 : index
    %c0_79 = arith.constant 0 : index
    %c0_80 = arith.constant 0 : index
    %93 = vector.load %arg6[%c0_77, %c0_78, %c0_79, %c0_80] : memref<1x16x16x128xf32, #tpu.memory_space<vmem>>, vector<1x16x16x128xf32>
    %94 = vector.shape_cast %93 : vector<1x16x16x128xf32> to vector<16x16x128xf32>
    %95 = vector.shape_cast %92 : vector<16x16x128xf32> to vector<1x16x16x128xf32>
    tpu.vector_store %arg6[%c0_77, %c0_78, %c0_79, %c0_80], %95 {strides = array<i32>} : memref<1x16x16x128xf32, #tpu.memory_space<vmem>>, vector<1x16x16x128xf32>,
    return
  }
  func.func @transform_0(%arg0: i32) -> (i32, i32, i32, i32) {
    %c0_i32 = arith.constant 0 : i32
    %c0_i32_0 = arith.constant 0 : i32
    %c0_i32_1 = arith.constant 0 : i32
    %c0_i32_2 = arith.constant 0 : i32
    return %arg0, %c0_i32, %c0_i32_0, %c0_i32_1 : i32, i32, i32, i32
  }
  func.func @transform_1(%arg0: i32) -> (i32, i32, i32) {
    %c0_i32 = arith.constant 0 : i32
    %c0_i32_0 = arith.constant 0 : i32
    %c0_i32_1 = arith.constant 0 : i32
    %c0_i32_2 = arith.constant 0 : i32
    return %c0_i32, %c0_i32_0, %c0_i32_1 : i32, i32, i32
  }
  func.func @transform_2(%arg0: i32) -> (i32, i32) {
    %c0_i32 = arith.constant 0 : i32
    %c0_i32_0 = arith.constant 0 : i32
    %c0_i32_1 = arith.constant 0 : i32
    return %c0_i32, %c0_i32_0 : i32, i32
  }
  func.func @transform_3(%arg0: i32) -> (i32, i32, i32) {
    %c0_i32 = arith.constant 0 : i32
    %c0_i32_0 = arith.constant 0 : i32
    %c0_i32_1 = arith.constant 0 : i32
    return %arg0, %c0_i32, %c0_i32_0 : i32, i32, i32
  }
  func.func @transform_4(%arg0: i32) -> (i32, i32, i32) {
    %c0_i32 = arith.constant 0 : i32
    %c0_i32_0 = arith.constant 0 : i32
    %c0_i32_1 = arith.constant 0 : i32
    return %arg0, %c0_i32, %c0_i32_0 : i32, i32, i32
  }
  func.func @transform_5(%arg0: i32) -> (i32, i32, i32, i32) {
    %c0_i32 = arith.constant 0 : i32
    %c0_i32_0 = arith.constant 0 : i32
    %c0_i32_1 = arith.constant 0 : i32
    %c0_i32_2 = arith.constant 0 : i32
    return %arg0, %c0_i32, %c0_i32_0, %c0_i32_1 : i32, i32, i32, i32
  }
}

</mosaic_0001>

<llo_original>
// kernel: conv2d_block_pallas.1
$region0: #{conv2d_block_pallas.1}
  #allocation0 [shape = 'u32[]', space=smem, size = 0x4, offset = 0x4, fixed_abs, tag = 'smem constant byte address 0x4 - core index']
  #allocation1 [shape = 'u32[72,128]{1,0:T(1,128)}', space=vmem, size = 0x9000, scoped, tag = 'internal scratch']
  %s0 = inlined_call_operand.vmem [shape: bf16[2,18,18,128], index: 0, kind: input, shape index: {}]
  %s1 = inlined_call_operand.vmem [shape: bf16[9,128,128], index: 1, kind: input, shape index: {}]
  %s2 = inlined_call_operand.vmem [shape: f32[1,128], index: 2, kind: input, shape index: {}]
  %s3 = inlined_call_operand.vmem [shape: f32[2,1,128], index: 3, kind: input, shape index: {}]
  %s4 = inlined_call_operand.vmem [shape: f32[2,1,128], index: 4, kind: input, shape index: {}]
  %s5 = inlined_call_operand.hbm [shape: f32[2,16,16,128], index: 5, kind: output, shape index: {}]
  %s6 = sld [smem:[#allocation0]]
  $region53: #{conv2d_block_pallas.1} parent=0
    _
  %s8 = ssub.s32 1, %s6
  %s9 = scalar_select 0, %s8, %s6
  $region1: #{conv2d_block_pallas.1} parent=0
    #allocation2 [shape = 'u8[262144]{0}', space=vmem, size = 0x40000, scoped, tag = 'output window, operand 0']
    #allocation3 [shape = 's32[2]{0}', space=sflag, size = 0x8, scoped, tag = 'scoped memory for conv2d_block_pallas.1']
    %10 = vsyncpa [#allocation3], 0
    %s11 = scalar_lea.sflag [#allocation3], 1
    %12 = vsyncpa %s11, 0
    loop: start=0, step=1, limit=4
    $region2: #{conv2d_block_pallas.1} parent=1 // loop_pre_header
      _
    $region3: #{conv2d_block_pallas.1} parent=1 // loop_header
      %s14 = sphi 0, %s18
      %p15 = scmp.ge.s32.totalorder %s14, 4
      %s24 = sphi 0, %s26
      %s27 = sphi 0, %s24
      %s28 = sphi 0, %s27
      %s44 = sphi 0, %s28
      %s48 = sphi 0, %s48
      %s50 = sphi 0, %s48
      %s51 = sphi 0, %s50
      %s65 = sphi 0, %s51
      %s69 = sphi 0, %s69
      %s71 = sphi 0, %s69
      %s72 = sphi 0, %s71
      %s86 = sphi 0, %s72
      %s92 = sphi 0, %s94
      %s95 = sphi 0, %s92
      %s96 = sphi 0, %s95
      %s112 = sphi 0, %s96
      %s118 = sphi 0, %s120
      %s121 = sphi 0, %s118
      %s122 = sphi 0, %s121
      %s138 = sphi 0, %s122
      %s144 = sphi 0, %s146
      %s147 = sphi 0, %s144
      %s148 = sphi 0, %s147
      %s164 = sphi 0, %s148
    $region4: #{conv2d_block_pallas.1} parent=1 // loop_header_branch
      %17 = sbr.rel (%p15) target = $region8
    $region5: #{conv2d_block_pallas.1} parent=1 // loop_body
      %s19 = ssub.s32 %s14, 1
      %s20 = ssub.s32 %s14, 2
      %s21 = sadd.s32 %s14, 1
      %s22 = ssub.s32 %s14, %s21
      %p23 = scmp.eq.s32.totalorder %s22, 0
      %s25 = sadd.s32 %s24, 1
      %s26 = scalar_select %p23, %s24, %s25
      %p29 = pneg %p23
      %p30 = scmp.eq.s32.totalorder %s14, 1
      %p31 = por %p29, %p30
      %p32 = scmp.ne.s32.totalorder %s24, %s27
      %p33 = scmp.eq.s32.totalorder %s14, 0
      %p34 = por %p32, %p33
      %p35 = scmp.ne.s32.totalorder %s24, %s27
      %p36 = scmp.eq.s32.totalorder %s19, 1
      %p37 = por %p35, %p36
      %p38 = scmp.ne.s32.totalorder %s27, %s28
      %p39 = scmp.eq.s32.totalorder %s19, 0
      %p40 = por %p38, %p39
      %p41 = scmp.ne.s32.totalorder %s27, %s28
      %p42 = scmp.eq.s32.totalorder %s20, 1
      %p43 = por %p41, %p42
      %p45 = scmp.ne.s32.totalorder %s28, %s44
      %p46 = scmp.eq.s32.totalorder %s20, 0
      %p47 = por %p45, %p46
      %s49 = sadd.s32 %s48, 1
      %p52 = scmp.eq.s32.totalorder %s14, 1
      %p53 = scmp.ne.s32.totalorder %s48, %s50
      %p54 = scmp.eq.s32.totalorder %s14, 0
      %p55 = por %p53, %p54
      %p56 = scmp.ne.s32.totalorder %s48, %s50
      %p57 = scmp.eq.s32.totalorder %s19, 1
      %p58 = por %p56, %p57
      %p59 = scmp.ne.s32.totalorder %s50, %s51
      %p60 = scmp.eq.s32.totalorder %s19, 0
      %p61 = por %p59, %p60
      %p62 = scmp.ne.s32.totalorder %s50, %s51
      %p63 = scmp.eq.s32.totalorder %s20, 1
      %p64 = por %p62, %p63
      %p66 = scmp.ne.s32.totalorder %s51, %s65
      %p67 = scmp.eq.s32.totalorder %s20, 0
      %p68 = por %p66, %p67
      %s70 = sadd.s32 %s69, 1
      %p73 = scmp.eq.s32.totalorder %s14, 1
      %p74 = scmp.ne.s32.totalorder %s69, %s71
      %p75 = scmp.eq.s32.totalorder %s14, 0
      %p76 = por %p74, %p75
      %p77 = scmp.ne.s32.totalorder %s69, %s71
      %p78 = scmp.eq.s32.totalorder %s19, 1
      %p79 = por %p77, %p78
      %p80 = scmp.ne.s32.totalorder %s71, %s72
      %p81 = scmp.eq.s32.totalorder %s19, 0
      %p82 = por %p80, %p81
      %p83 = scmp.ne.s32.totalorder %s71, %s72
      %p84 = scmp.eq.s32.totalorder %s20, 1
      %p85 = por %p83, %p84
      %p87 = scmp.ne.s32.totalorder %s72, %s86
      %p88 = scmp.eq.s32.totalorder %s20, 0
      %p89 = por %p87, %p88
      %s90 = ssub.s32 %s14, %s21
      %p91 = scmp.eq.s32.totalorder %s90, 0
      %s93 = sadd.s32 %s92, 1
      %s94 = scalar_select %p91, %s92, %s93
      %p97 = pneg %p91
      %p98 = scmp.eq.s32.totalorder %s14, 1
      %p99 = por %p97, %p98
      %p100 = scmp.ne.s32.totalorder %s92, %s95
      %p101 = scmp.eq.s32.totalorder %s14, 0
      %p102 = por %p100, %p101
      %p103 = scmp.ne.s32.totalorder %s92, %s95
      %p104 = scmp.eq.s32.totalorder %s19, 1
      %p105 = por %p103, %p104
      %p106 = scmp.ne.s32.totalorder %s95, %s96
      %p107 = scmp.eq.s32.totalorder %s19, 0
      %p108 = por %p106, %p107
      %p109 = scmp.ne.s32.totalorder %s95, %s96
      %p110 = scmp.eq.s32.totalorder %s20, 1
      %p111 = por %p109, %p110
      %p113 = scmp.ne.s32.totalorder %s96, %s112
      %p114 = scmp.eq.s32.totalorder %s20, 0
      %p115 = por %p113, %p114
      %s116 = ssub.s32 %s14, %s21
      %p117 = scmp.eq.s32.totalorder %s116, 0
      %s119 = sadd.s32 %s118, 1
      %s120 = scalar_select %p117, %s118, %s119
      %p123 = pneg %p117
      %p124 = scmp.eq.s32.totalorder %s14, 1
      %p125 = por %p123, %p124
      %p126 = scmp.ne.s32.totalorder %s118, %s121
      %p127 = scmp.eq.s32.totalorder %s14, 0
      %p128 = por %p126, %p127
      %p129 = scmp.ne.s32.totalorder %s118, %s121
      %p130 = scmp.eq.s32.totalorder %s19, 1
      %p131 = por %p129, %p130
      %p132 = scmp.ne.s32.totalorder %s121, %s122
      %p133 = scmp.eq.s32.totalorder %s19, 0
      %p134 = por %p132, %p133
      %p135 = scmp.ne.s32.totalorder %s121, %s122
      %p136 = scmp.eq.s32.totalorder %s20, 1
      %p137 = por %p135, %p136
      %p139 = scmp.ne.s32.totalorder %s122, %s138
      %p140 = scmp.eq.s32.totalorder %s20, 0
      %p141 = por %p139, %p140
      %s142 = ssub.s32 %s14, %s21
      %p143 = scmp.eq.s32.totalorder %s142, 0
      %s145 = sadd.s32 %s144, 1
      %s146 = scalar_select %p143, %s144, %s145
      %p149 = pneg %p143
      %p150 = scmp.eq.s32.totalorder %s14, 1
      %p151 = por %p149, %p150
      %p152 = scmp.ne.s32.totalorder %s144, %s147
      %p153 = scmp.eq.s32.totalorder %s14, 0
      %p154 = por %p152, %p153
      %p155 = scmp.ne.s32.totalorder %s144, %s147
      %p156 = scmp.eq.s32.totalorder %s19, 1
      %p157 = por %p155, %p156
      %p158 = scmp.ne.s32.totalorder %s147, %s148
      %p159 = scmp.eq.s32.totalorder %s19, 0
      %p160 = por %p158, %p159
      %p161 = scmp.ne.s32.totalorder %s147, %s148
      %p162 = scmp.eq.s32.totalorder %s20, 1
      %p163 = por %p161, %p162
      %p165 = scmp.ne.s32.totalorder %s148, %s164
      %p166 = scmp.eq.s32.totalorder %s20, 0
      %p167 = por %p165, %p166
      %p168 = scmp.le.s32.totalorder 1, %s14
      %p169 = scmp.lt.s32.totalorder %s14, 3
      %p170 = pnand %p168, %p169
      %p171 = pneg %p170
      // Predicated region
      $region9: #{conv2d_block_pallas.1} parent=5 // pred_check
        _
      $region10: #{conv2d_block_pallas.1} parent=5 // pred_check_branch
        %173 = sbr.rel (%p170) target = $region12
      $region11: #{conv2d_block_pallas.1} parent=5 // pred_region
        %s174 = ssub.s32 %s14, 1
        // Predicated region
        $region13: #{conv2d_block_pallas.1} parent=11 // pred_check
          %p175 = pneg %p61
        $region14: #{conv2d_block_pallas.1} parent=11 // pred_check_branch
          %177 = sbr.rel (%p175) target = $region16
        $region15: #{conv2d_block_pallas.1} parent=11 // pred_region
          _
        $region16: #{conv2d_block_pallas.1} parent=11 // pred_fallthru
          _
        // Predicated region
        $region17: #{conv2d_block_pallas.1} parent=11 // pred_check
          %p178 = pneg %p82
        $region18: #{conv2d_block_pallas.1} parent=11 // pred_check_branch
          %180 = sbr.rel (%p178) target = $region20
        $region19: #{conv2d_block_pallas.1} parent=11 // pred_region
          _
        $region20: #{conv2d_block_pallas.1} parent=11 // pred_fallthru
          _
      $region12: #{conv2d_block_pallas.1} parent=5 // pred_fallthru
        _
      %p181 = scmp.lt.s32.totalorder %s14, 2
      // Predicated region
      $region21: #{conv2d_block_pallas.1} parent=5 // pred_check
        %p182 = pneg %p181
      $region22: #{conv2d_block_pallas.1} parent=5 // pred_check_branch
        %184 = sbr.rel (%p182) target = $region24
      $region23: #{conv2d_block_pallas.1} parent=5 // pred_region
        // Predicated region
        $region25: #{conv2d_block_pallas.1} parent=23 // pred_check
          %p185 = pneg %p34
        $region26: #{conv2d_block_pallas.1} parent=23 // pred_check_branch
          %187 = sbr.rel (%p185) target = $region28
        $region27: #{conv2d_block_pallas.1} parent=23 // pred_region
          %p188 = scmp.lt.s32.totalorder %s14, 1
          %s189 = scalar_select %p188, %s14, 1
          %s190 = smul.addr %s189, 54
          %s191 = smul.addr %s190, 4
          %s192 = scalar_lea.vmem %s0, %s191
        $region28: #{conv2d_block_pallas.1} parent=23 // pred_fallthru
          _
        // Predicated region
        $region29: #{conv2d_block_pallas.1} parent=23 // pred_check
          %p193 = pneg %p102
        $region30: #{conv2d_block_pallas.1} parent=23 // pred_check_branch
          %195 = sbr.rel (%p193) target = $region32
        $region31: #{conv2d_block_pallas.1} parent=23 // pred_region
          %p196 = scmp.lt.s32.totalorder %s14, 1
          %s197 = scalar_select %p196, %s14, 1
          %s198 = scalar_lea.vmem %s3, %s197
        $region32: #{conv2d_block_pallas.1} parent=23 // pred_fallthru
          _
        // Predicated region
        $region33: #{conv2d_block_pallas.1} parent=23 // pred_check
          %p199 = pneg %p128
        $region34: #{conv2d_block_pallas.1} parent=23 // pred_check_branch
          %201 = sbr.rel (%p199) target = $region36
        $region35: #{conv2d_block_pallas.1} parent=23 // pred_region
          %p202 = scmp.lt.s32.totalorder %s14, 1
          %s203 = scalar_select %p202, %s14, 1
          %s204 = scalar_lea.vmem %s4, %s203
        $region36: #{conv2d_block_pallas.1} parent=23 // pred_fallthru
          _
      $region24: #{conv2d_block_pallas.1} parent=5 // pred_fallthru
        _
      %p205 = scmp.le.s32.totalorder 1, %s14
      %p206 = scmp.lt.s32.totalorder %s14, 3
      %p207 = pnand %p205, %p206
      %p208 = pneg %p207
      // Predicated region
      $region37: #{conv2d_block_pallas.1} parent=5 // pred_check
        _
      $region38: #{conv2d_block_pallas.1} parent=5 // pred_check_branch
        %210 = sbr.rel (%p207) target = $region40
      $region39: #{conv2d_block_pallas.1} parent=5 // pred_region
        %s211 = ssub.s32 %s14, 1
        %p212 = scmp.lt.s32.totalorder %s19, 1
        %s213 = scalar_select %p212, %s19, 1
        %s214 = smul.addr %s213, 54
        %s215 = smul.addr %s214, 4
        %s216 = scalar_lea.vmem %s0, %s215
        %p217 = pneg %p40
        %p218 = pneg %p37
        %p219 = pneg %p61
        %p220 = pneg %p58
        %p221 = pneg %p82
        %p222 = pneg %p79
        %p223 = scmp.lt.s32.totalorder %s19, 1
        %s224 = scalar_select %p223, %s19, 1
        %s225 = scalar_lea.vmem %s3, %s224
        %p226 = pneg %p108
        %p227 = pneg %p105
        %p228 = scmp.lt.s32.totalorder %s19, 1
        %s229 = scalar_select %p228, %s19, 1
        %s230 = scalar_lea.vmem %s4, %s229
        %p231 = pneg %p134
        %p232 = pneg %p131
        %p233 = pneg %p160
        %p234 = pneg %p157
        %s235 = sand.u32 %s147, 1
        %s236 = scalar_lea.sflag [#allocation3], %s235
        %s237 = sand.u32 %s147, 1
        %s238 = smul.addr %s237, 256
        %s239 = scalar_lea.vmem [#allocation2], %s238
        %p240 = scmp.lt.s32.totalorder %s19, 1
        %s241 = scalar_select %p240, %s19, 1
        %s242 = smul.addr %s241, 54
        %s243 = smul.addr %s242, 4
        %s244 = scalar_lea.vmem %s0, %s243
        %p245 = scmp.lt.s32.totalorder %s19, 1
        %s246 = scalar_select %p245, %s19, 1
        %s247 = scalar_lea.vmem %s3, %s246
        %p248 = scmp.lt.s32.totalorder %s19, 1
        %s249 = scalar_select %p248, %s19, 1
        %s250 = scalar_lea.vmem %s4, %s249
        %v251 = vld [vmem:[%s244] sm:$0xf]
        %v252 = vld [vmem:[%s244 + $0x4] sm:$0xf]
        %v253 = vld [vmem:[%s244 + $0xc] sm:$0xf]
        %v254 = vld [vmem:[%s244 + $0x10] sm:$0xf]
        %v255 = vld [vmem:[%s244 + $0x18] sm:$0xf]
        %v256 = vld [vmem:[%s244 + $0x1c] sm:$0xf]
        %v257 = vld [vmem:[%s244 + $0x24] sm:$0xf]
        %v258 = vld [vmem:[%s244 + $0x28] sm:$0xf]
        %v259 = vld [vmem:[%s244 + $0x30] sm:$0xf]
        %v260 = vld [vmem:[%s244 + $0x34] sm:$0xf]
        %v261 = vld [vmem:[%s244 + $0x3c] sm:$0xf]
        %v262 = vld [vmem:[%s244 + $0x40] sm:$0xf]
        %v263 = vld [vmem:[%s244 + $0x48] sm:$0xf]
        %v264 = vld [vmem:[%s244 + $0x4c] sm:$0xf]
        %v265 = vld [vmem:[%s244 + $0x54] sm:$0xf]
        %v266 = vld [vmem:[%s244 + $0x58] sm:$0xf]
        %v267 = vld [vmem:[%s244 + $0x60] sm:$0xf]
        %v268 = vld [vmem:[%s244 + $0x64] sm:$0xf]
        %v269 = vld [vmem:[%s244 + $0x6c] sm:$0xf]
        %v270 = vld [vmem:[%s244 + $0x70] sm:$0xf]
        %v271 = vld [vmem:[%s244 + $0x78] sm:$0xf]
        %v272 = vld [vmem:[%s244 + $0x7c] sm:$0xf]
        %v273 = vld [vmem:[%s244 + $0x84] sm:$0xf]
        %v274 = vld [vmem:[%s244 + $0x88] sm:$0xf]
        %v275 = vld [vmem:[%s244 + $0x90] sm:$0xf]
        %v276 = vld [vmem:[%s244 + $0x94] sm:$0xf]
        %v277 = vld [vmem:[%s244 + $0x9c] sm:$0xf]
        %v278 = vld [vmem:[%s244 + $0xa0] sm:$0xf]
        %v279 = vld [vmem:[%s244 + $0xa8] sm:$0xf]
        %v280 = vld [vmem:[%s244 + $0xac] sm:$0xf]
        %v281 = vld [vmem:[%s244 + $0xb4] sm:$0xf]
        %v282 = vld [vmem:[%s244 + $0xb8] sm:$0xf]
        %v283 = vld [vmem:[%s1] sm:$0xf]
        %v284 = vld [vmem:[%s1 + $0x4] sm:$0xf]
        %v285 = vld [vmem:[%s1 + $0x8] sm:$0xf]
        %v286 = vld [vmem:[%s1 + $0xc] sm:$0xf]
        %v287 = vld [vmem:[%s1 + $0x10] sm:$0xf]
        %v288 = vld [vmem:[%s1 + $0x14] sm:$0xf]
        %v289 = vld [vmem:[%s1 + $0x18] sm:$0xf]
        %v290 = vld [vmem:[%s1 + $0x1c] sm:$0xf]
        %v291 = vld [vmem:[%s1 + $0x20] sm:$0xf]
        %v292 = vld [vmem:[%s1 + $0x24] sm:$0xf]
        %v293 = vld [vmem:[%s1 + $0x28] sm:$0xf]
        %v294 = vld [vmem:[%s1 + $0x2c] sm:$0xf]
        %v295 = vld [vmem:[%s1 + $0x30] sm:$0xf]
        %v296 = vld [vmem:[%s1 + $0x34] sm:$0xf]
        %v297 = vld [vmem:[%s1 + $0x38] sm:$0xf]
        %v298 = vld [vmem:[%s1 + $0x3c] sm:$0xf]
        %v299 = vld [vmem:[%s244 + $0x8] sm:$0x1]
        %v300 = vld [vmem:[%s244 + $0x14] sm:$0x1]
        %v301 = vld [vmem:[%s244 + $0x20] sm:$0x1]
        %v302 = vld [vmem:[%s244 + $0x2c] sm:$0x1]
        %v303 = vld [vmem:[%s244 + $0x38] sm:$0x1]
        %v304 = vld [vmem:[%s244 + $0x44] sm:$0x1]
        %v305 = vld [vmem:[%s244 + $0x50] sm:$0x1]
        %v306 = vld [vmem:[%s244 + $0x5c] sm:$0x1]
        %v307 = vld [vmem:[%s244 + $0x68] sm:$0x1]
        %v308 = vld [vmem:[%s244 + $0x74] sm:$0x1]
        %v309 = vld [vmem:[%s244 + $0x80] sm:$0x1]
        %v310 = vld [vmem:[%s244 + $0x8c] sm:$0x1]
        %v311 = vld [vmem:[%s244 + $0x98] sm:$0x1]
        %v312 = vld [vmem:[%s244 + $0xa4] sm:$0x1]
        %v313 = vld [vmem:[%s244 + $0xb0] sm:$0x1]
        %v314 = vld [vmem:[%s244 + $0xbc] sm:$0x1]
        %vm315 = vsmask.f32 3328
        %vm316 = vsmask.f32 7440
        %vm317 = vmor %vm315, %vm316
        %v319 = vshrl.u32 %v251, 16
        %v321 = vrot.slane %v319, 4
        %v322 = vshll.u32 %v251, 16
        %v324 = vrot.slane %v322, 5
        %v325 = vor.u32 %v321, %v324
        %v326 = vrot.slane %v325, 4
        %v328 = vshll.u32 %v252, 16
        %v330 = vrot.slane %v328, 5
        %v331 = vsel %vm317, %v326, %v330
        %v332 = vshrl.u32 %v252, 16
        %v334 = vrot.slane %v332, 4
        %v335 = vor.u32 %v334, %v330
        %v336 = vrot.slane %v335, 4
        %v338 = vshll.u32 %v299, 16
        %v340 = vrot.slane %v338, 5
        %v341 = vsel %vm317, %v336, %v340
        %v343 = vshrl.u32 %v253, 16
        %v345 = vrot.slane %v343, 4
        %v346 = vshll.u32 %v253, 16
        %v348 = vrot.slane %v346, 5
        %v349 = vor.u32 %v345, %v348
        %v350 = vrot.slane %v349, 4
        %v352 = vshll.u32 %v254, 16
        %v354 = vrot.slane %v352, 5
        %v355 = vsel %vm317, %v350, %v354
        %v356 = vshrl.u32 %v254, 16
        %v358 = vrot.slane %v356, 4
        %v359 = vor.u32 %v358, %v354
        %v360 = vrot.slane %v359, 4
        %v362 = vshll.u32 %v300, 16
        %v364 = vrot.slane %v362, 5
        %v365 = vsel %vm317, %v360, %v364
        %v367 = vshrl.u32 %v255, 16
        %v369 = vrot.slane %v367, 4
        %v370 = vshll.u32 %v255, 16
        %v372 = vrot.slane %v370, 5
        %v373 = vor.u32 %v369, %v372
        %v374 = vrot.slane %v373, 4
        %v376 = vshll.u32 %v256, 16
        %v378 = vrot.slane %v376, 5
        %v379 = vsel %vm317, %v374, %v378
        %v380 = vshrl.u32 %v256, 16
        %v382 = vrot.slane %v380, 4
        %v383 = vor.u32 %v382, %v378
        %v384 = vrot.slane %v383, 4
        %v386 = vshll.u32 %v301, 16
        %v388 = vrot.slane %v386, 5
        %v389 = vsel %vm317, %v384, %v388
        %v391 = vshrl.u32 %v257, 16
        %v393 = vrot.slane %v391, 4
        %v394 = vshll.u32 %v257, 16
        %v396 = vrot.slane %v394, 5
        %v397 = vor.u32 %v393, %v396
        %v398 = vrot.slane %v397, 4
        %v400 = vshll.u32 %v258, 16
        %v402 = vrot.slane %v400, 5
        %v403 = vsel %vm317, %v398, %v402
        %v404 = vshrl.u32 %v258, 16
        %v406 = vrot.slane %v404, 4
        %v407 = vor.u32 %v406, %v402
        %v408 = vrot.slane %v407, 4
        %v410 = vshll.u32 %v302, 16
        %v412 = vrot.slane %v410, 5
        %v413 = vsel %vm317, %v408, %v412
        %v415 = vshrl.u32 %v259, 16
        %v417 = vrot.slane %v415, 4
        %v418 = vshll.u32 %v259, 16
        %v420 = vrot.slane %v418, 5
        %v421 = vor.u32 %v417, %v420
        %v422 = vrot.slane %v421, 4
        %v424 = vshll.u32 %v260, 16
        %v426 = vrot.slane %v424, 5
        %v427 = vsel %vm317, %v422, %v426
        %v428 = vshrl.u32 %v260, 16
        %v430 = vrot.slane %v428, 4
        %v431 = vor.u32 %v430, %v426
        %v432 = vrot.slane %v431, 4
        %v434 = vshll.u32 %v303, 16
        %v436 = vrot.slane %v434, 5
        %v437 = vsel %vm317, %v432, %v436
        %v439 = vshrl.u32 %v261, 16
        %v441 = vrot.slane %v439, 4
        %v442 = vshll.u32 %v261, 16
        %v444 = vrot.slane %v442, 5
        %v445 = vor.u32 %v441, %v444
        %v446 = vrot.slane %v445, 4
        %v448 = vshll.u32 %v262, 16
        %v450 = vrot.slane %v448, 5
        %v451 = vsel %vm317, %v446, %v450
        %v452 = vshrl.u32 %v262, 16
        %v454 = vrot.slane %v452, 4
        %v455 = vor.u32 %v454, %v450
        %v456 = vrot.slane %v455, 4
        %v458 = vshll.u32 %v304, 16
        %v460 = vrot.slane %v458, 5
        %v461 = vsel %vm317, %v456, %v460
        %v463 = vshrl.u32 %v263, 16
        %v465 = vrot.slane %v463, 4
        %v466 = vshll.u32 %v263, 16
        %v468 = vrot.slane %v466, 5
        %v469 = vor.u32 %v465, %v468
        %v470 = vrot.slane %v469, 4
        %v472 = vshll.u32 %v264, 16
        %v474 = vrot.slane %v472, 5
        %v475 = vsel %vm317, %v470, %v474
        %v476 = vshrl.u32 %v264, 16
        %v478 = vrot.slane %v476, 4
        %v479 = vor.u32 %v478, %v474
        %v480 = vrot.slane %v479, 4
        %v482 = vshll.u32 %v305, 16
        %v484 = vrot.slane %v482, 5
        %v485 = vsel %vm317, %v480, %v484
        %v487 = vshrl.u32 %v265, 16
        %v489 = vrot.slane %v487, 4
        %v490 = vshll.u32 %v265, 16
        %v492 = vrot.slane %v490, 5
        %v493 = vor.u32 %v489, %v492
        %v494 = vrot.slane %v493, 4
        %v496 = vshll.u32 %v266, 16
        %v498 = vrot.slane %v496, 5
        %v499 = vsel %vm317, %v494, %v498
        %v500 = vshrl.u32 %v266, 16
        %v502 = vrot.slane %v500, 4
        %v503 = vor.u32 %v502, %v498
        %v504 = vrot.slane %v503, 4
        %v506 = vshll.u32 %v306, 16
        %v508 = vrot.slane %v506, 5
        %v509 = vsel %vm317, %v504, %v508
        %v511 = vshrl.u32 %v267, 16
        %v513 = vrot.slane %v511, 4
        %v514 = vshll.u32 %v267, 16
        %v516 = vrot.slane %v514, 5
        %v517 = vor.u32 %v513, %v516
        %v518 = vrot.slane %v517, 4
        %v520 = vshll.u32 %v268, 16
        %v522 = vrot.slane %v520, 5
        %v523 = vsel %vm317, %v518, %v522
        %v524 = vshrl.u32 %v268, 16
        %v526 = vrot.slane %v524, 4
        %v527 = vor.u32 %v526, %v522
        %v528 = vrot.slane %v527, 4
        %v530 = vshll.u32 %v307, 16
        %v532 = vrot.slane %v530, 5
        %v533 = vsel %vm317, %v528, %v532
        %v535 = vshrl.u32 %v269, 16
        %v537 = vrot.slane %v535, 4
        %v538 = vshll.u32 %v269, 16
        %v540 = vrot.slane %v538, 5
        %v541 = vor.u32 %v537, %v540
        %v542 = vrot.slane %v541, 4
        %v544 = vshll.u32 %v270, 16
        %v546 = vrot.slane %v544, 5
        %v547 = vsel %vm317, %v542, %v546
        %v548 = vshrl.u32 %v270, 16
        %v550 = vrot.slane %v548, 4
        %v551 = vor.u32 %v550, %v546
        %v552 = vrot.slane %v551, 4
        %v554 = vshll.u32 %v308, 16
        %v556 = vrot.slane %v554, 5
        %v557 = vsel %vm317, %v552, %v556
        %v559 = vshrl.u32 %v271, 16
        %v561 = vrot.slane %v559, 4
        %v562 = vshll.u32 %v271, 16
        %v564 = vrot.slane %v562, 5
        %v565 = vor.u32 %v561, %v564
        %v566 = vrot.slane %v565, 4
        %v568 = vshll.u32 %v272, 16
        %v570 = vrot.slane %v568, 5
        %v571 = vsel %vm317, %v566, %v570
        %v572 = vshrl.u32 %v272, 16
        %v574 = vrot.slane %v572, 4
        %v575 = vor.u32 %v574, %v570
        %v576 = vrot.slane %v575, 4
        %v578 = vshll.u32 %v309, 16
        %v580 = vrot.slane %v578, 5
        %v581 = vsel %vm317, %v576, %v580
        %v583 = vshrl.u32 %v273, 16
        %v585 = vrot.slane %v583, 4
        %v586 = vshll.u32 %v273, 16
        %v588 = vrot.slane %v586, 5
        %v589 = vor.u32 %v585, %v588
        %v590 = vrot.slane %v589, 4
        %v592 = vshll.u32 %v274, 16
        %v594 = vrot.slane %v592, 5
        %v595 = vsel %vm317, %v590, %v594
        %v596 = vshrl.u32 %v274, 16
        %v598 = vrot.slane %v596, 4
        %v599 = vor.u32 %v598, %v594
        %v600 = vrot.slane %v599, 4
        %v602 = vshll.u32 %v310, 16
        %v604 = vrot.slane %v602, 5
        %v605 = vsel %vm317, %v600, %v604
        %v607 = vshrl.u32 %v275, 16
        %v609 = vrot.slane %v607, 4
        %v610 = vshll.u32 %v275, 16
        %v612 = vrot.slane %v610, 5
        %v613 = vor.u32 %v609, %v612
        %v614 = vrot.slane %v613, 4
        %v616 = vshll.u32 %v276, 16
        %v618 = vrot.slane %v616, 5
        %v619 = vsel %vm317, %v614, %v618
        %v620 = vshrl.u32 %v276, 16
        %v622 = vrot.slane %v620, 4
        %v623 = vor.u32 %v622, %v618
        %v624 = vrot.slane %v623, 4
        %v626 = vshll.u32 %v311, 16
        %v628 = vrot.slane %v626, 5
        %v629 = vsel %vm317, %v624, %v628
        %v631 = vshrl.u32 %v277, 16
        %v633 = vrot.slane %v631, 4
        %v634 = vshll.u32 %v277, 16
        %v636 = vrot.slane %v634, 5
        %v637 = vor.u32 %v633, %v636
        %v638 = vrot.slane %v637, 4
        %v640 = vshll.u32 %v278, 16
        %v642 = vrot.slane %v640, 5
        %v643 = vsel %vm317, %v638, %v642
        %v644 = vshrl.u32 %v278, 16
        %v646 = vrot.slane %v644, 4
        %v647 = vor.u32 %v646, %v642
        %v648 = vrot.slane %v647, 4
        %v650 = vshll.u32 %v312, 16
        %v652 = vrot.slane %v650, 5
        %v653 = vsel %vm317, %v648, %v652
        %v655 = vshrl.u32 %v279, 16
        %v657 = vrot.slane %v655, 4
        %v658 = vshll.u32 %v279, 16
        %v660 = vrot.slane %v658, 5
        %v661 = vor.u32 %v657, %v660
        %v662 = vrot.slane %v661, 4
        %v664 = vshll.u32 %v280, 16
        %v666 = vrot.slane %v664, 5
        %v667 = vsel %vm317, %v662, %v666
        %v668 = vshrl.u32 %v280, 16
        %v670 = vrot.slane %v668, 4
        %v671 = vor.u32 %v670, %v666
        %v672 = vrot.slane %v671, 4
        %v674 = vshll.u32 %v313, 16
        %v676 = vrot.slane %v674, 5
        %v677 = vsel %vm317, %v672, %v676
        %v679 = vshrl.u32 %v281, 16
        %v681 = vrot.slane %v679, 4
        %v682 = vshll.u32 %v281, 16
        %v684 = vrot.slane %v682, 5
        %v685 = vor.u32 %v681, %v684
        %v686 = vrot.slane %v685, 4
        %v688 = vshll.u32 %v282, 16
        %v690 = vrot.slane %v688, 5
        %v691 = vsel %vm317, %v686, %v690
        %v692 = vshrl.u32 %v282, 16
        %v694 = vrot.slane %v692, 4
        %v695 = vor.u32 %v694, %v690
        %v696 = vrot.slane %v695, 4
        %v698 = vshll.u32 %v314, 16
        %v700 = vrot.slane %v698, 5
        %v701 = vsel %vm317, %v696, %v700
        %s702 = scalar_lea.vmem %s1, 64
        %v703 = vld [vmem:[%s702] sm:$0xf]
        %v704 = vld [vmem:[%s702 + $0x4] sm:$0xf]
        %v705 = vld [vmem:[%s702 + $0x8] sm:$0xf]
        %v706 = vld [vmem:[%s702 + $0xc] sm:$0xf]
        %v707 = vld [vmem:[%s702 + $0x10] sm:$0xf]
        %v708 = vld [vmem:[%s702 + $0x14] sm:$0xf]
        %v709 = vld [vmem:[%s702 + $0x18] sm:$0xf]
        %v710 = vld [vmem:[%s702 + $0x1c] sm:$0xf]
        %v711 = vld [vmem:[%s702 + $0x20] sm:$0xf]
        %v712 = vld [vmem:[%s702 + $0x24] sm:$0xf]
        %v713 = vld [vmem:[%s702 + $0x28] sm:$0xf]
        %v714 = vld [vmem:[%s702 + $0x2c] sm:$0xf]
        %v715 = vld [vmem:[%s702 + $0x30] sm:$0xf]
        %v716 = vld [vmem:[%s702 + $0x34] sm:$0xf]
        %v717 = vld [vmem:[%s702 + $0x38] sm:$0xf]
        %v718 = vld [vmem:[%s702 + $0x3c] sm:$0xf]
        %v719 = vunpack.c.l.b16 %v331
        %v720 = vunpack.c.l.b16 %v341
        %v721 = vunpack.c.l.b16 %v355
        %v722 = vunpack.c.l.b16 %v365
        %v723 = vunpack.c.l.b16 %v379
        %v724 = vunpack.c.l.b16 %v389
        %v725 = vunpack.c.l.b16 %v403
        %v726 = vunpack.c.l.b16 %v413
        %v727 = vunpack.c.l.b16 %v427
        %v728 = vunpack.c.l.b16 %v437
        %v729 = vunpack.c.l.b16 %v451
        %v730 = vunpack.c.l.b16 %v461
        %v731 = vunpack.c.l.b16 %v475
        %v732 = vunpack.c.l.b16 %v485
        %v733 = vunpack.c.l.b16 %v499
        %v734 = vunpack.c.l.b16 %v509
        %v735 = vunpack.c.l.b16 %v523
        %v736 = vunpack.c.l.b16 %v533
        %v737 = vunpack.c.l.b16 %v547
        %v738 = vunpack.c.l.b16 %v557
        %v739 = vunpack.c.l.b16 %v571
        %v740 = vunpack.c.l.b16 %v581
        %v741 = vunpack.c.l.b16 %v595
        %v742 = vunpack.c.l.b16 %v605
        %v743 = vunpack.c.l.b16 %v619
        %v744 = vunpack.c.l.b16 %v629
        %v745 = vunpack.c.l.b16 %v643
        %v746 = vunpack.c.l.b16 %v653
        %v747 = vunpack.c.l.b16 %v667
        %v748 = vunpack.c.l.b16 %v677
        %v749 = vunpack.c.l.b16 %v691
        %v750 = vunpack.c.l.b16 %v701
        %v751 = vpack.c.b16 %v720, %v719
        %v752 = vpack.c.b16 %v722, %v721
        %v753 = vpack.c.b16 %v724, %v723
        %v754 = vpack.c.b16 %v726, %v725
        %v755 = vpack.c.b16 %v728, %v727
        %v756 = vpack.c.b16 %v730, %v729
        %v757 = vpack.c.b16 %v732, %v731
        %v758 = vpack.c.b16 %v734, %v733
        %v759 = vpack.c.b16 %v736, %v735
        %v760 = vpack.c.b16 %v738, %v737
        %v761 = vpack.c.b16 %v740, %v739
        %v762 = vpack.c.b16 %v742, %v741
        %v763 = vpack.c.b16 %v744, %v743
        %v764 = vpack.c.b16 %v746, %v745
        %v765 = vpack.c.b16 %v748, %v747
        %v766 = vpack.c.b16 %v750, %v749
        %v799 = vunpack.c.l.b16 %v703
        %v800 = vunpack.c.l.b16 %v704
        %v801 = vunpack.c.l.b16 %v705
        %v802 = vunpack.c.l.b16 %v706
        %v803 = vunpack.c.l.b16 %v707
        %v804 = vunpack.c.l.b16 %v708
        %v805 = vunpack.c.l.b16 %v709
        %v806 = vunpack.c.l.b16 %v710
        %v807 = vunpack.c.l.b16 %v711
        %v808 = vunpack.c.l.b16 %v712
        %v809 = vunpack.c.l.b16 %v713
        %v810 = vunpack.c.l.b16 %v714
        %v811 = vunpack.c.l.b16 %v715
        %v812 = vunpack.c.l.b16 %v716
        %v813 = vunpack.c.l.b16 %v717
        %v814 = vunpack.c.l.b16 %v718
        %v815 = vpack.c.b16 %v800, %v799
        %v816 = vpack.c.b16 %v802, %v801
        %v817 = vpack.c.b16 %v804, %v803
        %v818 = vpack.c.b16 %v806, %v805
        %v819 = vpack.c.b16 %v808, %v807
        %v820 = vpack.c.b16 %v810, %v809
        %v821 = vpack.c.b16 %v812, %v811
        %v822 = vpack.c.b16 %v814, %v813
        %831 = vmatpush.bf16.msra.mxu0 %v822
        %832 = vmatpush.bf16.msra.mxu0 %v821
        %833 = vmatpush.bf16.msra.mxu0 %v820
        %834 = vmatpush.bf16.msra.mxu0 %v819
        %835 = vmatpush.bf16.msra.mxu0 %v818
        %836 = vmatpush.bf16.msra.mxu0 %v817
        %837 = vmatpush.bf16.msra.mxu0 %v816
        %838 = vmatpush.bf16.msra.mxu0 %v815
        %839 = vmatmul.bf16.gmra.mxu0 %v751
        %v840 = vpop.f32.mrf.mxu0
        %v841 = vadd.f32 0.0, %v840
        %v842 = vpop.f32.mrf.mxu0
        %v843 = vadd.f32 0.0, %v842
        %844 = vmatmul.bf16.gmra.mxu0 %v752
        %v845 = vpop.f32.mrf.mxu0
        %v846 = vadd.f32 0.0, %v845
        %v847 = vpop.f32.mrf.mxu0
        %v848 = vadd.f32 0.0, %v847
        %849 = vmatmul.bf16.gmra.mxu0 %v753
        %v850 = vpop.f32.mrf.mxu0
        %v851 = vadd.f32 0.0, %v850
        %v852 = vpop.f32.mrf.mxu0
        %v853 = vadd.f32 0.0, %v852
        %854 = vmatmul.bf16.gmra.mxu0 %v754
        %v855 = vpop.f32.mrf.mxu0
        %v856 = vadd.f32 0.0, %v855
        %v857 = vpop.f32.mrf.mxu0
        %v858 = vadd.f32 0.0, %v857
        %859 = vmatmul.bf16.gmra.mxu0 %v755
        %v860 = vpop.f32.mrf.mxu0
        %v861 = vadd.f32 0.0, %v860
        %v862 = vpop.f32.mrf.mxu0
        %v863 = vadd.f32 0.0, %v862
        %864 = vmatmul.bf16.gmra.mxu0 %v756
        %v865 = vpop.f32.mrf.mxu0
        %v866 = vadd.f32 0.0, %v865
        %v867 = vpop.f32.mrf.mxu0
        %v868 = vadd.f32 0.0, %v867
        %869 = vmatmul.bf16.gmra.mxu0 %v757
        %v870 = vpop.f32.mrf.mxu0
        %v871 = vadd.f32 0.0, %v870
        %v872 = vpop.f32.mrf.mxu0
        %v873 = vadd.f32 0.0, %v872
        %874 = vmatmul.bf16.gmra.mxu0 %v758
        %v875 = vpop.f32.mrf.mxu0
        %v876 = vadd.f32 0.0, %v875
        %v877 = vpop.f32.mrf.mxu0
        %v878 = vadd.f32 0.0, %v877
        %879 = vmatmul.bf16.gmra.mxu0 %v759
        %v880 = vpop.f32.mrf.mxu0
        %v881 = vadd.f32 0.0, %v880
        %v882 = vpop.f32.mrf.mxu0
        %v883 = vadd.f32 0.0, %v882
        %884 = vmatmul.bf16.gmra.mxu0 %v760
        %v885 = vpop.f32.mrf.mxu0
        %v886 = vadd.f32 0.0, %v885
        %v887 = vpop.f32.mrf.mxu0
        %v888 = vadd.f32 0.0, %v887
        %889 = vmatmul.bf16.gmra.mxu0 %v761
        %v890 = vpop.f32.mrf.mxu0
        %v891 = vadd.f32 0.0, %v890
        %v892 = vpop.f32.mrf.mxu0
        %v893 = vadd.f32 0.0, %v892
        %894 = vmatmul.bf16.gmra.mxu0 %v762
        %v895 = vpop.f32.mrf.mxu0
        %v896 = vadd.f32 0.0, %v895
        %v897 = vpop.f32.mrf.mxu0
        %v898 = vadd.f32 0.0, %v897
        %899 = vmatmul.bf16.gmra.mxu0 %v763
        %v900 = vpop.f32.mrf.mxu0
        %v901 = vadd.f32 0.0, %v900
        %v902 = vpop.f32.mrf.mxu0
        %v903 = vadd.f32 0.0, %v902
        %904 = vmatmul.bf16.gmra.mxu0 %v764
        %v905 = vpop.f32.mrf.mxu0
        %v906 = vadd.f32 0.0, %v905
        %v907 = vpop.f32.mrf.mxu0
        %v908 = vadd.f32 0.0, %v907
        %909 = vmatmul.bf16.gmra.mxu0 %v765
        %v910 = vpop.f32.mrf.mxu0
        %v911 = vadd.f32 0.0, %v910
        %v912 = vpop.f32.mrf.mxu0
        %v913 = vadd.f32 0.0, %v912
        %914 = vmatmul.bf16.gmra.mxu0 %v766
        %v915 = vpop.f32.mrf.mxu0
        %v916 = vadd.f32 0.0, %v915
        %v917 = vpop.f32.mrf.mxu0
        %v918 = vadd.f32 0.0, %v917
        %919 = vdwg.mxu0
        %v952 = vunpack.c.l.b16 %v251
        %v953 = vunpack.c.l.b16 %v252
        %v954 = vunpack.c.l.b16 %v253
        %v955 = vunpack.c.l.b16 %v254
        %v956 = vunpack.c.l.b16 %v255
        %v957 = vunpack.c.l.b16 %v256
        %v958 = vunpack.c.l.b16 %v257
        %v959 = vunpack.c.l.b16 %v258
        %v960 = vunpack.c.l.b16 %v259
        %v961 = vunpack.c.l.b16 %v260
        %v962 = vunpack.c.l.b16 %v261
        %v963 = vunpack.c.l.b16 %v262
        %v964 = vunpack.c.l.b16 %v263
        %v965 = vunpack.c.l.b16 %v264
        %v966 = vunpack.c.l.b16 %v265
        %v967 = vunpack.c.l.b16 %v266
        %v968 = vunpack.c.l.b16 %v267
        %v969 = vunpack.c.l.b16 %v268
        %v970 = vunpack.c.l.b16 %v269
        %v971 = vunpack.c.l.b16 %v270
        %v972 = vunpack.c.l.b16 %v271
        %v973 = vunpack.c.l.b16 %v272
        %v974 = vunpack.c.l.b16 %v273
        %v975 = vunpack.c.l.b16 %v274
        %v976 = vunpack.c.l.b16 %v275
        %v977 = vunpack.c.l.b16 %v276
        %v978 = vunpack.c.l.b16 %v277
        %v979 = vunpack.c.l.b16 %v278
        %v980 = vunpack.c.l.b16 %v279
        %v981 = vunpack.c.l.b16 %v280
        %v982 = vunpack.c.l.b16 %v281
        %v983 = vunpack.c.l.b16 %v282
        %v984 = vpack.c.b16 %v953, %v952
        %v985 = vpack.c.b16 %v955, %v954
        %v986 = vpack.c.b16 %v957, %v956
        %v987 = vpack.c.b16 %v959, %v958
        %v988 = vpack.c.b16 %v961, %v960
        %v989 = vpack.c.b16 %v963, %v962
        %v990 = vpack.c.b16 %v965, %v964
        %v991 = vpack.c.b16 %v967, %v966
        %v992 = vpack.c.b16 %v969, %v968
        %v993 = vpack.c.b16 %v971, %v970
        %v994 = vpack.c.b16 %v973, %v972
        %v995 = vpack.c.b16 %v975, %v974
        %v996 = vpack.c.b16 %v977, %v976
        %v997 = vpack.c.b16 %v979, %v978
        %v998 = vpack.c.b16 %v981, %v980
        %v999 = vpack.c.b16 %v983, %v982
        %v1032 = vunpack.c.l.b16 %v283
        %v1033 = vunpack.c.l.b16 %v284
        %v1034 = vunpack.c.l.b16 %v285
        %v1035 = vunpack.c.l.b16 %v286
        %v1036 = vunpack.c.l.b16 %v287
        %v1037 = vunpack.c.l.b16 %v288
        %v1038 = vunpack.c.l.b16 %v289
        %v1039 = vunpack.c.l.b16 %v290
        %v1040 = vunpack.c.l.b16 %v291
        %v1041 = vunpack.c.l.b16 %v292
        %v1042 = vunpack.c.l.b16 %v293
        %v1043 = vunpack.c.l.b16 %v294
        %v1044 = vunpack.c.l.b16 %v295
        %v1045 = vunpack.c.l.b16 %v296
        %v1046 = vunpack.c.l.b16 %v297
        %v1047 = vunpack.c.l.b16 %v298
        %v1048 = vpack.c.b16 %v1033, %v1032
        %v1049 = vpack.c.b16 %v1035, %v1034
        %v1050 = vpack.c.b16 %v1037, %v1036
        %v1051 = vpack.c.b16 %v1039, %v1038
        %v1052 = vpack.c.b16 %v1041, %v1040
        %v1053 = vpack.c.b16 %v1043, %v1042
        %v1054 = vpack.c.b16 %v1045, %v1044
        %v1055 = vpack.c.b16 %v1047, %v1046
        %1064 = vmatpush.bf16.msra.mxu0 %v1055
        %1065 = vmatpush.bf16.msra.mxu0 %v1054
        %1066 = vmatpush.bf16.msra.mxu0 %v1053
        %1067 = vmatpush.bf16.msra.mxu0 %v1052
        %1068 = vmatpush.bf16.msra.mxu0 %v1051
        %1069 = vmatpush.bf16.msra.mxu0 %v1050
        %1070 = vmatpush.bf16.msra.mxu0 %v1049
        %1071 = vmatpush.bf16.msra.mxu0 %v1048
        %1072 = vmatmul.bf16.gmra.mxu0 %v984
        %v1073 = vpop.f32.mrf.mxu0
        %v1074 = vadd.f32 %v841, %v1073
        %v1075 = vpop.f32.mrf.mxu0
        %v1076 = vadd.f32 %v843, %v1075
        %1077 = vmatmul.bf16.gmra.mxu0 %v985
        %v1078 = vpop.f32.mrf.mxu0
        %v1079 = vadd.f32 %v846, %v1078
        %v1080 = vpop.f32.mrf.mxu0
        %v1081 = vadd.f32 %v848, %v1080
        %1082 = vmatmul.bf16.gmra.mxu0 %v986
        %v1083 = vpop.f32.mrf.mxu0
        %v1084 = vadd.f32 %v851, %v1083
        %v1085 = vpop.f32.mrf.mxu0
        %v1086 = vadd.f32 %v853, %v1085
        %1087 = vmatmul.bf16.gmra.mxu0 %v987
        %v1088 = vpop.f32.mrf.mxu0
        %v1089 = vadd.f32 %v856, %v1088
        %v1090 = vpop.f32.mrf.mxu0
        %v1091 = vadd.f32 %v858, %v1090
        %1092 = vmatmul.bf16.gmra.mxu0 %v988
        %v1093 = vpop.f32.mrf.mxu0
        %v1094 = vadd.f32 %v861, %v1093
        %v1095 = vpop.f32.mrf.mxu0
        %v1096 = vadd.f32 %v863, %v1095
        %1097 = vmatmul.bf16.gmra.mxu0 %v989
        %v1098 = vpop.f32.mrf.mxu0
        %v1099 = vadd.f32 %v866, %v1098
        %v1100 = vpop.f32.mrf.mxu0
        %v1101 = vadd.f32 %v868, %v1100
        %1102 = vmatmul.bf16.gmra.mxu0 %v990
        %v1103 = vpop.f32.mrf.mxu0
        %v1104 = vadd.f32 %v871, %v1103
        %v1105 = vpop.f32.mrf.mxu0
        %v1106 = vadd.f32 %v873, %v1105
        %1107 = vmatmul.bf16.gmra.mxu0 %v991
        %v1108 = vpop.f32.mrf.mxu0
        %v1109 = vadd.f32 %v876, %v1108
        %v1110 = vpop.f32.mrf.mxu0
        %v1111 = vadd.f32 %v878, %v1110
        %1112 = vmatmul.bf16.gmra.mxu0 %v992
        %v1113 = vpop.f32.mrf.mxu0
        %v1114 = vadd.f32 %v881, %v1113
        %v1115 = vpop.f32.mrf.mxu0
        %v1116 = vadd.f32 %v883, %v1115
        %1117 = vmatmul.bf16.gmra.mxu0 %v993
        %v1118 = vpop.f32.mrf.mxu0
        %v1119 = vadd.f32 %v886, %v1118
        %v1120 = vpop.f32.mrf.mxu0
        %v1121 = vadd.f32 %v888, %v1120
        %1122 = vmatmul.bf16.gmra.mxu0 %v994
        %v1123 = vpop.f32.mrf.mxu0
        %v1124 = vadd.f32 %v891, %v1123
        %v1125 = vpop.f32.mrf.mxu0
        %v1126 = vadd.f32 %v893, %v1125
        %1127 = vmatmul.bf16.gmra.mxu0 %v995
        %v1128 = vpop.f32.mrf.mxu0
        %v1129 = vadd.f32 %v896, %v1128
        %v1130 = vpop.f32.mrf.mxu0
        %v1131 = vadd.f32 %v898, %v1130
        %1132 = vmatmul.bf16.gmra.mxu0 %v996
        %v1133 = vpop.f32.mrf.mxu0
        %v1134 = vadd.f32 %v901, %v1133
        %v1135 = vpop.f32.mrf.mxu0
        %v1136 = vadd.f32 %v903, %v1135
        %1137 = vmatmul.bf16.gmra.mxu0 %v997
        %v1138 = vpop.f32.mrf.mxu0
        %v1139 = vadd.f32 %v906, %v1138
        %v1140 = vpop.f32.mrf.mxu0
        %v1141 = vadd.f32 %v908, %v1140
        %1142 = vmatmul.bf16.gmra.mxu0 %v998
        %v1143 = vpop.f32.mrf.mxu0
        %v1144 = vadd.f32 %v911, %v1143
        %v1145 = vpop.f32.mrf.mxu0
        %v1146 = vadd.f32 %v913, %v1145
        %1147 = vmatmul.bf16.gmra.mxu0 %v999
        %v1148 = vpop.f32.mrf.mxu0
        %v1149 = vadd.f32 %v916, %v1148
        %v1150 = vpop.f32.mrf.mxu0
        %v1151 = vadd.f32 %v918, %v1150
        %1152 = vdwg.mxu0
        %v1153 = vld [vmem:[%s244] sm:$0xe]
        %v1154 = vld [vmem:[%s244 + $0xc] sm:$0xe]
        %v1155 = vld [vmem:[%s244 + $0x18] sm:$0xe]
        %v1156 = vld [vmem:[%s244 + $0x24] sm:$0xe]
        %v1157 = vld [vmem:[%s244 + $0x30] sm:$0xe]
        %v1158 = vld [vmem:[%s244 + $0x3c] sm:$0xe]
        %v1159 = vld [vmem:[%s244 + $0x48] sm:$0xe]
        %v1160 = vld [vmem:[%s244 + $0x54] sm:$0xe]
        %v1161 = vld [vmem:[%s244 + $0x60] sm:$0xe]
        %v1162 = vld [vmem:[%s244 + $0x6c] sm:$0xe]
        %v1163 = vld [vmem:[%s244 + $0x78] sm:$0xe]
        %v1164 = vld [vmem:[%s244 + $0x84] sm:$0xe]
        %v1165 = vld [vmem:[%s244 + $0x90] sm:$0xe]
        %v1166 = vld [vmem:[%s244 + $0x9c] sm:$0xe]
        %v1167 = vld [vmem:[%s244 + $0xa8] sm:$0xe]
        %v1168 = vld [vmem:[%s244 + $0xb4] sm:$0xe]
        %vm1201 = vcmask 1042432
        %vm1202 = vcmask 1046532
        %vm1203 = vmor %vm1201, %vm1202
        %v1204 = vrot.slane %v1153, 5
        %v1205 = vrot.slane %v1204, 4
        %v1206 = vrot.slane %v252, 5
        %v1207 = vsel %vm1203, %v1205, %v1206
        %v1208 = vrot.slane %v1206, 4
        %v1209 = vrot.slane %v299, 5
        %v1210 = vsel %vm1203, %v1208, %v1209
        %v1211 = vrot.slane %v1154, 5
        %v1212 = vrot.slane %v1211, 4
        %v1213 = vrot.slane %v254, 5
        %v1214 = vsel %vm1203, %v1212, %v1213
        %v1215 = vrot.slane %v1213, 4
        %v1216 = vrot.slane %v300, 5
        %v1217 = vsel %vm1203, %v1215, %v1216
        %v1218 = vrot.slane %v1155, 5
        %v1219 = vrot.slane %v1218, 4
        %v1220 = vrot.slane %v256, 5
        %v1221 = vsel %vm1203, %v1219, %v1220
        %v1222 = vrot.slane %v1220, 4
        %v1223 = vrot.slane %v301, 5
        %v1224 = vsel %vm1203, %v1222, %v1223
        %v1225 = vrot.slane %v1156, 5
        %v1226 = vrot.slane %v1225, 4
        %v1227 = vrot.slane %v258, 5
        %v1228 = vsel %vm1203, %v1226, %v1227
        %v1229 = vrot.slane %v1227, 4
        %v1230 = vrot.slane %v302, 5
        %v1231 = vsel %vm1203, %v1229, %v1230
        %v1232 = vrot.slane %v1157, 5
        %v1233 = vrot.slane %v1232, 4
        %v1234 = vrot.slane %v260, 5
        %v1235 = vsel %vm1203, %v1233, %v1234
        %v1236 = vrot.slane %v1234, 4
        %v1237 = vrot.slane %v303, 5
        %v1238 = vsel %vm1203, %v1236, %v1237
        %v1239 = vrot.slane %v1158, 5
        %v1240 = vrot.slane %v1239, 4
        %v1241 = vrot.slane %v262, 5
        %v1242 = vsel %vm1203, %v1240, %v1241
        %v1243 = vrot.slane %v1241, 4
        %v1244 = vrot.slane %v304, 5
        %v1245 = vsel %vm1203, %v1243, %v1244
        %v1246 = vrot.slane %v1159, 5
        %v1247 = vrot.slane %v1246, 4
        %v1248 = vrot.slane %v264, 5
        %v1249 = vsel %vm1203, %v1247, %v1248
        %v1250 = vrot.slane %v1248, 4
        %v1251 = vrot.slane %v305, 5
        %v1252 = vsel %vm1203, %v1250, %v1251
        %v1253 = vrot.slane %v1160, 5
        %v1254 = vrot.slane %v1253, 4
        %v1255 = vrot.slane %v266, 5
        %v1256 = vsel %vm1203, %v1254, %v1255
        %v1257 = vrot.slane %v1255, 4
        %v1258 = vrot.slane %v306, 5
        %v1259 = vsel %vm1203, %v1257, %v1258
        %v1260 = vrot.slane %v1161, 5
        %v1261 = vrot.slane %v1260, 4
        %v1262 = vrot.slane %v268, 5
        %v1263 = vsel %vm1203, %v1261, %v1262
        %v1264 = vrot.slane %v1262, 4
        %v1265 = vrot.slane %v307, 5
        %v1266 = vsel %vm1203, %v1264, %v1265
        %v1267 = vrot.slane %v1162, 5
        %v1268 = vrot.slane %v1267, 4
        %v1269 = vrot.slane %v270, 5
        %v1270 = vsel %vm1203, %v1268, %v1269
        %v1271 = vrot.slane %v1269, 4
        %v1272 = vrot.slane %v308, 5
        %v1273 = vsel %vm1203, %v1271, %v1272
        %v1274 = vrot.slane %v1163, 5
        %v1275 = vrot.slane %v1274, 4
        %v1276 = vrot.slane %v272, 5
        %v1277 = vsel %vm1203, %v1275, %v1276
        %v1278 = vrot.slane %v1276, 4
        %v1279 = vrot.slane %v309, 5
        %v1280 = vsel %vm1203, %v1278, %v1279
        %v1281 = vrot.slane %v1164, 5
        %v1282 = vrot.slane %v1281, 4
        %v1283 = vrot.slane %v274, 5
        %v1284 = vsel %vm1203, %v1282, %v1283
        %v1285 = vrot.slane %v1283, 4
        %v1286 = vrot.slane %v310, 5
        %v1287 = vsel %vm1203, %v1285, %v1286
        %v1288 = vrot.slane %v1165, 5
        %v1289 = vrot.slane %v1288, 4
        %v1290 = vrot.slane %v276, 5
        %v1291 = vsel %vm1203, %v1289, %v1290
        %v1292 = vrot.slane %v1290, 4
        %v1293 = vrot.slane %v311, 5
        %v1294 = vsel %vm1203, %v1292, %v1293
        %v1295 = vrot.slane %v1166, 5
        %v1296 = vrot.slane %v1295, 4
        %v1297 = vrot.slane %v278, 5
        %v1298 = vsel %vm1203, %v1296, %v1297
        %v1299 = vrot.slane %v1297, 4
        %v1300 = vrot.slane %v312, 5
        %v1301 = vsel %vm1203, %v1299, %v1300
        %v1302 = vrot.slane %v1167, 5
        %v1303 = vrot.slane %v1302, 4
        %v1304 = vrot.slane %v280, 5
        %v1305 = vsel %vm1203, %v1303, %v1304
        %v1306 = vrot.slane %v1304, 4
        %v1307 = vrot.slane %v313, 5
        %v1308 = vsel %vm1203, %v1306, %v1307
        %v1309 = vrot.slane %v1168, 5
        %v1310 = vrot.slane %v1309, 4
        %v1311 = vrot.slane %v282, 5
        %v1312 = vsel %vm1203, %v1310, %v1311
        %v1313 = vrot.slane %v1311, 4
        %v1314 = vrot.slane %v314, 5
        %v1315 = vsel %vm1203, %v1313, %v1314
        %s1316 = scalar_lea.vmem %s1, 128
        %v1317 = vld [vmem:[%s1316] sm:$0xf]
        %v1318 = vld [vmem:[%s1316 + $0x4] sm:$0xf]
        %v1319 = vld [vmem:[%s1316 + $0x8] sm:$0xf]
        %v1320 = vld [vmem:[%s1316 + $0xc] sm:$0xf]
        %v1321 = vld [vmem:[%s1316 + $0x10] sm:$0xf]
        %v1322 = vld [vmem:[%s1316 + $0x14] sm:$0xf]
        %v1323 = vld [vmem:[%s1316 + $0x18] sm:$0xf]
        %v1324 = vld [vmem:[%s1316 + $0x1c] sm:$0xf]
        %v1325 = vld [vmem:[%s1316 + $0x20] sm:$0xf]
        %v1326 = vld [vmem:[%s1316 + $0x24] sm:$0xf]
        %v1327 = vld [vmem:[%s1316 + $0x28] sm:$0xf]
        %v1328 = vld [vmem:[%s1316 + $0x2c] sm:$0xf]
        %v1329 = vld [vmem:[%s1316 + $0x30] sm:$0xf]
        %v1330 = vld [vmem:[%s1316 + $0x34] sm:$0xf]
        %v1331 = vld [vmem:[%s1316 + $0x38] sm:$0xf]
        %v1332 = vld [vmem:[%s1316 + $0x3c] sm:$0xf]
        %v1333 = vunpack.c.l.b16 %v1207
        %v1334 = vunpack.c.l.b16 %v1210
        %v1335 = vunpack.c.l.b16 %v1214
        %v1336 = vunpack.c.l.b16 %v1217
        %v1337 = vunpack.c.l.b16 %v1221
        %v1338 = vunpack.c.l.b16 %v1224
        %v1339 = vunpack.c.l.b16 %v1228
        %v1340 = vunpack.c.l.b16 %v1231
        %v1341 = vunpack.c.l.b16 %v1235
        %v1342 = vunpack.c.l.b16 %v1238
        %v1343 = vunpack.c.l.b16 %v1242
        %v1344 = vunpack.c.l.b16 %v1245
        %v1345 = vunpack.c.l.b16 %v1249
        %v1346 = vunpack.c.l.b16 %v1252
        %v1347 = vunpack.c.l.b16 %v1256
        %v1348 = vunpack.c.l.b16 %v1259
        %v1349 = vunpack.c.l.b16 %v1263
        %v1350 = vunpack.c.l.b16 %v1266
        %v1351 = vunpack.c.l.b16 %v1270
        %v1352 = vunpack.c.l.b16 %v1273
        %v1353 = vunpack.c.l.b16 %v1277
        %v1354 = vunpack.c.l.b16 %v1280
        %v1355 = vunpack.c.l.b16 %v1284
        %v1356 = vunpack.c.l.b16 %v1287
        %v1357 = vunpack.c.l.b16 %v1291
        %v1358 = vunpack.c.l.b16 %v1294
        %v1359 = vunpack.c.l.b16 %v1298
        %v1360 = vunpack.c.l.b16 %v1301
        %v1361 = vunpack.c.l.b16 %v1305
        %v1362 = vunpack.c.l.b16 %v1308
        %v1363 = vunpack.c.l.b16 %v1312
        %v1364 = vunpack.c.l.b16 %v1315
        %v1365 = vpack.c.b16 %v1334, %v1333
        %v1366 = vpack.c.b16 %v1336, %v1335
        %v1367 = vpack.c.b16 %v1338, %v1337
        %v1368 = vpack.c.b16 %v1340, %v1339
        %v1369 = vpack.c.b16 %v1342, %v1341
        %v1370 = vpack.c.b16 %v1344, %v1343
        %v1371 = vpack.c.b16 %v1346, %v1345
        %v1372 = vpack.c.b16 %v1348, %v1347
        %v1373 = vpack.c.b16 %v1350, %v1349
        %v1374 = vpack.c.b16 %v1352, %v1351
        %v1375 = vpack.c.b16 %v1354, %v1353
        %v1376 = vpack.c.b16 %v1356, %v1355
        %v1377 = vpack.c.b16 %v1358, %v1357
        %v1378 = vpack.c.b16 %v1360, %v1359
        %v1379 = vpack.c.b16 %v1362, %v1361
        %v1380 = vpack.c.b16 %v1364, %v1363
        %v1413 = vunpack.c.l.b16 %v1317
        %v1414 = vunpack.c.l.b16 %v1318
        %v1415 = vunpack.c.l.b16 %v1319
        %v1416 = vunpack.c.l.b16 %v1320
        %v1417 = vunpack.c.l.b16 %v1321
        %v1418 = vunpack.c.l.b16 %v1322
        %v1419 = vunpack.c.l.b16 %v1323
        %v1420 = vunpack.c.l.b16 %v1324
        %v1421 = vunpack.c.l.b16 %v1325
        %v1422 = vunpack.c.l.b16 %v1326
        %v1423 = vunpack.c.l.b16 %v1327
        %v1424 = vunpack.c.l.b16 %v1328
        %v1425 = vunpack.c.l.b16 %v1329
        %v1426 = vunpack.c.l.b16 %v1330
        %v1427 = vunpack.c.l.b16 %v1331
        %v1428 = vunpack.c.l.b16 %v1332
        %v1429 = vpack.c.b16 %v1414, %v1413
        %v1430 = vpack.c.b16 %v1416, %v1415
        %v1431 = vpack.c.b16 %v1418, %v1417
        %v1432 = vpack.c.b16 %v1420, %v1419
        %v1433 = vpack.c.b16 %v1422, %v1421
        %v1434 = vpack.c.b16 %v1424, %v1423
        %v1435 = vpack.c.b16 %v1426, %v1425
        %v1436 = vpack.c.b16 %v1428, %v1427
        %1445 = vmatpush.bf16.msra.mxu0 %v1436
        %1446 = vmatpush.bf16.msra.mxu0 %v1435
        %1447 = vmatpush.bf16.msra.mxu0 %v1434
        %1448 = vmatpush.bf16.msra.mxu0 %v1433
        %1449 = vmatpush.bf16.msra.mxu0 %v1432
        %1450 = vmatpush.bf16.msra.mxu0 %v1431
        %1451 = vmatpush.bf16.msra.mxu0 %v1430
        %1452 = vmatpush.bf16.msra.mxu0 %v1429
        %1453 = vmatmul.bf16.gmra.mxu0 %v1365
        %v1454 = vpop.f32.mrf.mxu0
        %v1455 = vadd.f32 0.0, %v1454
        %v1456 = vpop.f32.mrf.mxu0
        %v1457 = vadd.f32 0.0, %v1456
        %1458 = vmatmul.bf16.gmra.mxu0 %v1366
        %v1459 = vpop.f32.mrf.mxu0
        %v1460 = vadd.f32 0.0, %v1459
        %v1461 = vpop.f32.mrf.mxu0
        %v1462 = vadd.f32 0.0, %v1461
        %1463 = vmatmul.bf16.gmra.mxu0 %v1367
        %v1464 = vpop.f32.mrf.mxu0
        %v1465 = vadd.f32 0.0, %v1464
        %v1466 = vpop.f32.mrf.mxu0
        %v1467 = vadd.f32 0.0, %v1466
        %1468 = vmatmul.bf16.gmra.mxu0 %v1368
        %v1469 = vpop.f32.mrf.mxu0
        %v1470 = vadd.f32 0.0, %v1469
        %v1471 = vpop.f32.mrf.mxu0
        %v1472 = vadd.f32 0.0, %v1471
        %1473 = vmatmul.bf16.gmra.mxu0 %v1369
        %v1474 = vpop.f32.mrf.mxu0
        %v1475 = vadd.f32 0.0, %v1474
        %v1476 = vpop.f32.mrf.mxu0
        %v1477 = vadd.f32 0.0, %v1476
        %1478 = vmatmul.bf16.gmra.mxu0 %v1370
        %v1479 = vpop.f32.mrf.mxu0
        %v1480 = vadd.f32 0.0, %v1479
        %v1481 = vpop.f32.mrf.mxu0
        %v1482 = vadd.f32 0.0, %v1481
        %1483 = vmatmul.bf16.gmra.mxu0 %v1371
        %v1484 = vpop.f32.mrf.mxu0
        %v1485 = vadd.f32 0.0, %v1484
        %v1486 = vpop.f32.mrf.mxu0
        %v1487 = vadd.f32 0.0, %v1486
        %1488 = vmatmul.bf16.gmra.mxu0 %v1372
        %v1489 = vpop.f32.mrf.mxu0
        %v1490 = vadd.f32 0.0, %v1489
        %v1491 = vpop.f32.mrf.mxu0
        %v1492 = vadd.f32 0.0, %v1491
        %1493 = vmatmul.bf16.gmra.mxu0 %v1373
        %v1494 = vpop.f32.mrf.mxu0
        %v1495 = vadd.f32 0.0, %v1494
        %v1496 = vpop.f32.mrf.mxu0
        %v1497 = vadd.f32 0.0, %v1496
        %1498 = vmatmul.bf16.gmra.mxu0 %v1374
        %v1499 = vpop.f32.mrf.mxu0
        %v1500 = vadd.f32 0.0, %v1499
        %v1501 = vpop.f32.mrf.mxu0
        %v1502 = vadd.f32 0.0, %v1501
        %1503 = vmatmul.bf16.gmra.mxu0 %v1375
        %v1504 = vpop.f32.mrf.mxu0
        %v1505 = vadd.f32 0.0, %v1504
        %v1506 = vpop.f32.mrf.mxu0
        %v1507 = vadd.f32 0.0, %v1506
        %1508 = vmatmul.bf16.gmra.mxu0 %v1376
        %v1509 = vpop.f32.mrf.mxu0
        %v1510 = vadd.f32 0.0, %v1509
        %v1511 = vpop.f32.mrf.mxu0
        %v1512 = vadd.f32 0.0, %v1511
        %1513 = vmatmul.bf16.gmra.mxu0 %v1377
        %v1514 = vpop.f32.mrf.mxu0
        %v1515 = vadd.f32 0.0, %v1514
        %v1516 = vpop.f32.mrf.mxu0
        %v1517 = vadd.f32 0.0, %v1516
        %1518 = vmatmul.bf16.gmra.mxu0 %v1378
        %v1519 = vpop.f32.mrf.mxu0
        %v1520 = vadd.f32 0.0, %v1519
        %v1521 = vpop.f32.mrf.mxu0
        %v1522 = vadd.f32 0.0, %v1521
        %1523 = vmatmul.bf16.gmra.mxu0 %v1379
        %v1524 = vpop.f32.mrf.mxu0
        %v1525 = vadd.f32 0.0, %v1524
        %v1526 = vpop.f32.mrf.mxu0
        %v1527 = vadd.f32 0.0, %v1526
        %1528 = vmatmul.bf16.gmra.mxu0 %v1380
        %v1529 = vpop.f32.mrf.mxu0
        %v1530 = vadd.f32 0.0, %v1529
        %v1531 = vpop.f32.mrf.mxu0
        %v1532 = vadd.f32 0.0, %v1531
        %1533 = vdwg.mxu0
        %v1534 = vadd.f32 %v1074, %v1455
        %v1535 = vadd.f32 %v1076, %v1457
        %v1536 = vadd.f32 %v1079, %v1460
        %v1537 = vadd.f32 %v1081, %v1462
        %v1538 = vadd.f32 %v1084, %v1465
        %v1539 = vadd.f32 %v1086, %v1467
        %v1540 = vadd.f32 %v1089, %v1470
        %v1541 = vadd.f32 %v1091, %v1472
        %v1542 = vadd.f32 %v1094, %v1475
        %v1543 = vadd.f32 %v1096, %v1477
        %v1544 = vadd.f32 %v1099, %v1480
        %v1545 = vadd.f32 %v1101, %v1482
        %v1546 = vadd.f32 %v1104, %v1485
        %v1547 = vadd.f32 %v1106, %v1487
        %v1548 = vadd.f32 %v1109, %v1490
        %v1549 = vadd.f32 %v1111, %v1492
        %v1550 = vadd.f32 %v1114, %v1495
        %v1551 = vadd.f32 %v1116, %v1497
        %v1552 = vadd.f32 %v1119, %v1500
        %v1553 = vadd.f32 %v1121, %v1502
        %v1554 = vadd.f32 %v1124, %v1505
        %v1555 = vadd.f32 %v1126, %v1507
        %v1556 = vadd.f32 %v1129, %v1510
        %v1557 = vadd.f32 %v1131, %v1512
        %v1558 = vadd.f32 %v1134, %v1515
        %v1559 = vadd.f32 %v1136, %v1517
        %v1560 = vadd.f32 %v1139, %v1520
        %v1561 = vadd.f32 %v1141, %v1522
        %v1562 = vadd.f32 %v1144, %v1525
        %v1563 = vadd.f32 %v1146, %v1527
        %v1564 = vadd.f32 %v1149, %v1530
        %v1565 = vadd.f32 %v1151, %v1532
        %s1566 = scalar_lea.vmem %s244, 12
        %v1567 = vld [vmem:[%s1566] sm:$0xf]
        %v1568 = vld [vmem:[%s1566 + $0x4] sm:$0xf]
        %v1569 = vld [vmem:[%s1566 + $0xc] sm:$0xf]
        %v1570 = vld [vmem:[%s1566 + $0x10] sm:$0xf]
        %v1571 = vld [vmem:[%s1566 + $0x18] sm:$0xf]
        %v1572 = vld [vmem:[%s1566 + $0x1c] sm:$0xf]
        %v1573 = vld [vmem:[%s1566 + $0x24] sm:$0xf]
        %v1574 = vld [vmem:[%s1566 + $0x28] sm:$0xf]
        %v1575 = vld [vmem:[%s1566 + $0x30] sm:$0xf]
        %v1576 = vld [vmem:[%s1566 + $0x34] sm:$0xf]
        %v1577 = vld [vmem:[%s1566 + $0x3c] sm:$0xf]
        %v1578 = vld [vmem:[%s1566 + $0x40] sm:$0xf]
        %v1579 = vld [vmem:[%s1566 + $0x48] sm:$0xf]
        %v1580 = vld [vmem:[%s1566 + $0x4c] sm:$0xf]
        %v1581 = vld [vmem:[%s1566 + $0x54] sm:$0xf]
        %v1582 = vld [vmem:[%s1566 + $0x58] sm:$0xf]
        %v1583 = vld [vmem:[%s1566 + $0x60] sm:$0xf]
        %v1584 = vld [vmem:[%s1566 + $0x64] sm:$0xf]
        %v1585 = vld [vmem:[%s1566 + $0x6c] sm:$0xf]
        %v1586 = vld [vmem:[%s1566 + $0x70] sm:$0xf]
        %v1587 = vld [vmem:[%s1566 + $0x78] sm:$0xf]
        %v1588 = vld [vmem:[%s1566 + $0x7c] sm:$0xf]
        %v1589 = vld [vmem:[%s1566 + $0x84] sm:$0xf]
        %v1590 = vld [vmem:[%s1566 + $0x88] sm:$0xf]
        %v1591 = vld [vmem:[%s1566 + $0x90] sm:$0xf]
        %v1592 = vld [vmem:[%s1566 + $0x94] sm:$0xf]
        %v1593 = vld [vmem:[%s1566 + $0x9c] sm:$0xf]
        %v1594 = vld [vmem:[%s1566 + $0xa0] sm:$0xf]
        %v1595 = vld [vmem:[%s1566 + $0xa8] sm:$0xf]
        %v1596 = vld [vmem:[%s1566 + $0xac] sm:$0xf]
        %v1597 = vld [vmem:[%s1566 + $0xb4] sm:$0xf]
        %v1598 = vld [vmem:[%s1566 + $0xb8] sm:$0xf]
        %s1599 = scalar_lea.vmem %s1, 192
        %v1600 = vld [vmem:[%s1599] sm:$0xf]
        %v1601 = vld [vmem:[%s1599 + $0x4] sm:$0xf]
        %v1602 = vld [vmem:[%s1599 + $0x8] sm:$0xf]
        %v1603 = vld [vmem:[%s1599 + $0xc] sm:$0xf]
        %v1604 = vld [vmem:[%s1599 + $0x10] sm:$0xf]
        %v1605 = vld [vmem:[%s1599 + $0x14] sm:$0xf]
        %v1606 = vld [vmem:[%s1599 + $0x18] sm:$0xf]
        %v1607 = vld [vmem:[%s1599 + $0x1c] sm:$0xf]
        %v1608 = vld [vmem:[%s1599 + $0x20] sm:$0xf]
        %v1609 = vld [vmem:[%s1599 + $0x24] sm:$0xf]
        %v1610 = vld [vmem:[%s1599 + $0x28] sm:$0xf]
        %v1611 = vld [vmem:[%s1599 + $0x2c] sm:$0xf]
        %v1612 = vld [vmem:[%s1599 + $0x30] sm:$0xf]
        %v1613 = vld [vmem:[%s1599 + $0x34] sm:$0xf]
        %v1614 = vld [vmem:[%s1599 + $0x38] sm:$0xf]
        %v1615 = vld [vmem:[%s1599 + $0x3c] sm:$0xf]
        %v1648 = vunpack.c.l.b16 %v1567
        %v1649 = vunpack.c.l.b16 %v1568
        %v1650 = vunpack.c.l.b16 %v1569
        %v1651 = vunpack.c.l.b16 %v1570
        %v1652 = vunpack.c.l.b16 %v1571
        %v1653 = vunpack.c.l.b16 %v1572
        %v1654 = vunpack.c.l.b16 %v1573
        %v1655 = vunpack.c.l.b16 %v1574
        %v1656 = vunpack.c.l.b16 %v1575
        %v1657 = vunpack.c.l.b16 %v1576
        %v1658 = vunpack.c.l.b16 %v1577
        %v1659 = vunpack.c.l.b16 %v1578
        %v1660 = vunpack.c.l.b16 %v1579
        %v1661 = vunpack.c.l.b16 %v1580
        %v1662 = vunpack.c.l.b16 %v1581
        %v1663 = vunpack.c.l.b16 %v1582
        %v1664 = vunpack.c.l.b16 %v1583
        %v1665 = vunpack.c.l.b16 %v1584
        %v1666 = vunpack.c.l.b16 %v1585
        %v1667 = vunpack.c.l.b16 %v1586
        %v1668 = vunpack.c.l.b16 %v1587
        %v1669 = vunpack.c.l.b16 %v1588
        %v1670 = vunpack.c.l.b16 %v1589
        %v1671 = vunpack.c.l.b16 %v1590
        %v1672 = vunpack.c.l.b16 %v1591
        %v1673 = vunpack.c.l.b16 %v1592
        %v1674 = vunpack.c.l.b16 %v1593
        %v1675 = vunpack.c.l.b16 %v1594
        %v1676 = vunpack.c.l.b16 %v1595
        %v1677 = vunpack.c.l.b16 %v1596
        %v1678 = vunpack.c.l.b16 %v1597
        %v1679 = vunpack.c.l.b16 %v1598
        %v1680 = vpack.c.b16 %v1649, %v1648
        %v1681 = vpack.c.b16 %v1651, %v1650
        %v1682 = vpack.c.b16 %v1653, %v1652
        %v1683 = vpack.c.b16 %v1655, %v1654
        %v1684 = vpack.c.b16 %v1657, %v1656
        %v1685 = vpack.c.b16 %v1659, %v1658
        %v1686 = vpack.c.b16 %v1661, %v1660
        %v1687 = vpack.c.b16 %v1663, %v1662
        %v1688 = vpack.c.b16 %v1665, %v1664
        %v1689 = vpack.c.b16 %v1667, %v1666
        %v1690 = vpack.c.b16 %v1669, %v1668
        %v1691 = vpack.c.b16 %v1671, %v1670
        %v1692 = vpack.c.b16 %v1673, %v1672
        %v1693 = vpack.c.b16 %v1675, %v1674
        %v1694 = vpack.c.b16 %v1677, %v1676
        %v1695 = vpack.c.b16 %v1679, %v1678
        %v1728 = vunpack.c.l.b16 %v1600
        %v1729 = vunpack.c.l.b16 %v1601
        %v1730 = vunpack.c.l.b16 %v1602
        %v1731 = vunpack.c.l.b16 %v1603
        %v1732 = vunpack.c.l.b16 %v1604
        %v1733 = vunpack.c.l.b16 %v1605
        %v1734 = vunpack.c.l.b16 %v1606
        %v1735 = vunpack.c.l.b16 %v1607
        %v1736 = vunpack.c.l.b16 %v1608
        %v1737 = vunpack.c.l.b16 %v1609
        %v1738 = vunpack.c.l.b16 %v1610
        %v1739 = vunpack.c.l.b16 %v1611
        %v1740 = vunpack.c.l.b16 %v1612
        %v1741 = vunpack.c.l.b16 %v1613
        %v1742 = vunpack.c.l.b16 %v1614
        %v1743 = vunpack.c.l.b16 %v1615
        %v1744 = vpack.c.b16 %v1729, %v1728
        %v1745 = vpack.c.b16 %v1731, %v1730
        %v1746 = vpack.c.b16 %v1733, %v1732
        %v1747 = vpack.c.b16 %v1735, %v1734
        %v1748 = vpack.c.b16 %v1737, %v1736
        %v1749 = vpack.c.b16 %v1739, %v1738
        %v1750 = vpack.c.b16 %v1741, %v1740
        %v1751 = vpack.c.b16 %v1743, %v1742
        %1760 = vmatpush.bf16.msra.mxu0 %v1751
        %1761 = vmatpush.bf16.msra.mxu0 %v1750
        %1762 = vmatpush.bf16.msra.mxu0 %v1749
        %1763 = vmatpush.bf16.msra.mxu0 %v1748
        %1764 = vmatpush.bf16.msra.mxu0 %v1747
        %1765 = vmatpush.bf16.msra.mxu0 %v1746
        %1766 = vmatpush.bf16.msra.mxu0 %v1745
        %1767 = vmatpush.bf16.msra.mxu0 %v1744
        %1768 = vmatmul.bf16.gmra.mxu0 %v1680
        %v1769 = vpop.f32.mrf.mxu0
        %v1770 = vadd.f32 0.0, %v1769
        %v1771 = vpop.f32.mrf.mxu0
        %v1772 = vadd.f32 0.0, %v1771
        %1773 = vmatmul.bf16.gmra.mxu0 %v1681
        %v1774 = vpop.f32.mrf.mxu0
        %v1775 = vadd.f32 0.0, %v1774
        %v1776 = vpop.f32.mrf.mxu0
        %v1777 = vadd.f32 0.0, %v1776
        %1778 = vmatmul.bf16.gmra.mxu0 %v1682
        %v1779 = vpop.f32.mrf.mxu0
        %v1780 = vadd.f32 0.0, %v1779
        %v1781 = vpop.f32.mrf.mxu0
        %v1782 = vadd.f32 0.0, %v1781
        %1783 = vmatmul.bf16.gmra.mxu0 %v1683
        %v1784 = vpop.f32.mrf.mxu0
        %v1785 = vadd.f32 0.0, %v1784
        %v1786 = vpop.f32.mrf.mxu0
        %v1787 = vadd.f32 0.0, %v1786
        %1788 = vmatmul.bf16.gmra.mxu0 %v1684
        %v1789 = vpop.f32.mrf.mxu0
        %v1790 = vadd.f32 0.0, %v1789
        %v1791 = vpop.f32.mrf.mxu0
        %v1792 = vadd.f32 0.0, %v1791
        %1793 = vmatmul.bf16.gmra.mxu0 %v1685
        %v1794 = vpop.f32.mrf.mxu0
        %v1795 = vadd.f32 0.0, %v1794
        %v1796 = vpop.f32.mrf.mxu0
        %v1797 = vadd.f32 0.0, %v1796
        %1798 = vmatmul.bf16.gmra.mxu0 %v1686
        %v1799 = vpop.f32.mrf.mxu0
        %v1800 = vadd.f32 0.0, %v1799
        %v1801 = vpop.f32.mrf.mxu0
        %v1802 = vadd.f32 0.0, %v1801
        %1803 = vmatmul.bf16.gmra.mxu0 %v1687
        %v1804 = vpop.f32.mrf.mxu0
        %v1805 = vadd.f32 0.0, %v1804
        %v1806 = vpop.f32.mrf.mxu0
        %v1807 = vadd.f32 0.0, %v1806
        %1808 = vmatmul.bf16.gmra.mxu0 %v1688
        %v1809 = vpop.f32.mrf.mxu0
        %v1810 = vadd.f32 0.0, %v1809
        %v1811 = vpop.f32.mrf.mxu0
        %v1812 = vadd.f32 0.0, %v1811
        %1813 = vmatmul.bf16.gmra.mxu0 %v1689
        %v1814 = vpop.f32.mrf.mxu0
        %v1815 = vadd.f32 0.0, %v1814
        %v1816 = vpop.f32.mrf.mxu0
        %v1817 = vadd.f32 0.0, %v1816
        %1818 = vmatmul.bf16.gmra.mxu0 %v1690
        %v1819 = vpop.f32.mrf.mxu0
        %v1820 = vadd.f32 0.0, %v1819
        %v1821 = vpop.f32.mrf.mxu0
        %v1822 = vadd.f32 0.0, %v1821
        %1823 = vmatmul.bf16.gmra.mxu0 %v1691
        %v1824 = vpop.f32.mrf.mxu0
        %v1825 = vadd.f32 0.0, %v1824
        %v1826 = vpop.f32.mrf.mxu0
        %v1827 = vadd.f32 0.0, %v1826
        %1828 = vmatmul.bf16.gmra.mxu0 %v1692
        %v1829 = vpop.f32.mrf.mxu0
        %v1830 = vadd.f32 0.0, %v1829
        %v1831 = vpop.f32.mrf.mxu0
        %v1832 = vadd.f32 0.0, %v1831
        %1833 = vmatmul.bf16.gmra.mxu0 %v1693
        %v1834 = vpop.f32.mrf.mxu0
        %v1835 = vadd.f32 0.0, %v1834
        %v1836 = vpop.f32.mrf.mxu0
        %v1837 = vadd.f32 0.0, %v1836
        %1838 = vmatmul.bf16.gmra.mxu0 %v1694
        %v1839 = vpop.f32.mrf.mxu0
        %v1840 = vadd.f32 0.0, %v1839
        %v1841 = vpop.f32.mrf.mxu0
        %v1842 = vadd.f32 0.0, %v1841
        %1843 = vmatmul.bf16.gmra.mxu0 %v1695
        %v1844 = vpop.f32.mrf.mxu0
        %v1845 = vadd.f32 0.0, %v1844
        %v1846 = vpop.f32.mrf.mxu0
        %v1847 = vadd.f32 0.0, %v1846
        %1848 = vdwg.mxu0
        %v1849 = vadd.f32 %v1534, %v1770
        %v1850 = vadd.f32 %v1535, %v1772
        %v1851 = vadd.f32 %v1536, %v1775
        %v1852 = vadd.f32 %v1537, %v1777
        %v1853 = vadd.f32 %v1538, %v1780
        %v1854 = vadd.f32 %v1539, %v1782
        %v1855 = vadd.f32 %v1540, %v1785
        %v1856 = vadd.f32 %v1541, %v1787
        %v1857 = vadd.f32 %v1542, %v1790
        %v1858 = vadd.f32 %v1543, %v1792
        %v1859 = vadd.f32 %v1544, %v1795
        %v1860 = vadd.f32 %v1545, %v1797
        %v1861 = vadd.f32 %v1546, %v1800
        %v1862 = vadd.f32 %v1547, %v1802
        %v1863 = vadd.f32 %v1548, %v1805
        %v1864 = vadd.f32 %v1549, %v1807
        %v1865 = vadd.f32 %v1550, %v1810
        %v1866 = vadd.f32 %v1551, %v1812
        %v1867 = vadd.f32 %v1552, %v1815
        %v1868 = vadd.f32 %v1553, %v1817
        %v1869 = vadd.f32 %v1554, %v1820
        %v1870 = vadd.f32 %v1555, %v1822
        %v1871 = vadd.f32 %v1556, %v1825
        %v1872 = vadd.f32 %v1557, %v1827
        %v1873 = vadd.f32 %v1558, %v1830
        %v1874 = vadd.f32 %v1559, %v1832
        %v1875 = vadd.f32 %v1560, %v1835
        %v1876 = vadd.f32 %v1561, %v1837
        %v1877 = vadd.f32 %v1562, %v1840
        %v1878 = vadd.f32 %v1563, %v1842
        %v1879 = vadd.f32 %v1564, %v1845
        %v1880 = vadd.f32 %v1565, %v1847
        %v1881 = vld [vmem:[%s1566] sm:$0xf]
        %v1882 = vld [vmem:[%s1566 + $0x4] sm:$0xf]
        %v1883 = vld [vmem:[%s1566 + $0x8] sm:$0x1]
        %v1884 = vld [vmem:[%s1566 + $0xc] sm:$0xf]
        %v1885 = vld [vmem:[%s1566 + $0x10] sm:$0xf]
        %v1886 = vld [vmem:[%s1566 + $0x14] sm:$0x1]
        %v1887 = vld [vmem:[%s1566 + $0x18] sm:$0xf]
        %v1888 = vld [vmem:[%s1566 + $0x1c] sm:$0xf]
        %v1889 = vld [vmem:[%s1566 + $0x20] sm:$0x1]
        %v1890 = vld [vmem:[%s1566 + $0x24] sm:$0xf]
        %v1891 = vld [vmem:[%s1566 + $0x28] sm:$0xf]
        %v1892 = vld [vmem:[%s1566 + $0x2c] sm:$0x1]
        %v1893 = vld [vmem:[%s1566 + $0x30] sm:$0xf]
        %v1894 = vld [vmem:[%s1566 + $0x34] sm:$0xf]
        %v1895 = vld [vmem:[%s1566 + $0x38] sm:$0x1]
        %v1896 = vld [vmem:[%s1566 + $0x3c] sm:$0xf]
        %v1897 = vld [vmem:[%s1566 + $0x40] sm:$0xf]
        %v1898 = vld [vmem:[%s1566 + $0x44] sm:$0x1]
        %v1899 = vld [vmem:[%s1566 + $0x48] sm:$0xf]
        %v1900 = vld [vmem:[%s1566 + $0x4c] sm:$0xf]
        %v1901 = vld [vmem:[%s1566 + $0x50] sm:$0x1]
        %v1902 = vld [vmem:[%s1566 + $0x54] sm:$0xf]
        %v1903 = vld [vmem:[%s1566 + $0x58] sm:$0xf]
        %v1904 = vld [vmem:[%s1566 + $0x5c] sm:$0x1]
        %v1905 = vld [vmem:[%s1566 + $0x60] sm:$0xf]
        %v1906 = vld [vmem:[%s1566 + $0x64] sm:$0xf]
        %v1907 = vld [vmem:[%s1566 + $0x68] sm:$0x1]
        %v1908 = vld [vmem:[%s1566 + $0x6c] sm:$0xf]
        %v1909 = vld [vmem:[%s1566 + $0x70] sm:$0xf]
        %v1910 = vld [vmem:[%s1566 + $0x74] sm:$0x1]
        %v1911 = vld [vmem:[%s1566 + $0x78] sm:$0xf]
        %v1912 = vld [vmem:[%s1566 + $0x7c] sm:$0xf]
        %v1913 = vld [vmem:[%s1566 + $0x80] sm:$0x1]
        %v1914 = vld [vmem:[%s1566 + $0x84] sm:$0xf]
        %v1915 = vld [vmem:[%s1566 + $0x88] sm:$0xf]
        %v1916 = vld [vmem:[%s1566 + $0x8c] sm:$0x1]
        %v1917 = vld [vmem:[%s1566 + $0x90] sm:$0xf]
        %v1918 = vld [vmem:[%s1566 + $0x94] sm:$0xf]
        %v1919 = vld [vmem:[%s1566 + $0x98] sm:$0x1]
        %v1920 = vld [vmem:[%s1566 + $0x9c] sm:$0xf]
        %v1921 = vld [vmem:[%s1566 + $0xa0] sm:$0xf]
        %v1922 = vld [vmem:[%s1566 + $0xa4] sm:$0x1]
        %v1923 = vld [vmem:[%s1566 + $0xa8] sm:$0xf]
        %v1924 = vld [vmem:[%s1566 + $0xac] sm:$0xf]
        %v1925 = vld [vmem:[%s1566 + $0xb0] sm:$0x1]
        %v1926 = vld [vmem:[%s1566 + $0xb4] sm:$0xf]
        %v1927 = vld [vmem:[%s1566 + $0xb8] sm:$0xf]
        %v1928 = vld [vmem:[%s1566 + $0xbc] sm:$0x1]
        %v1930 = vshrl.u32 %v1881, 16
        %v1932 = vrot.slane %v1930, 4
        %v1933 = vshll.u32 %v1881, 16
        %v1935 = vrot.slane %v1933, 5
        %v1936 = vor.u32 %v1932, %v1935
        %v1937 = vrot.slane %v1936, 4
        %v1939 = vshll.u32 %v1882, 16
        %v1941 = vrot.slane %v1939, 5
        %v1942 = vsel %vm317, %v1937, %v1941
        %v1943 = vshrl.u32 %v1882, 16
        %v1945 = vrot.slane %v1943, 4
        %v1946 = vor.u32 %v1945, %v1941
        %v1947 = vrot.slane %v1946, 4
        %v1949 = vshll.u32 %v1883, 16
        %v1951 = vrot.slane %v1949, 5
        %v1952 = vsel %vm317, %v1947, %v1951
        %v1954 = vshrl.u32 %v1884, 16
        %v1956 = vrot.slane %v1954, 4
        %v1957 = vshll.u32 %v1884, 16
        %v1959 = vrot.slane %v1957, 5
        %v1960 = vor.u32 %v1956, %v1959
        %v1961 = vrot.slane %v1960, 4
        %v1963 = vshll.u32 %v1885, 16
        %v1965 = vrot.slane %v1963, 5
        %v1966 = vsel %vm317, %v1961, %v1965
        %v1967 = vshrl.u32 %v1885, 16
        %v1969 = vrot.slane %v1967, 4
        %v1970 = vor.u32 %v1969, %v1965
        %v1971 = vrot.slane %v1970, 4
        %v1973 = vshll.u32 %v1886, 16
        %v1975 = vrot.slane %v1973, 5
        %v1976 = vsel %vm317, %v1971, %v1975
        %v1978 = vshrl.u32 %v1887, 16
        %v1980 = vrot.slane %v1978, 4
        %v1981 = vshll.u32 %v1887, 16
        %v1983 = vrot.slane %v1981, 5
        %v1984 = vor.u32 %v1980, %v1983
        %v1985 = vrot.slane %v1984, 4
        %v1987 = vshll.u32 %v1888, 16
        %v1989 = vrot.slane %v1987, 5
        %v1990 = vsel %vm317, %v1985, %v1989
        %v1991 = vshrl.u32 %v1888, 16
        %v1993 = vrot.slane %v1991, 4
        %v1994 = vor.u32 %v1993, %v1989
        %v1995 = vrot.slane %v1994, 4
        %v1997 = vshll.u32 %v1889, 16
        %v1999 = vrot.slane %v1997, 5
        %v2000 = vsel %vm317, %v1995, %v1999
        %v2002 = vshrl.u32 %v1890, 16
        %v2004 = vrot.slane %v2002, 4
        %v2005 = vshll.u32 %v1890, 16
        %v2007 = vrot.slane %v2005, 5
        %v2008 = vor.u32 %v2004, %v2007
        %v2009 = vrot.slane %v2008, 4
        %v2011 = vshll.u32 %v1891, 16
        %v2013 = vrot.slane %v2011, 5
        %v2014 = vsel %vm317, %v2009, %v2013
        %v2015 = vshrl.u32 %v1891, 16
        %v2017 = vrot.slane %v2015, 4
        %v2018 = vor.u32 %v2017, %v2013
        %v2019 = vrot.slane %v2018, 4
        %v2021 = vshll.u32 %v1892, 16
        %v2023 = vrot.slane %v2021, 5
        %v2024 = vsel %vm317, %v2019, %v2023
        %v2026 = vshrl.u32 %v1893, 16
        %v2028 = vrot.slane %v2026, 4
        %v2029 = vshll.u32 %v1893, 16
        %v2031 = vrot.slane %v2029, 5
        %v2032 = vor.u32 %v2028, %v2031
        %v2033 = vrot.slane %v2032, 4
        %v2035 = vshll.u32 %v1894, 16
        %v2037 = vrot.slane %v2035, 5
        %v2038 = vsel %vm317, %v2033, %v2037
        %v2039 = vshrl.u32 %v1894, 16
        %v2041 = vrot.slane %v2039, 4
        %v2042 = vor.u32 %v2041, %v2037
        %v2043 = vrot.slane %v2042, 4
        %v2045 = vshll.u32 %v1895, 16
        %v2047 = vrot.slane %v2045, 5
        %v2048 = vsel %vm317, %v2043, %v2047
        %v2050 = vshrl.u32 %v1896, 16
        %v2052 = vrot.slane %v2050, 4
        %v2053 = vshll.u32 %v1896, 16
        %v2055 = vrot.slane %v2053, 5
        %v2056 = vor.u32 %v2052, %v2055
        %v2057 = vrot.slane %v2056, 4
        %v2059 = vshll.u32 %v1897, 16
        %v2061 = vrot.slane %v2059, 5
        %v2062 = vsel %vm317, %v2057, %v2061
        %v2063 = vshrl.u32 %v1897, 16
        %v2065 = vrot.slane %v2063, 4
        %v2066 = vor.u32 %v2065, %v2061
        %v2067 = vrot.slane %v2066, 4
        %v2069 = vshll.u32 %v1898, 16
        %v2071 = vrot.slane %v2069, 5
        %v2072 = vsel %vm317, %v2067, %v2071
        %v2074 = vshrl.u32 %v1899, 16
        %v2076 = vrot.slane %v2074, 4
        %v2077 = vshll.u32 %v1899, 16
        %v2079 = vrot.slane %v2077, 5
        %v2080 = vor.u32 %v2076, %v2079
        %v2081 = vrot.slane %v2080, 4
        %v2083 = vshll.u32 %v1900, 16
        %v2085 = vrot.slane %v2083, 5
        %v2086 = vsel %vm317, %v2081, %v2085
        %v2087 = vshrl.u32 %v1900, 16
        %v2089 = vrot.slane %v2087, 4
        %v2090 = vor.u32 %v2089, %v2085
        %v2091 = vrot.slane %v2090, 4
        %v2093 = vshll.u32 %v1901, 16
        %v2095 = vrot.slane %v2093, 5
        %v2096 = vsel %vm317, %v2091, %v2095
        %v2098 = vshrl.u32 %v1902, 16
        %v2100 = vrot.slane %v2098, 4
        %v2101 = vshll.u32 %v1902, 16
        %v2103 = vrot.slane %v2101, 5
        %v2104 = vor.u32 %v2100, %v2103
        %v2105 = vrot.slane %v2104, 4
        %v2107 = vshll.u32 %v1903, 16
        %v2109 = vrot.slane %v2107, 5
        %v2110 = vsel %vm317, %v2105, %v2109
        %v2111 = vshrl.u32 %v1903, 16
        %v2113 = vrot.slane %v2111, 4
        %v2114 = vor.u32 %v2113, %v2109
        %v2115 = vrot.slane %v2114, 4
        %v2117 = vshll.u32 %v1904, 16
        %v2119 = vrot.slane %v2117, 5
        %v2120 = vsel %vm317, %v2115, %v2119
        %v2122 = vshrl.u32 %v1905, 16
        %v2124 = vrot.slane %v2122, 4
        %v2125 = vshll.u32 %v1905, 16
        %v2127 = vrot.slane %v2125, 5
        %v2128 = vor.u32 %v2124, %v2127
        %v2129 = vrot.slane %v2128, 4
        %v2131 = vshll.u32 %v1906, 16
        %v2133 = vrot.slane %v2131, 5
        %v2134 = vsel %vm317, %v2129, %v2133
        %v2135 = vshrl.u32 %v1906, 16
        %v2137 = vrot.slane %v2135, 4
        %v2138 = vor.u32 %v2137, %v2133
        %v2139 = vrot.slane %v2138, 4
        %v2141 = vshll.u32 %v1907, 16
        %v2143 = vrot.slane %v2141, 5
        %v2144 = vsel %vm317, %v2139, %v2143
        %v2146 = vshrl.u32 %v1908, 16
        %v2148 = vrot.slane %v2146, 4
        %v2149 = vshll.u32 %v1908, 16
        %v2151 = vrot.slane %v2149, 5
        %v2152 = vor.u32 %v2148, %v2151
        %v2153 = vrot.slane %v2152, 4
        %v2155 = vshll.u32 %v1909, 16
        %v2157 = vrot.slane %v2155, 5
        %v2158 = vsel %vm317, %v2153, %v2157
        %v2159 = vshrl.u32 %v1909, 16
        %v2161 = vrot.slane %v2159, 4
        %v2162 = vor.u32 %v2161, %v2157
        %v2163 = vrot.slane %v2162, 4
        %v2165 = vshll.u32 %v1910, 16
        %v2167 = vrot.slane %v2165, 5
        %v2168 = vsel %vm317, %v2163, %v2167
        %v2170 = vshrl.u32 %v1911, 16
        %v2172 = vrot.slane %v2170, 4
        %v2173 = vshll.u32 %v1911, 16
        %v2175 = vrot.slane %v2173, 5
        %v2176 = vor.u32 %v2172, %v2175
        %v2177 = vrot.slane %v2176, 4
        %v2179 = vshll.u32 %v1912, 16
        %v2181 = vrot.slane %v2179, 5
        %v2182 = vsel %vm317, %v2177, %v2181
        %v2183 = vshrl.u32 %v1912, 16
        %v2185 = vrot.slane %v2183, 4
        %v2186 = vor.u32 %v2185, %v2181
        %v2187 = vrot.slane %v2186, 4
        %v2189 = vshll.u32 %v1913, 16
        %v2191 = vrot.slane %v2189, 5
        %v2192 = vsel %vm317, %v2187, %v2191
        %v2194 = vshrl.u32 %v1914, 16
        %v2196 = vrot.slane %v2194, 4
        %v2197 = vshll.u32 %v1914, 16
        %v2199 = vrot.slane %v2197, 5
        %v2200 = vor.u32 %v2196, %v2199
        %v2201 = vrot.slane %v2200, 4
        %v2203 = vshll.u32 %v1915, 16
        %v2205 = vrot.slane %v2203, 5
        %v2206 = vsel %vm317, %v2201, %v2205
        %v2207 = vshrl.u32 %v1915, 16
        %v2209 = vrot.slane %v2207, 4
        %v2210 = vor.u32 %v2209, %v2205
        %v2211 = vrot.slane %v2210, 4
        %v2213 = vshll.u32 %v1916, 16
        %v2215 = vrot.slane %v2213, 5
        %v2216 = vsel %vm317, %v2211, %v2215
        %v2218 = vshrl.u32 %v1917, 16
        %v2220 = vrot.slane %v2218, 4
        %v2221 = vshll.u32 %v1917, 16
        %v2223 = vrot.slane %v2221, 5
        %v2224 = vor.u32 %v2220, %v2223
        %v2225 = vrot.slane %v2224, 4
        %v2227 = vshll.u32 %v1918, 16
        %v2229 = vrot.slane %v2227, 5
        %v2230 = vsel %vm317, %v2225, %v2229
        %v2231 = vshrl.u32 %v1918, 16
        %v2233 = vrot.slane %v2231, 4
        %v2234 = vor.u32 %v2233, %v2229
        %v2235 = vrot.slane %v2234, 4
        %v2237 = vshll.u32 %v1919, 16
        %v2239 = vrot.slane %v2237, 5
        %v2240 = vsel %vm317, %v2235, %v2239
        %v2242 = vshrl.u32 %v1920, 16
        %v2244 = vrot.slane %v2242, 4
        %v2245 = vshll.u32 %v1920, 16
        %v2247 = vrot.slane %v2245, 5
        %v2248 = vor.u32 %v2244, %v2247
        %v2249 = vrot.slane %v2248, 4
        %v2251 = vshll.u32 %v1921, 16
        %v2253 = vrot.slane %v2251, 5
        %v2254 = vsel %vm317, %v2249, %v2253
        %v2255 = vshrl.u32 %v1921, 16
        %v2257 = vrot.slane %v2255, 4
        %v2258 = vor.u32 %v2257, %v2253
        %v2259 = vrot.slane %v2258, 4
        %v2261 = vshll.u32 %v1922, 16
        %v2263 = vrot.slane %v2261, 5
        %v2264 = vsel %vm317, %v2259, %v2263
        %v2266 = vshrl.u32 %v1923, 16
        %v2268 = vrot.slane %v2266, 4
        %v2269 = vshll.u32 %v1923, 16
        %v2271 = vrot.slane %v2269, 5
        %v2272 = vor.u32 %v2268, %v2271
        %v2273 = vrot.slane %v2272, 4
        %v2275 = vshll.u32 %v1924, 16
        %v2277 = vrot.slane %v2275, 5
        %v2278 = vsel %vm317, %v2273, %v2277
        %v2279 = vshrl.u32 %v1924, 16
        %v2281 = vrot.slane %v2279, 4
        %v2282 = vor.u32 %v2281, %v2277
        %v2283 = vrot.slane %v2282, 4
        %v2285 = vshll.u32 %v1925, 16
        %v2287 = vrot.slane %v2285, 5
        %v2288 = vsel %vm317, %v2283, %v2287
        %v2290 = vshrl.u32 %v1926, 16
        %v2292 = vrot.slane %v2290, 4
        %v2293 = vshll.u32 %v1926, 16
        %v2295 = vrot.slane %v2293, 5
        %v2296 = vor.u32 %v2292, %v2295
        %v2297 = vrot.slane %v2296, 4
        %v2299 = vshll.u32 %v1927, 16
        %v2301 = vrot.slane %v2299, 5
        %v2302 = vsel %vm317, %v2297, %v2301
        %v2303 = vshrl.u32 %v1927, 16
        %v2305 = vrot.slane %v2303, 4
        %v2306 = vor.u32 %v2305, %v2301
        %v2307 = vrot.slane %v2306, 4
        %v2309 = vshll.u32 %v1928, 16
        %v2311 = vrot.slane %v2309, 5
        %v2312 = vsel %vm317, %v2307, %v2311
        %s2313 = scalar_lea.vmem %s1, 256
        %v2314 = vld [vmem:[%s2313] sm:$0xf]
        %v2315 = vld [vmem:[%s2313 + $0x4] sm:$0xf]
        %v2316 = vld [vmem:[%s2313 + $0x8] sm:$0xf]
        %v2317 = vld [vmem:[%s2313 + $0xc] sm:$0xf]
        %v2318 = vld [vmem:[%s2313 + $0x10] sm:$0xf]
        %v2319 = vld [vmem:[%s2313 + $0x14] sm:$0xf]
        %v2320 = vld [vmem:[%s2313 + $0x18] sm:$0xf]
        %v2321 = vld [vmem:[%s2313 + $0x1c] sm:$0xf]
        %v2322 = vld [vmem:[%s2313 + $0x20] sm:$0xf]
        %v2323 = vld [vmem:[%s2313 + $0x24] sm:$0xf]
        %v2324 = vld [vmem:[%s2313 + $0x28] sm:$0xf]
        %v2325 = vld [vmem:[%s2313 + $0x2c] sm:$0xf]
        %v2326 = vld [vmem:[%s2313 + $0x30] sm:$0xf]
        %v2327 = vld [vmem:[%s2313 + $0x34] sm:$0xf]
        %v2328 = vld [vmem:[%s2313 + $0x38] sm:$0xf]
        %v2329 = vld [vmem:[%s2313 + $0x3c] sm:$0xf]
        %v2330 = vunpack.c.l.b16 %v1942
        %v2331 = vunpack.c.l.b16 %v1952
        %v2332 = vunpack.c.l.b16 %v1966
        %v2333 = vunpack.c.l.b16 %v1976
        %v2334 = vunpack.c.l.b16 %v1990
        %v2335 = vunpack.c.l.b16 %v2000
        %v2336 = vunpack.c.l.b16 %v2014
        %v2337 = vunpack.c.l.b16 %v2024
        %v2338 = vunpack.c.l.b16 %v2038
        %v2339 = vunpack.c.l.b16 %v2048
        %v2340 = vunpack.c.l.b16 %v2062
        %v2341 = vunpack.c.l.b16 %v2072
        %v2342 = vunpack.c.l.b16 %v2086
        %v2343 = vunpack.c.l.b16 %v2096
        %v2344 = vunpack.c.l.b16 %v2110
        %v2345 = vunpack.c.l.b16 %v2120
        %v2346 = vunpack.c.l.b16 %v2134
        %v2347 = vunpack.c.l.b16 %v2144
        %v2348 = vunpack.c.l.b16 %v2158
        %v2349 = vunpack.c.l.b16 %v2168
        %v2350 = vunpack.c.l.b16 %v2182
        %v2351 = vunpack.c.l.b16 %v2192
        %v2352 = vunpack.c.l.b16 %v2206
        %v2353 = vunpack.c.l.b16 %v2216
        %v2354 = vunpack.c.l.b16 %v2230
        %v2355 = vunpack.c.l.b16 %v2240
        %v2356 = vunpack.c.l.b16 %v2254
        %v2357 = vunpack.c.l.b16 %v2264
        %v2358 = vunpack.c.l.b16 %v2278
        %v2359 = vunpack.c.l.b16 %v2288
        %v2360 = vunpack.c.l.b16 %v2302
        %v2361 = vunpack.c.l.b16 %v2312
        %v2362 = vpack.c.b16 %v2331, %v2330
        %v2363 = vpack.c.b16 %v2333, %v2332
        %v2364 = vpack.c.b16 %v2335, %v2334
        %v2365 = vpack.c.b16 %v2337, %v2336
        %v2366 = vpack.c.b16 %v2339, %v2338
        %v2367 = vpack.c.b16 %v2341, %v2340
        %v2368 = vpack.c.b16 %v2343, %v2342
        %v2369 = vpack.c.b16 %v2345, %v2344
        %v2370 = vpack.c.b16 %v2347, %v2346
        %v2371 = vpack.c.b16 %v2349, %v2348
        %v2372 = vpack.c.b16 %v2351, %v2350
        %v2373 = vpack.c.b16 %v2353, %v2352
        %v2374 = vpack.c.b16 %v2355, %v2354
        %v2375 = vpack.c.b16 %v2357, %v2356
        %v2376 = vpack.c.b16 %v2359, %v2358
        %v2377 = vpack.c.b16 %v2361, %v2360
        %v2410 = vunpack.c.l.b16 %v2314
        %v2411 = vunpack.c.l.b16 %v2315
        %v2412 = vunpack.c.l.b16 %v2316
        %v2413 = vunpack.c.l.b16 %v2317
        %v2414 = vunpack.c.l.b16 %v2318
        %v2415 = vunpack.c.l.b16 %v2319
        %v2416 = vunpack.c.l.b16 %v2320
        %v2417 = vunpack.c.l.b16 %v2321
        %v2418 = vunpack.c.l.b16 %v2322
        %v2419 = vunpack.c.l.b16 %v2323
        %v2420 = vunpack.c.l.b16 %v2324
        %v2421 = vunpack.c.l.b16 %v2325
        %v2422 = vunpack.c.l.b16 %v2326
        %v2423 = vunpack.c.l.b16 %v2327
        %v2424 = vunpack.c.l.b16 %v2328
        %v2425 = vunpack.c.l.b16 %v2329
        %v2426 = vpack.c.b16 %v2411, %v2410
        %v2427 = vpack.c.b16 %v2413, %v2412
        %v2428 = vpack.c.b16 %v2415, %v2414
        %v2429 = vpack.c.b16 %v2417, %v2416
        %v2430 = vpack.c.b16 %v2419, %v2418
        %v2431 = vpack.c.b16 %v2421, %v2420
        %v2432 = vpack.c.b16 %v2423, %v2422
        %v2433 = vpack.c.b16 %v2425, %v2424
        %2442 = vmatpush.bf16.msra.mxu0 %v2433
        %2443 = vmatpush.bf16.msra.mxu0 %v2432
        %2444 = vmatpush.bf16.msra.mxu0 %v2431
        %2445 = vmatpush.bf16.msra.mxu0 %v2430
        %2446 = vmatpush.bf16.msra.mxu0 %v2429
        %2447 = vmatpush.bf16.msra.mxu0 %v2428
        %2448 = vmatpush.bf16.msra.mxu0 %v2427
        %2449 = vmatpush.bf16.msra.mxu0 %v2426
        %2450 = vmatmul.bf16.gmra.mxu0 %v2362
        %v2451 = vpop.f32.mrf.mxu0
        %v2452 = vadd.f32 0.0, %v2451
        %v2453 = vpop.f32.mrf.mxu0
        %v2454 = vadd.f32 0.0, %v2453
        %2455 = vmatmul.bf16.gmra.mxu0 %v2363
        %v2456 = vpop.f32.mrf.mxu0
        %v2457 = vadd.f32 0.0, %v2456
        %v2458 = vpop.f32.mrf.mxu0
        %v2459 = vadd.f32 0.0, %v2458
        %2460 = vmatmul.bf16.gmra.mxu0 %v2364
        %v2461 = vpop.f32.mrf.mxu0
        %v2462 = vadd.f32 0.0, %v2461
        %v2463 = vpop.f32.mrf.mxu0
        %v2464 = vadd.f32 0.0, %v2463
        %2465 = vmatmul.bf16.gmra.mxu0 %v2365
        %v2466 = vpop.f32.mrf.mxu0
        %v2467 = vadd.f32 0.0, %v2466
        %v2468 = vpop.f32.mrf.mxu0
        %v2469 = vadd.f32 0.0, %v2468
        %2470 = vmatmul.bf16.gmra.mxu0 %v2366
        %v2471 = vpop.f32.mrf.mxu0
        %v2472 = vadd.f32 0.0, %v2471
        %v2473 = vpop.f32.mrf.mxu0
        %v2474 = vadd.f32 0.0, %v2473
        %2475 = vmatmul.bf16.gmra.mxu0 %v2367
        %v2476 = vpop.f32.mrf.mxu0
        %v2477 = vadd.f32 0.0, %v2476
        %v2478 = vpop.f32.mrf.mxu0
        %v2479 = vadd.f32 0.0, %v2478
        %2480 = vmatmul.bf16.gmra.mxu0 %v2368
        %v2481 = vpop.f32.mrf.mxu0
        %v2482 = vadd.f32 0.0, %v2481
        %v2483 = vpop.f32.mrf.mxu0
        %v2484 = vadd.f32 0.0, %v2483
        %2485 = vmatmul.bf16.gmra.mxu0 %v2369
        %v2486 = vpop.f32.mrf.mxu0
        %v2487 = vadd.f32 0.0, %v2486
        %v2488 = vpop.f32.mrf.mxu0
        %v2489 = vadd.f32 0.0, %v2488
        %2490 = vmatmul.bf16.gmra.mxu0 %v2370
        %v2491 = vpop.f32.mrf.mxu0
        %v2492 = vadd.f32 0.0, %v2491
        %v2493 = vpop.f32.mrf.mxu0
        %v2494 = vadd.f32 0.0, %v2493
        %2495 = vmatmul.bf16.gmra.mxu0 %v2371
        %v2496 = vpop.f32.mrf.mxu0
        %v2497 = vadd.f32 0.0, %v2496
        %v2498 = vpop.f32.mrf.mxu0
        %v2499 = vadd.f32 0.0, %v2498
        %2500 = vmatmul.bf16.gmra.mxu0 %v2372
        %v2501 = vpop.f32.mrf.mxu0
        %v2502 = vadd.f32 0.0, %v2501
        %v2503 = vpop.f32.mrf.mxu0
        %v2504 = vadd.f32 0.0, %v2503
        %2505 = vmatmul.bf16.gmra.mxu0 %v2373
        %v2506 = vpop.f32.mrf.mxu0
        %v2507 = vadd.f32 0.0, %v2506
        %v2508 = vpop.f32.mrf.mxu0
        %v2509 = vadd.f32 0.0, %v2508
        %2510 = vmatmul.bf16.gmra.mxu0 %v2374
        %v2511 = vpop.f32.mrf.mxu0
        %v2512 = vadd.f32 0.0, %v2511
        %v2513 = vpop.f32.mrf.mxu0
        %v2514 = vadd.f32 0.0, %v2513
        %2515 = vmatmul.bf16.gmra.mxu0 %v2375
        %v2516 = vpop.f32.mrf.mxu0
        %v2517 = vadd.f32 0.0, %v2516
        %v2518 = vpop.f32.mrf.mxu0
        %v2519 = vadd.f32 0.0, %v2518
        %2520 = vmatmul.bf16.gmra.mxu0 %v2376
        %v2521 = vpop.f32.mrf.mxu0
        %v2522 = vadd.f32 0.0, %v2521
        %v2523 = vpop.f32.mrf.mxu0
        %v2524 = vadd.f32 0.0, %v2523
        %2525 = vmatmul.bf16.gmra.mxu0 %v2377
        %v2526 = vpop.f32.mrf.mxu0
        %v2527 = vadd.f32 0.0, %v2526
        %v2528 = vpop.f32.mrf.mxu0
        %v2529 = vadd.f32 0.0, %v2528
        %2530 = vdwg.mxu0
        %v2531 = vadd.f32 %v1849, %v2452
        %v2532 = vadd.f32 %v1850, %v2454
        %v2533 = vadd.f32 %v1851, %v2457
        %v2534 = vadd.f32 %v1852, %v2459
        %v2535 = vadd.f32 %v1853, %v2462
        %v2536 = vadd.f32 %v1854, %v2464
        %v2537 = vadd.f32 %v1855, %v2467
        %v2538 = vadd.f32 %v1856, %v2469
        %v2539 = vadd.f32 %v1857, %v2472
        %v2540 = vadd.f32 %v1858, %v2474
        %v2541 = vadd.f32 %v1859, %v2477
        %v2542 = vadd.f32 %v1860, %v2479
        %v2543 = vadd.f32 %v1861, %v2482
        %v2544 = vadd.f32 %v1862, %v2484
        %v2545 = vadd.f32 %v1863, %v2487
        %v2546 = vadd.f32 %v1864, %v2489
        %v2547 = vadd.f32 %v1865, %v2492
        %v2548 = vadd.f32 %v1866, %v2494
        %v2549 = vadd.f32 %v1867, %v2497
        %v2550 = vadd.f32 %v1868, %v2499
        %v2551 = vadd.f32 %v1869, %v2502
        %v2552 = vadd.f32 %v1870, %v2504
        %v2553 = vadd.f32 %v1871, %v2507
        %v2554 = vadd.f32 %v1872, %v2509
        %v2555 = vadd.f32 %v1873, %v2512
        %v2556 = vadd.f32 %v1874, %v2514
        %v2557 = vadd.f32 %v1875, %v2517
        %v2558 = vadd.f32 %v1876, %v2519
        %v2559 = vadd.f32 %v1877, %v2522
        %v2560 = vadd.f32 %v1878, %v2524
        %v2561 = vadd.f32 %v1879, %v2527
        %v2562 = vadd.f32 %v1880, %v2529
        %v2563 = vld [vmem:[%s1566] sm:$0xe]
        %v2564 = vld [vmem:[%s1566 + $0xc] sm:$0xe]
        %v2565 = vld [vmem:[%s1566 + $0x18] sm:$0xe]
        %v2566 = vld [vmem:[%s1566 + $0x24] sm:$0xe]
        %v2567 = vld [vmem:[%s1566 + $0x30] sm:$0xe]
        %v2568 = vld [vmem:[%s1566 + $0x3c] sm:$0xe]
        %v2569 = vld [vmem:[%s1566 + $0x48] sm:$0xe]
        %v2570 = vld [vmem:[%s1566 + $0x54] sm:$0xe]
        %v2571 = vld [vmem:[%s1566 + $0x60] sm:$0xe]
        %v2572 = vld [vmem:[%s1566 + $0x6c] sm:$0xe]
        %v2573 = vld [vmem:[%s1566 + $0x78] sm:$0xe]
        %v2574 = vld [vmem:[%s1566 + $0x84] sm:$0xe]
        %v2575 = vld [vmem:[%s1566 + $0x90] sm:$0xe]
        %v2576 = vld [vmem:[%s1566 + $0x9c] sm:$0xe]
        %v2577 = vld [vmem:[%s1566 + $0xa8] sm:$0xe]
        %v2578 = vld [vmem:[%s1566 + $0xb4] sm:$0xe]
        %v2627 = vrot.slane %v2563, 5
        %v2628 = vrot.slane %v2627, 4
        %v2629 = vrot.slane %v1882, 5
        %v2630 = vsel %vm1203, %v2628, %v2629
        %v2631 = vrot.slane %v2629, 4
        %v2632 = vrot.slane %v1883, 5
        %v2633 = vsel %vm1203, %v2631, %v2632
        %v2634 = vrot.slane %v2564, 5
        %v2635 = vrot.slane %v2634, 4
        %v2636 = vrot.slane %v1885, 5
        %v2637 = vsel %vm1203, %v2635, %v2636
        %v2638 = vrot.slane %v2636, 4
        %v2639 = vrot.slane %v1886, 5
        %v2640 = vsel %vm1203, %v2638, %v2639
        %v2641 = vrot.slane %v2565, 5
        %v2642 = vrot.slane %v2641, 4
        %v2643 = vrot.slane %v1888, 5
        %v2644 = vsel %vm1203, %v2642, %v2643
        %v2645 = vrot.slane %v2643, 4
        %v2646 = vrot.slane %v1889, 5
        %v2647 = vsel %vm1203, %v2645, %v2646
        %v2648 = vrot.slane %v2566, 5
        %v2649 = vrot.slane %v2648, 4
        %v2650 = vrot.slane %v1891, 5
        %v2651 = vsel %vm1203, %v2649, %v2650
        %v2652 = vrot.slane %v2650, 4
        %v2653 = vrot.slane %v1892, 5
        %v2654 = vsel %vm1203, %v2652, %v2653
        %v2655 = vrot.slane %v2567, 5
        %v2656 = vrot.slane %v2655, 4
        %v2657 = vrot.slane %v1894, 5
        %v2658 = vsel %vm1203, %v2656, %v2657
        %v2659 = vrot.slane %v2657, 4
        %v2660 = vrot.slane %v1895, 5
        %v2661 = vsel %vm1203, %v2659, %v2660
        %v2662 = vrot.slane %v2568, 5
        %v2663 = vrot.slane %v2662, 4
        %v2664 = vrot.slane %v1897, 5
        %v2665 = vsel %vm1203, %v2663, %v2664
        %v2666 = vrot.slane %v2664, 4
        %v2667 = vrot.slane %v1898, 5
        %v2668 = vsel %vm1203, %v2666, %v2667
        %v2669 = vrot.slane %v2569, 5
        %v2670 = vrot.slane %v2669, 4
        %v2671 = vrot.slane %v1900, 5
        %v2672 = vsel %vm1203, %v2670, %v2671
        %v2673 = vrot.slane %v2671, 4
        %v2674 = vrot.slane %v1901, 5
        %v2675 = vsel %vm1203, %v2673, %v2674
        %v2676 = vrot.slane %v2570, 5
        %v2677 = vrot.slane %v2676, 4
        %v2678 = vrot.slane %v1903, 5
        %v2679 = vsel %vm1203, %v2677, %v2678
        %v2680 = vrot.slane %v2678, 4
        %v2681 = vrot.slane %v1904, 5
        %v2682 = vsel %vm1203, %v2680, %v2681
        %v2683 = vrot.slane %v2571, 5
        %v2684 = vrot.slane %v2683, 4
        %v2685 = vrot.slane %v1906, 5
        %v2686 = vsel %vm1203, %v2684, %v2685
        %v2687 = vrot.slane %v2685, 4
        %v2688 = vrot.slane %v1907, 5
        %v2689 = vsel %vm1203, %v2687, %v2688
        %v2690 = vrot.slane %v2572, 5
        %v2691 = vrot.slane %v2690, 4
        %v2692 = vrot.slane %v1909, 5
        %v2693 = vsel %vm1203, %v2691, %v2692
        %v2694 = vrot.slane %v2692, 4
        %v2695 = vrot.slane %v1910, 5
        %v2696 = vsel %vm1203, %v2694, %v2695
        %v2697 = vrot.slane %v2573, 5
        %v2698 = vrot.slane %v2697, 4
        %v2699 = vrot.slane %v1912, 5
        %v2700 = vsel %vm1203, %v2698, %v2699
        %v2701 = vrot.slane %v2699, 4
        %v2702 = vrot.slane %v1913, 5
        %v2703 = vsel %vm1203, %v2701, %v2702
        %v2704 = vrot.slane %v2574, 5
        %v2705 = vrot.slane %v2704, 4
        %v2706 = vrot.slane %v1915, 5
        %v2707 = vsel %vm1203, %v2705, %v2706
        %v2708 = vrot.slane %v2706, 4
        %v2709 = vrot.slane %v1916, 5
        %v2710 = vsel %vm1203, %v2708, %v2709
        %v2711 = vrot.slane %v2575, 5
        %v2712 = vrot.slane %v2711, 4
        %v2713 = vrot.slane %v1918, 5
        %v2714 = vsel %vm1203, %v2712, %v2713
        %v2715 = vrot.slane %v2713, 4
        %v2716 = vrot.slane %v1919, 5
        %v2717 = vsel %vm1203, %v2715, %v2716
        %v2718 = vrot.slane %v2576, 5
        %v2719 = vrot.slane %v2718, 4
        %v2720 = vrot.slane %v1921, 5
        %v2721 = vsel %vm1203, %v2719, %v2720
        %v2722 = vrot.slane %v2720, 4
        %v2723 = vrot.slane %v1922, 5
        %v2724 = vsel %vm1203, %v2722, %v2723
        %v2725 = vrot.slane %v2577, 5
        %v2726 = vrot.slane %v2725, 4
        %v2727 = vrot.slane %v1924, 5
        %v2728 = vsel %vm1203, %v2726, %v2727
        %v2729 = vrot.slane %v2727, 4
        %v2730 = vrot.slane %v1925, 5
        %v2731 = vsel %vm1203, %v2729, %v2730
        %v2732 = vrot.slane %v2578, 5
        %v2733 = vrot.slane %v2732, 4
        %v2734 = vrot.slane %v1927, 5
        %v2735 = vsel %vm1203, %v2733, %v2734
        %v2736 = vrot.slane %v2734, 4
        %v2737 = vrot.slane %v1928, 5
        %v2738 = vsel %vm1203, %v2736, %v2737
        %s2739 = scalar_lea.vmem %s1, 320
        %v2740 = vld [vmem:[%s2739] sm:$0xf]
        %v2741 = vld [vmem:[%s2739 + $0x4] sm:$0xf]
        %v2742 = vld [vmem:[%s2739 + $0x8] sm:$0xf]
        %v2743 = vld [vmem:[%s2739 + $0xc] sm:$0xf]
        %v2744 = vld [vmem:[%s2739 + $0x10] sm:$0xf]
        %v2745 = vld [vmem:[%s2739 + $0x14] sm:$0xf]
        %v2746 = vld [vmem:[%s2739 + $0x18] sm:$0xf]
        %v2747 = vld [vmem:[%s2739 + $0x1c] sm:$0xf]
        %v2748 = vld [vmem:[%s2739 + $0x20] sm:$0xf]
        %v2749 = vld [vmem:[%s2739 + $0x24] sm:$0xf]
        %v2750 = vld [vmem:[%s2739 + $0x28] sm:$0xf]
        %v2751 = vld [vmem:[%s2739 + $0x2c] sm:$0xf]
        %v2752 = vld [vmem:[%s2739 + $0x30] sm:$0xf]
        %v2753 = vld [vmem:[%s2739 + $0x34] sm:$0xf]
        %v2754 = vld [vmem:[%s2739 + $0x38] sm:$0xf]
        %v2755 = vld [vmem:[%s2739 + $0x3c] sm:$0xf]
        %v2756 = vunpack.c.l.b16 %v2630
        %v2757 = vunpack.c.l.b16 %v2633
        %v2758 = vunpack.c.l.b16 %v2637
        %v2759 = vunpack.c.l.b16 %v2640
        %v2760 = vunpack.c.l.b16 %v2644
        %v2761 = vunpack.c.l.b16 %v2647
        %v2762 = vunpack.c.l.b16 %v2651
        %v2763 = vunpack.c.l.b16 %v2654
        %v2764 = vunpack.c.l.b16 %v2658
        %v2765 = vunpack.c.l.b16 %v2661
        %v2766 = vunpack.c.l.b16 %v2665
        %v2767 = vunpack.c.l.b16 %v2668
        %v2768 = vunpack.c.l.b16 %v2672
        %v2769 = vunpack.c.l.b16 %v2675
        %v2770 = vunpack.c.l.b16 %v2679
        %v2771 = vunpack.c.l.b16 %v2682
        %v2772 = vunpack.c.l.b16 %v2686
        %v2773 = vunpack.c.l.b16 %v2689
        %v2774 = vunpack.c.l.b16 %v2693
        %v2775 = vunpack.c.l.b16 %v2696
        %v2776 = vunpack.c.l.b16 %v2700
        %v2777 = vunpack.c.l.b16 %v2703
        %v2778 = vunpack.c.l.b16 %v2707
        %v2779 = vunpack.c.l.b16 %v2710
        %v2780 = vunpack.c.l.b16 %v2714
        %v2781 = vunpack.c.l.b16 %v2717
        %v2782 = vunpack.c.l.b16 %v2721
        %v2783 = vunpack.c.l.b16 %v2724
        %v2784 = vunpack.c.l.b16 %v2728
        %v2785 = vunpack.c.l.b16 %v2731
        %v2786 = vunpack.c.l.b16 %v2735
        %v2787 = vunpack.c.l.b16 %v2738
        %v2788 = vpack.c.b16 %v2757, %v2756
        %v2789 = vpack.c.b16 %v2759, %v2758
        %v2790 = vpack.c.b16 %v2761, %v2760
        %v2791 = vpack.c.b16 %v2763, %v2762
        %v2792 = vpack.c.b16 %v2765, %v2764
        %v2793 = vpack.c.b16 %v2767, %v2766
        %v2794 = vpack.c.b16 %v2769, %v2768
        %v2795 = vpack.c.b16 %v2771, %v2770
        %v2796 = vpack.c.b16 %v2773, %v2772
        %v2797 = vpack.c.b16 %v2775, %v2774
        %v2798 = vpack.c.b16 %v2777, %v2776
        %v2799 = vpack.c.b16 %v2779, %v2778
        %v2800 = vpack.c.b16 %v2781, %v2780
        %v2801 = vpack.c.b16 %v2783, %v2782
        %v2802 = vpack.c.b16 %v2785, %v2784
        %v2803 = vpack.c.b16 %v2787, %v2786
        %v2836 = vunpack.c.l.b16 %v2740
        %v2837 = vunpack.c.l.b16 %v2741
        %v2838 = vunpack.c.l.b16 %v2742
        %v2839 = vunpack.c.l.b16 %v2743
        %v2840 = vunpack.c.l.b16 %v2744
        %v2841 = vunpack.c.l.b16 %v2745
        %v2842 = vunpack.c.l.b16 %v2746
        %v2843 = vunpack.c.l.b16 %v2747
        %v2844 = vunpack.c.l.b16 %v2748
        %v2845 = vunpack.c.l.b16 %v2749
        %v2846 = vunpack.c.l.b16 %v2750
        %v2847 = vunpack.c.l.b16 %v2751
        %v2848 = vunpack.c.l.b16 %v2752
        %v2849 = vunpack.c.l.b16 %v2753
        %v2850 = vunpack.c.l.b16 %v2754
        %v2851 = vunpack.c.l.b16 %v2755
        %v2852 = vpack.c.b16 %v2837, %v2836
        %v2853 = vpack.c.b16 %v2839, %v2838
        %v2854 = vpack.c.b16 %v2841, %v2840
        %v2855 = vpack.c.b16 %v2843, %v2842
        %v2856 = vpack.c.b16 %v2845, %v2844
        %v2857 = vpack.c.b16 %v2847, %v2846
        %v2858 = vpack.c.b16 %v2849, %v2848
        %v2859 = vpack.c.b16 %v2851, %v2850
        %2868 = vmatpush.bf16.msra.mxu0 %v2859
        %2869 = vmatpush.bf16.msra.mxu0 %v2858
        %2870 = vmatpush.bf16.msra.mxu0 %v2857
        %2871 = vmatpush.bf16.msra.mxu0 %v2856
        %2872 = vmatpush.bf16.msra.mxu0 %v2855
        %2873 = vmatpush.bf16.msra.mxu0 %v2854
        %2874 = vmatpush.bf16.msra.mxu0 %v2853
        %2875 = vmatpush.bf16.msra.mxu0 %v2852
        %2876 = vmatmul.bf16.gmra.mxu0 %v2788
        %v2877 = vpop.f32.mrf.mxu0
        %v2878 = vadd.f32 0.0, %v2877
        %v2879 = vpop.f32.mrf.mxu0
        %v2880 = vadd.f32 0.0, %v2879
        %2881 = vmatmul.bf16.gmra.mxu0 %v2789
        %v2882 = vpop.f32.mrf.mxu0
        %v2883 = vadd.f32 0.0, %v2882
        %v2884 = vpop.f32.mrf.mxu0
        %v2885 = vadd.f32 0.0, %v2884
        %2886 = vmatmul.bf16.gmra.mxu0 %v2790
        %v2887 = vpop.f32.mrf.mxu0
        %v2888 = vadd.f32 0.0, %v2887
        %v2889 = vpop.f32.mrf.mxu0
        %v2890 = vadd.f32 0.0, %v2889
        %2891 = vmatmul.bf16.gmra.mxu0 %v2791
        %v2892 = vpop.f32.mrf.mxu0
        %v2893 = vadd.f32 0.0, %v2892
        %v2894 = vpop.f32.mrf.mxu0
        %v2895 = vadd.f32 0.0, %v2894
        %2896 = vmatmul.bf16.gmra.mxu0 %v2792
        %v2897 = vpop.f32.mrf.mxu0
        %v2898 = vadd.f32 0.0, %v2897
        %v2899 = vpop.f32.mrf.mxu0
        %v2900 = vadd.f32 0.0, %v2899
        %2901 = vmatmul.bf16.gmra.mxu0 %v2793
        %v2902 = vpop.f32.mrf.mxu0
        %v2903 = vadd.f32 0.0, %v2902
        %v2904 = vpop.f32.mrf.mxu0
        %v2905 = vadd.f32 0.0, %v2904
        %2906 = vmatmul.bf16.gmra.mxu0 %v2794
        %v2907 = vpop.f32.mrf.mxu0
        %v2908 = vadd.f32 0.0, %v2907
        %v2909 = vpop.f32.mrf.mxu0
        %v2910 = vadd.f32 0.0, %v2909
        %2911 = vmatmul.bf16.gmra.mxu0 %v2795
        %v2912 = vpop.f32.mrf.mxu0
        %v2913 = vadd.f32 0.0, %v2912
        %v2914 = vpop.f32.mrf.mxu0
        %v2915 = vadd.f32 0.0, %v2914
        %2916 = vmatmul.bf16.gmra.mxu0 %v2796
        %v2917 = vpop.f32.mrf.mxu0
        %v2918 = vadd.f32 0.0, %v2917
        %v2919 = vpop.f32.mrf.mxu0
        %v2920 = vadd.f32 0.0, %v2919
        %2921 = vmatmul.bf16.gmra.mxu0 %v2797
        %v2922 = vpop.f32.mrf.mxu0
        %v2923 = vadd.f32 0.0, %v2922
        %v2924 = vpop.f32.mrf.mxu0
        %v2925 = vadd.f32 0.0, %v2924
        %2926 = vmatmul.bf16.gmra.mxu0 %v2798
        %v2927 = vpop.f32.mrf.mxu0
        %v2928 = vadd.f32 0.0, %v2927
        %v2929 = vpop.f32.mrf.mxu0
        %v2930 = vadd.f32 0.0, %v2929
        %2931 = vmatmul.bf16.gmra.mxu0 %v2799
        %v2932 = vpop.f32.mrf.mxu0
        %v2933 = vadd.f32 0.0, %v2932
        %v2934 = vpop.f32.mrf.mxu0
        %v2935 = vadd.f32 0.0, %v2934
        %2936 = vmatmul.bf16.gmra.mxu0 %v2800
        %v2937 = vpop.f32.mrf.mxu0
        %v2938 = vadd.f32 0.0, %v2937
        %v2939 = vpop.f32.mrf.mxu0
        %v2940 = vadd.f32 0.0, %v2939
        %2941 = vmatmul.bf16.gmra.mxu0 %v2801
        %v2942 = vpop.f32.mrf.mxu0
        %v2943 = vadd.f32 0.0, %v2942
        %v2944 = vpop.f32.mrf.mxu0
        %v2945 = vadd.f32 0.0, %v2944
        %2946 = vmatmul.bf16.gmra.mxu0 %v2802
        %v2947 = vpop.f32.mrf.mxu0
        %v2948 = vadd.f32 0.0, %v2947
        %v2949 = vpop.f32.mrf.mxu0
        %v2950 = vadd.f32 0.0, %v2949
        %2951 = vmatmul.bf16.gmra.mxu0 %v2803
        %v2952 = vpop.f32.mrf.mxu0
        %v2953 = vadd.f32 0.0, %v2952
        %v2954 = vpop.f32.mrf.mxu0
        %v2955 = vadd.f32 0.0, %v2954
        %2956 = vdwg.mxu0
        %v2957 = vadd.f32 %v2531, %v2878
        %v2958 = vadd.f32 %v2532, %v2880
        %v2959 = vadd.f32 %v2533, %v2883
        %v2960 = vadd.f32 %v2534, %v2885
        %v2961 = vadd.f32 %v2535, %v2888
        %v2962 = vadd.f32 %v2536, %v2890
        %v2963 = vadd.f32 %v2537, %v2893
        %v2964 = vadd.f32 %v2538, %v2895
        %v2965 = vadd.f32 %v2539, %v2898
        %v2966 = vadd.f32 %v2540, %v2900
        %v2967 = vadd.f32 %v2541, %v2903
        %v2968 = vadd.f32 %v2542, %v2905
        %v2969 = vadd.f32 %v2543, %v2908
        %v2970 = vadd.f32 %v2544, %v2910
        %v2971 = vadd.f32 %v2545, %v2913
        %v2972 = vadd.f32 %v2546, %v2915
        %v2973 = vadd.f32 %v2547, %v2918
        %v2974 = vadd.f32 %v2548, %v2920
        %v2975 = vadd.f32 %v2549, %v2923
        %v2976 = vadd.f32 %v2550, %v2925
        %v2977 = vadd.f32 %v2551, %v2928
        %v2978 = vadd.f32 %v2552, %v2930
        %v2979 = vadd.f32 %v2553, %v2933
        %v2980 = vadd.f32 %v2554, %v2935
        %v2981 = vadd.f32 %v2555, %v2938
        %v2982 = vadd.f32 %v2556, %v2940
        %v2983 = vadd.f32 %v2557, %v2943
        %v2984 = vadd.f32 %v2558, %v2945
        %v2985 = vadd.f32 %v2559, %v2948
        %v2986 = vadd.f32 %v2560, %v2950
        %v2987 = vadd.f32 %v2561, %v2953
        %v2988 = vadd.f32 %v2562, %v2955
        %s2989 = scalar_lea.vmem %s244, 24
        %v2990 = vld [vmem:[%s2989] sm:$0xf]
        %v2991 = vld [vmem:[%s2989 + $0x4] sm:$0xf]
        %v2992 = vld [vmem:[%s2989 + $0xc] sm:$0xf]
        %v2993 = vld [vmem:[%s2989 + $0x10] sm:$0xf]
        %v2994 = vld [vmem:[%s2989 + $0x18] sm:$0xf]
        %v2995 = vld [vmem:[%s2989 + $0x1c] sm:$0xf]
        %v2996 = vld [vmem:[%s2989 + $0x24] sm:$0xf]
        %v2997 = vld [vmem:[%s2989 + $0x28] sm:$0xf]
        %v2998 = vld [vmem:[%s2989 + $0x30] sm:$0xf]
        %v2999 = vld [vmem:[%s2989 + $0x34] sm:$0xf]
        %v3000 = vld [vmem:[%s2989 + $0x3c] sm:$0xf]
        %v3001 = vld [vmem:[%s2989 + $0x40] sm:$0xf]
        %v3002 = vld [vmem:[%s2989 + $0x48] sm:$0xf]
        %v3003 = vld [vmem:[%s2989 + $0x4c] sm:$0xf]
        %v3004 = vld [vmem:[%s2989 + $0x54] sm:$0xf]
        %v3005 = vld [vmem:[%s2989 + $0x58] sm:$0xf]
        %v3006 = vld [vmem:[%s2989 + $0x60] sm:$0xf]
        %v3007 = vld [vmem:[%s2989 + $0x64] sm:$0xf]
        %v3008 = vld [vmem:[%s2989 + $0x6c] sm:$0xf]
        %v3009 = vld [vmem:[%s2989 + $0x70] sm:$0xf]
        %v3010 = vld [vmem:[%s2989 + $0x78] sm:$0xf]
        %v3011 = vld [vmem:[%s2989 + $0x7c] sm:$0xf]
        %v3012 = vld [vmem:[%s2989 + $0x84] sm:$0xf]
        %v3013 = vld [vmem:[%s2989 + $0x88] sm:$0xf]
        %v3014 = vld [vmem:[%s2989 + $0x90] sm:$0xf]
        %v3015 = vld [vmem:[%s2989 + $0x94] sm:$0xf]
        %v3016 = vld [vmem:[%s2989 + $0x9c] sm:$0xf]
        %v3017 = vld [vmem:[%s2989 + $0xa0] sm:$0xf]
        %v3018 = vld [vmem:[%s2989 + $0xa8] sm:$0xf]
        %v3019 = vld [vmem:[%s2989 + $0xac] sm:$0xf]
        %v3020 = vld [vmem:[%s2989 + $0xb4] sm:$0xf]
        %v3021 = vld [vmem:[%s2989 + $0xb8] sm:$0xf]
        %s3022 = scalar_lea.vmem %s1, 384
        %v3023 = vld [vmem:[%s3022] sm:$0xf]
        %v3024 = vld [vmem:[%s3022 + $0x4] sm:$0xf]
        %v3025 = vld [vmem:[%s3022 + $0x8] sm:$0xf]
        %v3026 = vld [vmem:[%s3022 + $0xc] sm:$0xf]
        %v3027 = vld [vmem:[%s3022 + $0x10] sm:$0xf]
        %v3028 = vld [vmem:[%s3022 + $0x14] sm:$0xf]
        %v3029 = vld [vmem:[%s3022 + $0x18] sm:$0xf]
        %v3030 = vld [vmem:[%s3022 + $0x1c] sm:$0xf]
        %v3031 = vld [vmem:[%s3022 + $0x20] sm:$0xf]
        %v3032 = vld [vmem:[%s3022 + $0x24] sm:$0xf]
        %v3033 = vld [vmem:[%s3022 + $0x28] sm:$0xf]
        %v3034 = vld [vmem:[%s3022 + $0x2c] sm:$0xf]
        %v3035 = vld [vmem:[%s3022 + $0x30] sm:$0xf]
        %v3036 = vld [vmem:[%s3022 + $0x34] sm:$0xf]
        %v3037 = vld [vmem:[%s3022 + $0x38] sm:$0xf]
        %v3038 = vld [vmem:[%s3022 + $0x3c] sm:$0xf]
        %v3071 = vunpack.c.l.b16 %v2990
        %v3072 = vunpack.c.l.b16 %v2991
        %v3073 = vunpack.c.l.b16 %v2992
        %v3074 = vunpack.c.l.b16 %v2993
        %v3075 = vunpack.c.l.b16 %v2994
        %v3076 = vunpack.c.l.b16 %v2995
        %v3077 = vunpack.c.l.b16 %v2996
        %v3078 = vunpack.c.l.b16 %v2997
        %v3079 = vunpack.c.l.b16 %v2998
        %v3080 = vunpack.c.l.b16 %v2999
        %v3081 = vunpack.c.l.b16 %v3000
        %v3082 = vunpack.c.l.b16 %v3001
        %v3083 = vunpack.c.l.b16 %v3002
        %v3084 = vunpack.c.l.b16 %v3003
        %v3085 = vunpack.c.l.b16 %v3004
        %v3086 = vunpack.c.l.b16 %v3005
        %v3087 = vunpack.c.l.b16 %v3006
        %v3088 = vunpack.c.l.b16 %v3007
        %v3089 = vunpack.c.l.b16 %v3008
        %v3090 = vunpack.c.l.b16 %v3009
        %v3091 = vunpack.c.l.b16 %v3010
        %v3092 = vunpack.c.l.b16 %v3011
        %v3093 = vunpack.c.l.b16 %v3012
        %v3094 = vunpack.c.l.b16 %v3013
        %v3095 = vunpack.c.l.b16 %v3014
        %v3096 = vunpack.c.l.b16 %v3015
        %v3097 = vunpack.c.l.b16 %v3016
        %v3098 = vunpack.c.l.b16 %v3017
        %v3099 = vunpack.c.l.b16 %v3018
        %v3100 = vunpack.c.l.b16 %v3019
        %v3101 = vunpack.c.l.b16 %v3020
        %v3102 = vunpack.c.l.b16 %v3021
        %v3103 = vpack.c.b16 %v3072, %v3071
        %v3104 = vpack.c.b16 %v3074, %v3073
        %v3105 = vpack.c.b16 %v3076, %v3075
        %v3106 = vpack.c.b16 %v3078, %v3077
        %v3107 = vpack.c.b16 %v3080, %v3079
        %v3108 = vpack.c.b16 %v3082, %v3081
        %v3109 = vpack.c.b16 %v3084, %v3083
        %v3110 = vpack.c.b16 %v3086, %v3085
        %v3111 = vpack.c.b16 %v3088, %v3087
        %v3112 = vpack.c.b16 %v3090, %v3089
        %v3113 = vpack.c.b16 %v3092, %v3091
        %v3114 = vpack.c.b16 %v3094, %v3093
        %v3115 = vpack.c.b16 %v3096, %v3095
        %v3116 = vpack.c.b16 %v3098, %v3097
        %v3117 = vpack.c.b16 %v3100, %v3099
        %v3118 = vpack.c.b16 %v3102, %v3101
        %v3151 = vunpack.c.l.b16 %v3023
        %v3152 = vunpack.c.l.b16 %v3024
        %v3153 = vunpack.c.l.b16 %v3025
        %v3154 = vunpack.c.l.b16 %v3026
        %v3155 = vunpack.c.l.b16 %v3027
        %v3156 = vunpack.c.l.b16 %v3028
        %v3157 = vunpack.c.l.b16 %v3029
        %v3158 = vunpack.c.l.b16 %v3030
        %v3159 = vunpack.c.l.b16 %v3031
        %v3160 = vunpack.c.l.b16 %v3032
        %v3161 = vunpack.c.l.b16 %v3033
        %v3162 = vunpack.c.l.b16 %v3034
        %v3163 = vunpack.c.l.b16 %v3035
        %v3164 = vunpack.c.l.b16 %v3036
        %v3165 = vunpack.c.l.b16 %v3037
        %v3166 = vunpack.c.l.b16 %v3038
        %v3167 = vpack.c.b16 %v3152, %v3151
        %v3168 = vpack.c.b16 %v3154, %v3153
        %v3169 = vpack.c.b16 %v3156, %v3155
        %v3170 = vpack.c.b16 %v3158, %v3157
        %v3171 = vpack.c.b16 %v3160, %v3159
        %v3172 = vpack.c.b16 %v3162, %v3161
        %v3173 = vpack.c.b16 %v3164, %v3163
        %v3174 = vpack.c.b16 %v3166, %v3165
        %3183 = vmatpush.bf16.msra.mxu0 %v3174
        %3184 = vmatpush.bf16.msra.mxu0 %v3173
        %3185 = vmatpush.bf16.msra.mxu0 %v3172
        %3186 = vmatpush.bf16.msra.mxu0 %v3171
        %3187 = vmatpush.bf16.msra.mxu0 %v3170
        %3188 = vmatpush.bf16.msra.mxu0 %v3169
        %3189 = vmatpush.bf16.msra.mxu0 %v3168
        %3190 = vmatpush.bf16.msra.mxu0 %v3167
        %3191 = vmatmul.bf16.gmra.mxu0 %v3103
        %v3192 = vpop.f32.mrf.mxu0
        %v3193 = vadd.f32 0.0, %v3192
        %v3194 = vpop.f32.mrf.mxu0
        %v3195 = vadd.f32 0.0, %v3194
        %3196 = vmatmul.bf16.gmra.mxu0 %v3104
        %v3197 = vpop.f32.mrf.mxu0
        %v3198 = vadd.f32 0.0, %v3197
        %v3199 = vpop.f32.mrf.mxu0
        %v3200 = vadd.f32 0.0, %v3199
        %3201 = vmatmul.bf16.gmra.mxu0 %v3105
        %v3202 = vpop.f32.mrf.mxu0
        %v3203 = vadd.f32 0.0, %v3202
        %v3204 = vpop.f32.mrf.mxu0
        %v3205 = vadd.f32 0.0, %v3204
        %3206 = vmatmul.bf16.gmra.mxu0 %v3106
        %v3207 = vpop.f32.mrf.mxu0
        %v3208 = vadd.f32 0.0, %v3207
        %v3209 = vpop.f32.mrf.mxu0
        %v3210 = vadd.f32 0.0, %v3209
        %3211 = vmatmul.bf16.gmra.mxu0 %v3107
        %v3212 = vpop.f32.mrf.mxu0
        %v3213 = vadd.f32 0.0, %v3212
        %v3214 = vpop.f32.mrf.mxu0
        %v3215 = vadd.f32 0.0, %v3214
        %3216 = vmatmul.bf16.gmra.mxu0 %v3108
        %v3217 = vpop.f32.mrf.mxu0
        %v3218 = vadd.f32 0.0, %v3217
        %v3219 = vpop.f32.mrf.mxu0
        %v3220 = vadd.f32 0.0, %v3219
        %3221 = vmatmul.bf16.gmra.mxu0 %v3109
        %v3222 = vpop.f32.mrf.mxu0
        %v3223 = vadd.f32 0.0, %v3222
        %v3224 = vpop.f32.mrf.mxu0
        %v3225 = vadd.f32 0.0, %v3224
        %3226 = vmatmul.bf16.gmra.mxu0 %v3110
        %v3227 = vpop.f32.mrf.mxu0
        %v3228 = vadd.f32 0.0, %v3227
        %v3229 = vpop.f32.mrf.mxu0
        %v3230 = vadd.f32 0.0, %v3229
        %3231 = vmatmul.bf16.gmra.mxu0 %v3111
        %v3232 = vpop.f32.mrf.mxu0
        %v3233 = vadd.f32 0.0, %v3232
        %v3234 = vpop.f32.mrf.mxu0
        %v3235 = vadd.f32 0.0, %v3234
        %3236 = vmatmul.bf16.gmra.mxu0 %v3112
        %v3237 = vpop.f32.mrf.mxu0
        %v3238 = vadd.f32 0.0, %v3237
        %v3239 = vpop.f32.mrf.mxu0
        %v3240 = vadd.f32 0.0, %v3239
        %3241 = vmatmul.bf16.gmra.mxu0 %v3113
        %v3242 = vpop.f32.mrf.mxu0
        %v3243 = vadd.f32 0.0, %v3242
        %v3244 = vpop.f32.mrf.mxu0
        %v3245 = vadd.f32 0.0, %v3244
        %3246 = vmatmul.bf16.gmra.mxu0 %v3114
        %v3247 = vpop.f32.mrf.mxu0
        %v3248 = vadd.f32 0.0, %v3247
        %v3249 = vpop.f32.mrf.mxu0
        %v3250 = vadd.f32 0.0, %v3249
        %3251 = vmatmul.bf16.gmra.mxu0 %v3115
        %v3252 = vpop.f32.mrf.mxu0
        %v3253 = vadd.f32 0.0, %v3252
        %v3254 = vpop.f32.mrf.mxu0
        %v3255 = vadd.f32 0.0, %v3254
        %3256 = vmatmul.bf16.gmra.mxu0 %v3116
        %v3257 = vpop.f32.mrf.mxu0
        %v3258 = vadd.f32 0.0, %v3257
        %v3259 = vpop.f32.mrf.mxu0
        %v3260 = vadd.f32 0.0, %v3259
        %3261 = vmatmul.bf16.gmra.mxu0 %v3117
        %v3262 = vpop.f32.mrf.mxu0
        %v3263 = vadd.f32 0.0, %v3262
        %v3264 = vpop.f32.mrf.mxu0
        %v3265 = vadd.f32 0.0, %v3264
        %3266 = vmatmul.bf16.gmra.mxu0 %v3118
        %v3267 = vpop.f32.mrf.mxu0
        %v3268 = vadd.f32 0.0, %v3267
        %v3269 = vpop.f32.mrf.mxu0
        %v3270 = vadd.f32 0.0, %v3269
        %3271 = vdwg.mxu0
        %v3272 = vadd.f32 %v2957, %v3193
        %v3273 = vadd.f32 %v2958, %v3195
        %v3274 = vadd.f32 %v2959, %v3198
        %v3275 = vadd.f32 %v2960, %v3200
        %v3276 = vadd.f32 %v2961, %v3203
        %v3277 = vadd.f32 %v2962, %v3205
        %v3278 = vadd.f32 %v2963, %v3208
        %v3279 = vadd.f32 %v2964, %v3210
        %v3280 = vadd.f32 %v2965, %v3213
        %v3281 = vadd.f32 %v2966, %v3215
        %v3282 = vadd.f32 %v2967, %v3218
        %v3283 = vadd.f32 %v2968, %v3220
        %v3284 = vadd.f32 %v2969, %v3223
        %v3285 = vadd.f32 %v2970, %v3225
        %v3286 = vadd.f32 %v2971, %v3228
        %v3287 = vadd.f32 %v2972, %v3230
        %v3288 = vadd.f32 %v2973, %v3233
        %v3289 = vadd.f32 %v2974, %v3235
        %v3290 = vadd.f32 %v2975, %v3238
        %v3291 = vadd.f32 %v2976, %v3240
        %v3292 = vadd.f32 %v2977, %v3243
        %v3293 = vadd.f32 %v2978, %v3245
        %v3294 = vadd.f32 %v2979, %v3248
        %v3295 = vadd.f32 %v2980, %v3250
        %v3296 = vadd.f32 %v2981, %v3253
        %v3297 = vadd.f32 %v2982, %v3255
        %v3298 = vadd.f32 %v2983, %v3258
        %v3299 = vadd.f32 %v2984, %v3260
        %v3300 = vadd.f32 %v2985, %v3263
        %v3301 = vadd.f32 %v2986, %v3265
        %v3302 = vadd.f32 %v2987, %v3268
        %v3303 = vadd.f32 %v2988, %v3270
        %v3304 = vld [vmem:[%s2989] sm:$0xf]
        %v3305 = vld [vmem:[%s2989 + $0x4] sm:$0xf]
        %v3306 = vld [vmem:[%s2989 + $0x8] sm:$0x1]
        %v3307 = vld [vmem:[%s2989 + $0xc] sm:$0xf]
        %v3308 = vld [vmem:[%s2989 + $0x10] sm:$0xf]
        %v3309 = vld [vmem:[%s2989 + $0x14] sm:$0x1]
        %v3310 = vld [vmem:[%s2989 + $0x18] sm:$0xf]
        %v3311 = vld [vmem:[%s2989 + $0x1c] sm:$0xf]
        %v3312 = vld [vmem:[%s2989 + $0x20] sm:$0x1]
        %v3313 = vld [vmem:[%s2989 + $0x24] sm:$0xf]
        %v3314 = vld [vmem:[%s2989 + $0x28] sm:$0xf]
        %v3315 = vld [vmem:[%s2989 + $0x2c] sm:$0x1]
        %v3316 = vld [vmem:[%s2989 + $0x30] sm:$0xf]
        %v3317 = vld [vmem:[%s2989 + $0x34] sm:$0xf]
        %v3318 = vld [vmem:[%s2989 + $0x38] sm:$0x1]
        %v3319 = vld [vmem:[%s2989 + $0x3c] sm:$0xf]
        %v3320 = vld [vmem:[%s2989 + $0x40] sm:$0xf]
        %v3321 = vld [vmem:[%s2989 + $0x44] sm:$0x1]
        %v3322 = vld [vmem:[%s2989 + $0x48] sm:$0xf]
        %v3323 = vld [vmem:[%s2989 + $0x4c] sm:$0xf]
        %v3324 = vld [vmem:[%s2989 + $0x50] sm:$0x1]
        %v3325 = vld [vmem:[%s2989 + $0x54] sm:$0xf]
        %v3326 = vld [vmem:[%s2989 + $0x58] sm:$0xf]
        %v3327 = vld [vmem:[%s2989 + $0x5c] sm:$0x1]
        %v3328 = vld [vmem:[%s2989 + $0x60] sm:$0xf]
        %v3329 = vld [vmem:[%s2989 + $0x64] sm:$0xf]
        %v3330 = vld [vmem:[%s2989 + $0x68] sm:$0x1]
        %v3331 = vld [vmem:[%s2989 + $0x6c] sm:$0xf]
        %v3332 = vld [vmem:[%s2989 + $0x70] sm:$0xf]
        %v3333 = vld [vmem:[%s2989 + $0x74] sm:$0x1]
        %v3334 = vld [vmem:[%s2989 + $0x78] sm:$0xf]
        %v3335 = vld [vmem:[%s2989 + $0x7c] sm:$0xf]
        %v3336 = vld [vmem:[%s2989 + $0x80] sm:$0x1]
        %v3337 = vld [vmem:[%s2989 + $0x84] sm:$0xf]
        %v3338 = vld [vmem:[%s2989 + $0x88] sm:$0xf]
        %v3339 = vld [vmem:[%s2989 + $0x8c] sm:$0x1]
        %v3340 = vld [vmem:[%s2989 + $0x90] sm:$0xf]
        %v3341 = vld [vmem:[%s2989 + $0x94] sm:$0xf]
        %v3342 = vld [vmem:[%s2989 + $0x98] sm:$0x1]
        %v3343 = vld [vmem:[%s2989 + $0x9c] sm:$0xf]
        %v3344 = vld [vmem:[%s2989 + $0xa0] sm:$0xf]
        %v3345 = vld [vmem:[%s2989 + $0xa4] sm:$0x1]
        %v3346 = vld [vmem:[%s2989 + $0xa8] sm:$0xf]
        %v3347 = vld [vmem:[%s2989 + $0xac] sm:$0xf]
        %v3348 = vld [vmem:[%s2989 + $0xb0] sm:$0x1]
        %v3349 = vld [vmem:[%s2989 + $0xb4] sm:$0xf]
        %v3350 = vld [vmem:[%s2989 + $0xb8] sm:$0xf]
        %v3351 = vld [vmem:[%s2989 + $0xbc] sm:$0x1]
        %v3353 = vshrl.u32 %v3304, 16
        %v3355 = vrot.slane %v3353, 4
        %v3356 = vshll.u32 %v3304, 16
        %v3358 = vrot.slane %v3356, 5
        %v3359 = vor.u32 %v3355, %v3358
        %v3360 = vrot.slane %v3359, 4
        %v3362 = vshll.u32 %v3305, 16
        %v3364 = vrot.slane %v3362, 5
        %v3365 = vsel %vm317, %v3360, %v3364
        %v3366 = vshrl.u32 %v3305, 16
        %v3368 = vrot.slane %v3366, 4
        %v3369 = vor.u32 %v3368, %v3364
        %v3370 = vrot.slane %v3369, 4
        %v3372 = vshll.u32 %v3306, 16
        %v3374 = vrot.slane %v3372, 5
        %v3375 = vsel %vm317, %v3370, %v3374
        %v3377 = vshrl.u32 %v3307, 16
        %v3379 = vrot.slane %v3377, 4
        %v3380 = vshll.u32 %v3307, 16
        %v3382 = vrot.slane %v3380, 5
        %v3383 = vor.u32 %v3379, %v3382
        %v3384 = vrot.slane %v3383, 4
        %v3386 = vshll.u32 %v3308, 16
        %v3388 = vrot.slane %v3386, 5
        %v3389 = vsel %vm317, %v3384, %v3388
        %v3390 = vshrl.u32 %v3308, 16
        %v3392 = vrot.slane %v3390, 4
        %v3393 = vor.u32 %v3392, %v3388
        %v3394 = vrot.slane %v3393, 4
        %v3396 = vshll.u32 %v3309, 16
        %v3398 = vrot.slane %v3396, 5
        %v3399 = vsel %vm317, %v3394, %v3398
        %v3401 = vshrl.u32 %v3310, 16
        %v3403 = vrot.slane %v3401, 4
        %v3404 = vshll.u32 %v3310, 16
        %v3406 = vrot.slane %v3404, 5
        %v3407 = vor.u32 %v3403, %v3406
        %v3408 = vrot.slane %v3407, 4
        %v3410 = vshll.u32 %v3311, 16
        %v3412 = vrot.slane %v3410, 5
        %v3413 = vsel %vm317, %v3408, %v3412
        %v3414 = vshrl.u32 %v3311, 16
        %v3416 = vrot.slane %v3414, 4
        %v3417 = vor.u32 %v3416, %v3412
        %v3418 = vrot.slane %v3417, 4
        %v3420 = vshll.u32 %v3312, 16
        %v3422 = vrot.slane %v3420, 5
        %v3423 = vsel %vm317, %v3418, %v3422
        %v3425 = vshrl.u32 %v3313, 16
        %v3427 = vrot.slane %v3425, 4
        %v3428 = vshll.u32 %v3313, 16
        %v3430 = vrot.slane %v3428, 5
        %v3431 = vor.u32 %v3427, %v3430
        %v3432 = vrot.slane %v3431, 4
        %v3434 = vshll.u32 %v3314, 16
        %v3436 = vrot.slane %v3434, 5
        %v3437 = vsel %vm317, %v3432, %v3436
        %v3438 = vshrl.u32 %v3314, 16
        %v3440 = vrot.slane %v3438, 4
        %v3441 = vor.u32 %v3440, %v3436
        %v3442 = vrot.slane %v3441, 4
        %v3444 = vshll.u32 %v3315, 16
        %v3446 = vrot.slane %v3444, 5
        %v3447 = vsel %vm317, %v3442, %v3446
        %v3449 = vshrl.u32 %v3316, 16
        %v3451 = vrot.slane %v3449, 4
        %v3452 = vshll.u32 %v3316, 16
        %v3454 = vrot.slane %v3452, 5
        %v3455 = vor.u32 %v3451, %v3454
        %v3456 = vrot.slane %v3455, 4
        %v3458 = vshll.u32 %v3317, 16
        %v3460 = vrot.slane %v3458, 5
        %v3461 = vsel %vm317, %v3456, %v3460
        %v3462 = vshrl.u32 %v3317, 16
        %v3464 = vrot.slane %v3462, 4
        %v3465 = vor.u32 %v3464, %v3460
        %v3466 = vrot.slane %v3465, 4
        %v3468 = vshll.u32 %v3318, 16
        %v3470 = vrot.slane %v3468, 5
        %v3471 = vsel %vm317, %v3466, %v3470
        %v3473 = vshrl.u32 %v3319, 16
        %v3475 = vrot.slane %v3473, 4
        %v3476 = vshll.u32 %v3319, 16
        %v3478 = vrot.slane %v3476, 5
        %v3479 = vor.u32 %v3475, %v3478
        %v3480 = vrot.slane %v3479, 4
        %v3482 = vshll.u32 %v3320, 16
        %v3484 = vrot.slane %v3482, 5
        %v3485 = vsel %vm317, %v3480, %v3484
        %v3486 = vshrl.u32 %v3320, 16
        %v3488 = vrot.slane %v3486, 4
        %v3489 = vor.u32 %v3488, %v3484
        %v3490 = vrot.slane %v3489, 4
        %v3492 = vshll.u32 %v3321, 16
        %v3494 = vrot.slane %v3492, 5
        %v3495 = vsel %vm317, %v3490, %v3494
        %v3497 = vshrl.u32 %v3322, 16
        %v3499 = vrot.slane %v3497, 4
        %v3500 = vshll.u32 %v3322, 16
        %v3502 = vrot.slane %v3500, 5
        %v3503 = vor.u32 %v3499, %v3502
        %v3504 = vrot.slane %v3503, 4
        %v3506 = vshll.u32 %v3323, 16
        %v3508 = vrot.slane %v3506, 5
        %v3509 = vsel %vm317, %v3504, %v3508
        %v3510 = vshrl.u32 %v3323, 16
        %v3512 = vrot.slane %v3510, 4
        %v3513 = vor.u32 %v3512, %v3508
        %v3514 = vrot.slane %v3513, 4
        %v3516 = vshll.u32 %v3324, 16
        %v3518 = vrot.slane %v3516, 5
        %v3519 = vsel %vm317, %v3514, %v3518
        %v3521 = vshrl.u32 %v3325, 16
        %v3523 = vrot.slane %v3521, 4
        %v3524 = vshll.u32 %v3325, 16
        %v3526 = vrot.slane %v3524, 5
        %v3527 = vor.u32 %v3523, %v3526
        %v3528 = vrot.slane %v3527, 4
        %v3530 = vshll.u32 %v3326, 16
        %v3532 = vrot.slane %v3530, 5
        %v3533 = vsel %vm317, %v3528, %v3532
        %v3534 = vshrl.u32 %v3326, 16
        %v3536 = vrot.slane %v3534, 4
        %v3537 = vor.u32 %v3536, %v3532
        %v3538 = vrot.slane %v3537, 4
        %v3540 = vshll.u32 %v3327, 16
        %v3542 = vrot.slane %v3540, 5
        %v3543 = vsel %vm317, %v3538, %v3542
        %v3545 = vshrl.u32 %v3328, 16
        %v3547 = vrot.slane %v3545, 4
        %v3548 = vshll.u32 %v3328, 16
        %v3550 = vrot.slane %v3548, 5
        %v3551 = vor.u32 %v3547, %v3550
        %v3552 = vrot.slane %v3551, 4
        %v3554 = vshll.u32 %v3329, 16
        %v3556 = vrot.slane %v3554, 5
        %v3557 = vsel %vm317, %v3552, %v3556
        %v3558 = vshrl.u32 %v3329, 16
        %v3560 = vrot.slane %v3558, 4
        %v3561 = vor.u32 %v3560, %v3556
        %v3562 = vrot.slane %v3561, 4
        %v3564 = vshll.u32 %v3330, 16
        %v3566 = vrot.slane %v3564, 5
        %v3567 = vsel %vm317, %v3562, %v3566
        %v3569 = vshrl.u32 %v3331, 16
        %v3571 = vrot.slane %v3569, 4
        %v3572 = vshll.u32 %v3331, 16
        %v3574 = vrot.slane %v3572, 5
        %v3575 = vor.u32 %v3571, %v3574
        %v3576 = vrot.slane %v3575, 4
        %v3578 = vshll.u32 %v3332, 16
        %v3580 = vrot.slane %v3578, 5
        %v3581 = vsel %vm317, %v3576, %v3580
        %v3582 = vshrl.u32 %v3332, 16
        %v3584 = vrot.slane %v3582, 4
        %v3585 = vor.u32 %v3584, %v3580
        %v3586 = vrot.slane %v3585, 4
        %v3588 = vshll.u32 %v3333, 16
        %v3590 = vrot.slane %v3588, 5
        %v3591 = vsel %vm317, %v3586, %v3590
        %v3593 = vshrl.u32 %v3334, 16
        %v3595 = vrot.slane %v3593, 4
        %v3596 = vshll.u32 %v3334, 16
        %v3598 = vrot.slane %v3596, 5
        %v3599 = vor.u32 %v3595, %v3598
        %v3600 = vrot.slane %v3599, 4
        %v3602 = vshll.u32 %v3335, 16
        %v3604 = vrot.slane %v3602, 5
        %v3605 = vsel %vm317, %v3600, %v3604
        %v3606 = vshrl.u32 %v3335, 16
        %v3608 = vrot.slane %v3606, 4
        %v3609 = vor.u32 %v3608, %v3604
        %v3610 = vrot.slane %v3609, 4
        %v3612 = vshll.u32 %v3336, 16
        %v3614 = vrot.slane %v3612, 5
        %v3615 = vsel %vm317, %v3610, %v3614
        %v3617 = vshrl.u32 %v3337, 16
        %v3619 = vrot.slane %v3617, 4
        %v3620 = vshll.u32 %v3337, 16
        %v3622 = vrot.slane %v3620, 5
        %v3623 = vor.u32 %v3619, %v3622
        %v3624 = vrot.slane %v3623, 4
        %v3626 = vshll.u32 %v3338, 16
        %v3628 = vrot.slane %v3626, 5
        %v3629 = vsel %vm317, %v3624, %v3628
        %v3630 = vshrl.u32 %v3338, 16
        %v3632 = vrot.slane %v3630, 4
        %v3633 = vor.u32 %v3632, %v3628
        %v3634 = vrot.slane %v3633, 4
        %v3636 = vshll.u32 %v3339, 16
        %v3638 = vrot.slane %v3636, 5
        %v3639 = vsel %vm317, %v3634, %v3638
        %v3641 = vshrl.u32 %v3340, 16
        %v3643 = vrot.slane %v3641, 4
        %v3644 = vshll.u32 %v3340, 16
        %v3646 = vrot.slane %v3644, 5
        %v3647 = vor.u32 %v3643, %v3646
        %v3648 = vrot.slane %v3647, 4
        %v3650 = vshll.u32 %v3341, 16
        %v3652 = vrot.slane %v3650, 5
        %v3653 = vsel %vm317, %v3648, %v3652
        %v3654 = vshrl.u32 %v3341, 16
        %v3656 = vrot.slane %v3654, 4
        %v3657 = vor.u32 %v3656, %v3652
        %v3658 = vrot.slane %v3657, 4
        %v3660 = vshll.u32 %v3342, 16
        %v3662 = vrot.slane %v3660, 5
        %v3663 = vsel %vm317, %v3658, %v3662
        %v3665 = vshrl.u32 %v3343, 16
        %v3667 = vrot.slane %v3665, 4
        %v3668 = vshll.u32 %v3343, 16
        %v3670 = vrot.slane %v3668, 5
        %v3671 = vor.u32 %v3667, %v3670
        %v3672 = vrot.slane %v3671, 4
        %v3674 = vshll.u32 %v3344, 16
        %v3676 = vrot.slane %v3674, 5
        %v3677 = vsel %vm317, %v3672, %v3676
        %v3678 = vshrl.u32 %v3344, 16
        %v3680 = vrot.slane %v3678, 4
        %v3681 = vor.u32 %v3680, %v3676
        %v3682 = vrot.slane %v3681, 4
        %v3684 = vshll.u32 %v3345, 16
        %v3686 = vrot.slane %v3684, 5
        %v3687 = vsel %vm317, %v3682, %v3686
        %v3689 = vshrl.u32 %v3346, 16
        %v3691 = vrot.slane %v3689, 4
        %v3692 = vshll.u32 %v3346, 16
        %v3694 = vrot.slane %v3692, 5
        %v3695 = vor.u32 %v3691, %v3694
        %v3696 = vrot.slane %v3695, 4
        %v3698 = vshll.u32 %v3347, 16
        %v3700 = vrot.slane %v3698, 5
        %v3701 = vsel %vm317, %v3696, %v3700
        %v3702 = vshrl.u32 %v3347, 16
        %v3704 = vrot.slane %v3702, 4
        %v3705 = vor.u32 %v3704, %v3700
        %v3706 = vrot.slane %v3705, 4
        %v3708 = vshll.u32 %v3348, 16
        %v3710 = vrot.slane %v3708, 5
        %v3711 = vsel %vm317, %v3706, %v3710
        %v3713 = vshrl.u32 %v3349, 16
        %v3715 = vrot.slane %v3713, 4
        %v3716 = vshll.u32 %v3349, 16
        %v3718 = vrot.slane %v3716, 5
        %v3719 = vor.u32 %v3715, %v3718
        %v3720 = vrot.slane %v3719, 4
        %v3722 = vshll.u32 %v3350, 16
        %v3724 = vrot.slane %v3722, 5
        %v3725 = vsel %vm317, %v3720, %v3724
        %v3726 = vshrl.u32 %v3350, 16
        %v3728 = vrot.slane %v3726, 4
        %v3729 = vor.u32 %v3728, %v3724
        %v3730 = vrot.slane %v3729, 4
        %v3732 = vshll.u32 %v3351, 16
        %v3734 = vrot.slane %v3732, 5
        %v3735 = vsel %vm317, %v3730, %v3734
        %s3736 = scalar_lea.vmem %s1, 448
        %v3737 = vld [vmem:[%s3736] sm:$0xf]
        %v3738 = vld [vmem:[%s3736 + $0x4] sm:$0xf]
        %v3739 = vld [vmem:[%s3736 + $0x8] sm:$0xf]
        %v3740 = vld [vmem:[%s3736 + $0xc] sm:$0xf]
        %v3741 = vld [vmem:[%s3736 + $0x10] sm:$0xf]
        %v3742 = vld [vmem:[%s3736 + $0x14] sm:$0xf]
        %v3743 = vld [vmem:[%s3736 + $0x18] sm:$0xf]
        %v3744 = vld [vmem:[%s3736 + $0x1c] sm:$0xf]
        %v3745 = vld [vmem:[%s3736 + $0x20] sm:$0xf]
        %v3746 = vld [vmem:[%s3736 + $0x24] sm:$0xf]
        %v3747 = vld [vmem:[%s3736 + $0x28] sm:$0xf]
        %v3748 = vld [vmem:[%s3736 + $0x2c] sm:$0xf]
        %v3749 = vld [vmem:[%s3736 + $0x30] sm:$0xf]
        %v3750 = vld [vmem:[%s3736 + $0x34] sm:$0xf]
        %v3751 = vld [vmem:[%s3736 + $0x38] sm:$0xf]
        %v3752 = vld [vmem:[%s3736 + $0x3c] sm:$0xf]
        %v3753 = vunpack.c.l.b16 %v3365
        %v3754 = vunpack.c.l.b16 %v3375
        %v3755 = vunpack.c.l.b16 %v3389
        %v3756 = vunpack.c.l.b16 %v3399
        %v3757 = vunpack.c.l.b16 %v3413
        %v3758 = vunpack.c.l.b16 %v3423
        %v3759 = vunpack.c.l.b16 %v3437
        %v3760 = vunpack.c.l.b16 %v3447
        %v3761 = vunpack.c.l.b16 %v3461
        %v3762 = vunpack.c.l.b16 %v3471
        %v3763 = vunpack.c.l.b16 %v3485
        %v3764 = vunpack.c.l.b16 %v3495
        %v3765 = vunpack.c.l.b16 %v3509
        %v3766 = vunpack.c.l.b16 %v3519
        %v3767 = vunpack.c.l.b16 %v3533
        %v3768 = vunpack.c.l.b16 %v3543
        %v3769 = vunpack.c.l.b16 %v3557
        %v3770 = vunpack.c.l.b16 %v3567
        %v3771 = vunpack.c.l.b16 %v3581
        %v3772 = vunpack.c.l.b16 %v3591
        %v3773 = vunpack.c.l.b16 %v3605
        %v3774 = vunpack.c.l.b16 %v3615
        %v3775 = vunpack.c.l.b16 %v3629
        %v3776 = vunpack.c.l.b16 %v3639
        %v3777 = vunpack.c.l.b16 %v3653
        %v3778 = vunpack.c.l.b16 %v3663
        %v3779 = vunpack.c.l.b16 %v3677
        %v3780 = vunpack.c.l.b16 %v3687
        %v3781 = vunpack.c.l.b16 %v3701
        %v3782 = vunpack.c.l.b16 %v3711
        %v3783 = vunpack.c.l.b16 %v3725
        %v3784 = vunpack.c.l.b16 %v3735
        %v3785 = vpack.c.b16 %v3754, %v3753
        %v3786 = vpack.c.b16 %v3756, %v3755
        %v3787 = vpack.c.b16 %v3758, %v3757
        %v3788 = vpack.c.b16 %v3760, %v3759
        %v3789 = vpack.c.b16 %v3762, %v3761
        %v3790 = vpack.c.b16 %v3764, %v3763
        %v3791 = vpack.c.b16 %v3766, %v3765
        %v3792 = vpack.c.b16 %v3768, %v3767
        %v3793 = vpack.c.b16 %v3770, %v3769
        %v3794 = vpack.c.b16 %v3772, %v3771
        %v3795 = vpack.c.b16 %v3774, %v3773
        %v3796 = vpack.c.b16 %v3776, %v3775
        %v3797 = vpack.c.b16 %v3778, %v3777
        %v3798 = vpack.c.b16 %v3780, %v3779
        %v3799 = vpack.c.b16 %v3782, %v3781
        %v3800 = vpack.c.b16 %v3784, %v3783
        %v3833 = vunpack.c.l.b16 %v3737
        %v3834 = vunpack.c.l.b16 %v3738
        %v3835 = vunpack.c.l.b16 %v3739
        %v3836 = vunpack.c.l.b16 %v3740
        %v3837 = vunpack.c.l.b16 %v3741
        %v3838 = vunpack.c.l.b16 %v3742
        %v3839 = vunpack.c.l.b16 %v3743
        %v3840 = vunpack.c.l.b16 %v3744
        %v3841 = vunpack.c.l.b16 %v3745
        %v3842 = vunpack.c.l.b16 %v3746
        %v3843 = vunpack.c.l.b16 %v3747
        %v3844 = vunpack.c.l.b16 %v3748
        %v3845 = vunpack.c.l.b16 %v3749
        %v3846 = vunpack.c.l.b16 %v3750
        %v3847 = vunpack.c.l.b16 %v3751
        %v3848 = vunpack.c.l.b16 %v3752
        %v3849 = vpack.c.b16 %v3834, %v3833
        %v3850 = vpack.c.b16 %v3836, %v3835
        %v3851 = vpack.c.b16 %v3838, %v3837
        %v3852 = vpack.c.b16 %v3840, %v3839
        %v3853 = vpack.c.b16 %v3842, %v3841
        %v3854 = vpack.c.b16 %v3844, %v3843
        %v3855 = vpack.c.b16 %v3846, %v3845
        %v3856 = vpack.c.b16 %v3848, %v3847
        %3865 = vmatpush.bf16.msra.mxu0 %v3856
        %3866 = vmatpush.bf16.msra.mxu0 %v3855
        %3867 = vmatpush.bf16.msra.mxu0 %v3854
        %3868 = vmatpush.bf16.msra.mxu0 %v3853
        %3869 = vmatpush.bf16.msra.mxu0 %v3852
        %3870 = vmatpush.bf16.msra.mxu0 %v3851
        %3871 = vmatpush.bf16.msra.mxu0 %v3850
        %3872 = vmatpush.bf16.msra.mxu0 %v3849
        %3873 = vmatmul.bf16.gmra.mxu0 %v3785
        %v3874 = vpop.f32.mrf.mxu0
        %v3875 = vadd.f32 0.0, %v3874
        %v3876 = vpop.f32.mrf.mxu0
        %v3877 = vadd.f32 0.0, %v3876
        %3878 = vmatmul.bf16.gmra.mxu0 %v3786
        %v3879 = vpop.f32.mrf.mxu0
        %v3880 = vadd.f32 0.0, %v3879
        %v3881 = vpop.f32.mrf.mxu0
        %v3882 = vadd.f32 0.0, %v3881
        %3883 = vmatmul.bf16.gmra.mxu0 %v3787
        %v3884 = vpop.f32.mrf.mxu0
        %v3885 = vadd.f32 0.0, %v3884
        %v3886 = vpop.f32.mrf.mxu0
        %v3887 = vadd.f32 0.0, %v3886
        %3888 = vmatmul.bf16.gmra.mxu0 %v3788
        %v3889 = vpop.f32.mrf.mxu0
        %v3890 = vadd.f32 0.0, %v3889
        %v3891 = vpop.f32.mrf.mxu0
        %v3892 = vadd.f32 0.0, %v3891
        %3893 = vmatmul.bf16.gmra.mxu0 %v3789
        %v3894 = vpop.f32.mrf.mxu0
        %v3895 = vadd.f32 0.0, %v3894
        %v3896 = vpop.f32.mrf.mxu0
        %v3897 = vadd.f32 0.0, %v3896
        %3898 = vmatmul.bf16.gmra.mxu0 %v3790
        %v3899 = vpop.f32.mrf.mxu0
        %v3900 = vadd.f32 0.0, %v3899
        %v3901 = vpop.f32.mrf.mxu0
        %v3902 = vadd.f32 0.0, %v3901
        %3903 = vmatmul.bf16.gmra.mxu0 %v3791
        %v3904 = vpop.f32.mrf.mxu0
        %v3905 = vadd.f32 0.0, %v3904
        %v3906 = vpop.f32.mrf.mxu0
        %v3907 = vadd.f32 0.0, %v3906
        %3908 = vmatmul.bf16.gmra.mxu0 %v3792
        %v3909 = vpop.f32.mrf.mxu0
        %v3910 = vadd.f32 0.0, %v3909
        %v3911 = vpop.f32.mrf.mxu0
        %v3912 = vadd.f32 0.0, %v3911
        %3913 = vmatmul.bf16.gmra.mxu0 %v3793
        %v3914 = vpop.f32.mrf.mxu0
        %v3915 = vadd.f32 0.0, %v3914
        %v3916 = vpop.f32.mrf.mxu0
        %v3917 = vadd.f32 0.0, %v3916
        %3918 = vmatmul.bf16.gmra.mxu0 %v3794
        %v3919 = vpop.f32.mrf.mxu0
        %v3920 = vadd.f32 0.0, %v3919
        %v3921 = vpop.f32.mrf.mxu0
        %v3922 = vadd.f32 0.0, %v3921
        %3923 = vmatmul.bf16.gmra.mxu0 %v3795
        %v3924 = vpop.f32.mrf.mxu0
        %v3925 = vadd.f32 0.0, %v3924
        %v3926 = vpop.f32.mrf.mxu0
        %v3927 = vadd.f32 0.0, %v3926
        %3928 = vmatmul.bf16.gmra.mxu0 %v3796
        %v3929 = vpop.f32.mrf.mxu0
        %v3930 = vadd.f32 0.0, %v3929
        %v3931 = vpop.f32.mrf.mxu0
        %v3932 = vadd.f32 0.0, %v3931
        %3933 = vmatmul.bf16.gmra.mxu0 %v3797
        %v3934 = vpop.f32.mrf.mxu0
        %v3935 = vadd.f32 0.0, %v3934
        %v3936 = vpop.f32.mrf.mxu0
        %v3937 = vadd.f32 0.0, %v3936
        %3938 = vmatmul.bf16.gmra.mxu0 %v3798
        %v3939 = vpop.f32.mrf.mxu0
        %v3940 = vadd.f32 0.0, %v3939
        %v3941 = vpop.f32.mrf.mxu0
        %v3942 = vadd.f32 0.0, %v3941
        %3943 = vmatmul.bf16.gmra.mxu0 %v3799
        %v3944 = vpop.f32.mrf.mxu0
        %v3945 = vadd.f32 0.0, %v3944
        %v3946 = vpop.f32.mrf.mxu0
        %v3947 = vadd.f32 0.0, %v3946
        %3948 = vmatmul.bf16.gmra.mxu0 %v3800
        %v3949 = vpop.f32.mrf.mxu0
        %v3950 = vadd.f32 0.0, %v3949
        %v3951 = vpop.f32.mrf.mxu0
        %v3952 = vadd.f32 0.0, %v3951
        %3953 = vdwg.mxu0
        %v3954 = vadd.f32 %v3272, %v3875
        %v3955 = vadd.f32 %v3273, %v3877
        %v3956 = vadd.f32 %v3274, %v3880
        %v3957 = vadd.f32 %v3275, %v3882
        %v3958 = vadd.f32 %v3276, %v3885
        %v3959 = vadd.f32 %v3277, %v3887
        %v3960 = vadd.f32 %v3278, %v3890
        %v3961 = vadd.f32 %v3279, %v3892
        %v3962 = vadd.f32 %v3280, %v3895
        %v3963 = vadd.f32 %v3281, %v3897
        %v3964 = vadd.f32 %v3282, %v3900
        %v3965 = vadd.f32 %v3283, %v3902
        %v3966 = vadd.f32 %v3284, %v3905
        %v3967 = vadd.f32 %v3285, %v3907
        %v3968 = vadd.f32 %v3286, %v3910
        %v3969 = vadd.f32 %v3287, %v3912
        %v3970 = vadd.f32 %v3288, %v3915
        %v3971 = vadd.f32 %v3289, %v3917
        %v3972 = vadd.f32 %v3290, %v3920
        %v3973 = vadd.f32 %v3291, %v3922
        %v3974 = vadd.f32 %v3292, %v3925
        %v3975 = vadd.f32 %v3293, %v3927
        %v3976 = vadd.f32 %v3294, %v3930
        %v3977 = vadd.f32 %v3295, %v3932
        %v3978 = vadd.f32 %v3296, %v3935
        %v3979 = vadd.f32 %v3297, %v3937
        %v3980 = vadd.f32 %v3298, %v3940
        %v3981 = vadd.f32 %v3299, %v3942
        %v3982 = vadd.f32 %v3300, %v3945
        %v3983 = vadd.f32 %v3301, %v3947
        %v3984 = vadd.f32 %v3302, %v3950
        %v3985 = vadd.f32 %v3303, %v3952
        %v3986 = vld [vmem:[%s2989] sm:$0xe]
        %v3987 = vld [vmem:[%s2989 + $0xc] sm:$0xe]
        %v3988 = vld [vmem:[%s2989 + $0x18] sm:$0xe]
        %v3989 = vld [vmem:[%s2989 + $0x24] sm:$0xe]
        %v3990 = vld [vmem:[%s2989 + $0x30] sm:$0xe]
        %v3991 = vld [vmem:[%s2989 + $0x3c] sm:$0xe]
        %v3992 = vld [vmem:[%s2989 + $0x48] sm:$0xe]
        %v3993 = vld [vmem:[%s2989 + $0x54] sm:$0xe]
        %v3994 = vld [vmem:[%s2989 + $0x60] sm:$0xe]
        %v3995 = vld [vmem:[%s2989 + $0x6c] sm:$0xe]
        %v3996 = vld [vmem:[%s2989 + $0x78] sm:$0xe]
        %v3997 = vld [vmem:[%s2989 + $0x84] sm:$0xe]
        %v3998 = vld [vmem:[%s2989 + $0x90] sm:$0xe]
        %v3999 = vld [vmem:[%s2989 + $0x9c] sm:$0xe]
        %v4000 = vld [vmem:[%s2989 + $0xa8] sm:$0xe]
        %v4001 = vld [vmem:[%s2989 + $0xb4] sm:$0xe]
        %v4050 = vrot.slane %v3986, 5
        %v4051 = vrot.slane %v4050, 4
        %v4052 = vrot.slane %v3305, 5
        %v4053 = vsel %vm1203, %v4051, %v4052
        %v4054 = vrot.slane %v4052, 4
        %v4055 = vrot.slane %v3306, 5
        %v4056 = vsel %vm1203, %v4054, %v4055
        %v4057 = vrot.slane %v3987, 5
        %v4058 = vrot.slane %v4057, 4
        %v4059 = vrot.slane %v3308, 5
        %v4060 = vsel %vm1203, %v4058, %v4059
        %v4061 = vrot.slane %v4059, 4
        %v4062 = vrot.slane %v3309, 5
        %v4063 = vsel %vm1203, %v4061, %v4062
        %v4064 = vrot.slane %v3988, 5
        %v4065 = vrot.slane %v4064, 4
        %v4066 = vrot.slane %v3311, 5
        %v4067 = vsel %vm1203, %v4065, %v4066
        %v4068 = vrot.slane %v4066, 4
        %v4069 = vrot.slane %v3312, 5
        %v4070 = vsel %vm1203, %v4068, %v4069
        %v4071 = vrot.slane %v3989, 5
        %v4072 = vrot.slane %v4071, 4
        %v4073 = vrot.slane %v3314, 5
        %v4074 = vsel %vm1203, %v4072, %v4073
        %v4075 = vrot.slane %v4073, 4
        %v4076 = vrot.slane %v3315, 5
        %v4077 = vsel %vm1203, %v4075, %v4076
        %v4078 = vrot.slane %v3990, 5
        %v4079 = vrot.slane %v4078, 4
        %v4080 = vrot.slane %v3317, 5
        %v4081 = vsel %vm1203, %v4079, %v4080
        %v4082 = vrot.slane %v4080, 4
        %v4083 = vrot.slane %v3318, 5
        %v4084 = vsel %vm1203, %v4082, %v4083
        %v4085 = vrot.slane %v3991, 5
        %v4086 = vrot.slane %v4085, 4
        %v4087 = vrot.slane %v3320, 5
        %v4088 = vsel %vm1203, %v4086, %v4087
        %v4089 = vrot.slane %v4087, 4
        %v4090 = vrot.slane %v3321, 5
        %v4091 = vsel %vm1203, %v4089, %v4090
        %v4092 = vrot.slane %v3992, 5
        %v4093 = vrot.slane %v4092, 4
        %v4094 = vrot.slane %v3323, 5
        %v4095 = vsel %vm1203, %v4093, %v4094
        %v4096 = vrot.slane %v4094, 4
        %v4097 = vrot.slane %v3324, 5
        %v4098 = vsel %vm1203, %v4096, %v4097
        %v4099 = vrot.slane %v3993, 5
        %v4100 = vrot.slane %v4099, 4
        %v4101 = vrot.slane %v3326, 5
        %v4102 = vsel %vm1203, %v4100, %v4101
        %v4103 = vrot.slane %v4101, 4
        %v4104 = vrot.slane %v3327, 5
        %v4105 = vsel %vm1203, %v4103, %v4104
        %v4106 = vrot.slane %v3994, 5
        %v4107 = vrot.slane %v4106, 4
        %v4108 = vrot.slane %v3329, 5
        %v4109 = vsel %vm1203, %v4107, %v4108
        %v4110 = vrot.slane %v4108, 4
        %v4111 = vrot.slane %v3330, 5
        %v4112 = vsel %vm1203, %v4110, %v4111
        %v4113 = vrot.slane %v3995, 5
        %v4114 = vrot.slane %v4113, 4
        %v4115 = vrot.slane %v3332, 5
        %v4116 = vsel %vm1203, %v4114, %v4115
        %v4117 = vrot.slane %v4115, 4
        %v4118 = vrot.slane %v3333, 5
        %v4119 = vsel %vm1203, %v4117, %v4118
        %v4120 = vrot.slane %v3996, 5
        %v4121 = vrot.slane %v4120, 4
        %v4122 = vrot.slane %v3335, 5
        %v4123 = vsel %vm1203, %v4121, %v4122
        %v4124 = vrot.slane %v4122, 4
        %v4125 = vrot.slane %v3336, 5
        %v4126 = vsel %vm1203, %v4124, %v4125
        %v4127 = vrot.slane %v3997, 5
        %v4128 = vrot.slane %v4127, 4
        %v4129 = vrot.slane %v3338, 5
        %v4130 = vsel %vm1203, %v4128, %v4129
        %v4131 = vrot.slane %v4129, 4
        %v4132 = vrot.slane %v3339, 5
        %v4133 = vsel %vm1203, %v4131, %v4132
        %v4134 = vrot.slane %v3998, 5
        %v4135 = vrot.slane %v4134, 4
        %v4136 = vrot.slane %v3341, 5
        %v4137 = vsel %vm1203, %v4135, %v4136
        %v4138 = vrot.slane %v4136, 4
        %v4139 = vrot.slane %v3342, 5
        %v4140 = vsel %vm1203, %v4138, %v4139
        %v4141 = vrot.slane %v3999, 5
        %v4142 = vrot.slane %v4141, 4
        %v4143 = vrot.slane %v3344, 5
        %v4144 = vsel %vm1203, %v4142, %v4143
        %v4145 = vrot.slane %v4143, 4
        %v4146 = vrot.slane %v3345, 5
        %v4147 = vsel %vm1203, %v4145, %v4146
        %v4148 = vrot.slane %v4000, 5
        %v4149 = vrot.slane %v4148, 4
        %v4150 = vrot.slane %v3347, 5
        %v4151 = vsel %vm1203, %v4149, %v4150
        %v4152 = vrot.slane %v4150, 4
        %v4153 = vrot.slane %v3348, 5
        %v4154 = vsel %vm1203, %v4152, %v4153
        %v4155 = vrot.slane %v4001, 5
        %v4156 = vrot.slane %v4155, 4
        %v4157 = vrot.slane %v3350, 5
        %v4158 = vsel %vm1203, %v4156, %v4157
        %v4159 = vrot.slane %v4157, 4
        %v4160 = vrot.slane %v3351, 5
        %v4161 = vsel %vm1203, %v4159, %v4160
        %s4162 = scalar_lea.vmem %s1, 512
        %v4163 = vld [vmem:[%s4162] sm:$0xf]
        %v4164 = vld [vmem:[%s4162 + $0x4] sm:$0xf]
        %v4165 = vld [vmem:[%s4162 + $0x8] sm:$0xf]
        %v4166 = vld [vmem:[%s4162 + $0xc] sm:$0xf]
        %v4167 = vld [vmem:[%s4162 + $0x10] sm:$0xf]
        %v4168 = vld [vmem:[%s4162 + $0x14] sm:$0xf]
        %v4169 = vld [vmem:[%s4162 + $0x18] sm:$0xf]
        %v4170 = vld [vmem:[%s4162 + $0x1c] sm:$0xf]
        %v4171 = vld [vmem:[%s4162 + $0x20] sm:$0xf]
        %v4172 = vld [vmem:[%s4162 + $0x24] sm:$0xf]
        %v4173 = vld [vmem:[%s4162 + $0x28] sm:$0xf]
        %v4174 = vld [vmem:[%s4162 + $0x2c] sm:$0xf]
        %v4175 = vld [vmem:[%s4162 + $0x30] sm:$0xf]
        %v4176 = vld [vmem:[%s4162 + $0x34] sm:$0xf]
        %v4177 = vld [vmem:[%s4162 + $0x38] sm:$0xf]
        %v4178 = vld [vmem:[%s4162 + $0x3c] sm:$0xf]
        %v4179 = vunpack.c.l.b16 %v4053
        %v4180 = vunpack.c.l.b16 %v4056
        %v4181 = vunpack.c.l.b16 %v4060
        %v4182 = vunpack.c.l.b16 %v4063
        %v4183 = vunpack.c.l.b16 %v4067
        %v4184 = vunpack.c.l.b16 %v4070
        %v4185 = vunpack.c.l.b16 %v4074
        %v4186 = vunpack.c.l.b16 %v4077
        %v4187 = vunpack.c.l.b16 %v4081
        %v4188 = vunpack.c.l.b16 %v4084
        %v4189 = vunpack.c.l.b16 %v4088
        %v4190 = vunpack.c.l.b16 %v4091
        %v4191 = vunpack.c.l.b16 %v4095
        %v4192 = vunpack.c.l.b16 %v4098
        %v4193 = vunpack.c.l.b16 %v4102
        %v4194 = vunpack.c.l.b16 %v4105
        %v4195 = vunpack.c.l.b16 %v4109
        %v4196 = vunpack.c.l.b16 %v4112
        %v4197 = vunpack.c.l.b16 %v4116
        %v4198 = vunpack.c.l.b16 %v4119
        %v4199 = vunpack.c.l.b16 %v4123
        %v4200 = vunpack.c.l.b16 %v4126
        %v4201 = vunpack.c.l.b16 %v4130
        %v4202 = vunpack.c.l.b16 %v4133
        %v4203 = vunpack.c.l.b16 %v4137
        %v4204 = vunpack.c.l.b16 %v4140
        %v4205 = vunpack.c.l.b16 %v4144
        %v4206 = vunpack.c.l.b16 %v4147
        %v4207 = vunpack.c.l.b16 %v4151
        %v4208 = vunpack.c.l.b16 %v4154
        %v4209 = vunpack.c.l.b16 %v4158
        %v4210 = vunpack.c.l.b16 %v4161
        %v4211 = vpack.c.b16 %v4180, %v4179
        %v4212 = vpack.c.b16 %v4182, %v4181
        %v4213 = vpack.c.b16 %v4184, %v4183
        %v4214 = vpack.c.b16 %v4186, %v4185
        %v4215 = vpack.c.b16 %v4188, %v4187
        %v4216 = vpack.c.b16 %v4190, %v4189
        %v4217 = vpack.c.b16 %v4192, %v4191
        %v4218 = vpack.c.b16 %v4194, %v4193
        %v4219 = vpack.c.b16 %v4196, %v4195
        %v4220 = vpack.c.b16 %v4198, %v4197
        %v4221 = vpack.c.b16 %v4200, %v4199
        %v4222 = vpack.c.b16 %v4202, %v4201
        %v4223 = vpack.c.b16 %v4204, %v4203
        %v4224 = vpack.c.b16 %v4206, %v4205
        %v4225 = vpack.c.b16 %v4208, %v4207
        %v4226 = vpack.c.b16 %v4210, %v4209
        %v4259 = vunpack.c.l.b16 %v4163
        %v4260 = vunpack.c.l.b16 %v4164
        %v4261 = vunpack.c.l.b16 %v4165
        %v4262 = vunpack.c.l.b16 %v4166
        %v4263 = vunpack.c.l.b16 %v4167
        %v4264 = vunpack.c.l.b16 %v4168
        %v4265 = vunpack.c.l.b16 %v4169
        %v4266 = vunpack.c.l.b16 %v4170
        %v4267 = vunpack.c.l.b16 %v4171
        %v4268 = vunpack.c.l.b16 %v4172
        %v4269 = vunpack.c.l.b16 %v4173
        %v4270 = vunpack.c.l.b16 %v4174
        %v4271 = vunpack.c.l.b16 %v4175
        %v4272 = vunpack.c.l.b16 %v4176
        %v4273 = vunpack.c.l.b16 %v4177
        %v4274 = vunpack.c.l.b16 %v4178
        %v4275 = vpack.c.b16 %v4260, %v4259
        %v4276 = vpack.c.b16 %v4262, %v4261
        %v4277 = vpack.c.b16 %v4264, %v4263
        %v4278 = vpack.c.b16 %v4266, %v4265
        %v4279 = vpack.c.b16 %v4268, %v4267
        %v4280 = vpack.c.b16 %v4270, %v4269
        %v4281 = vpack.c.b16 %v4272, %v4271
        %v4282 = vpack.c.b16 %v4274, %v4273
        %4291 = vmatpush.bf16.msra.mxu0 %v4282
        %4292 = vmatpush.bf16.msra.mxu0 %v4281
        %4293 = vmatpush.bf16.msra.mxu0 %v4280
        %4294 = vmatpush.bf16.msra.mxu0 %v4279
        %4295 = vmatpush.bf16.msra.mxu0 %v4278
        %4296 = vmatpush.bf16.msra.mxu0 %v4277
        %4297 = vmatpush.bf16.msra.mxu0 %v4276
        %4298 = vmatpush.bf16.msra.mxu0 %v4275
        %4299 = vmatmul.bf16.gmra.mxu0 %v4211
        %v4300 = vpop.f32.mrf.mxu0
        %v4301 = vadd.f32 0.0, %v4300
        %v4302 = vpop.f32.mrf.mxu0
        %v4303 = vadd.f32 0.0, %v4302
        %4304 = vmatmul.bf16.gmra.mxu0 %v4212
        %v4305 = vpop.f32.mrf.mxu0
        %v4306 = vadd.f32 0.0, %v4305
        %v4307 = vpop.f32.mrf.mxu0
        %v4308 = vadd.f32 0.0, %v4307
        %4309 = vmatmul.bf16.gmra.mxu0 %v4213
        %v4310 = vpop.f32.mrf.mxu0
        %v4311 = vadd.f32 0.0, %v4310
        %v4312 = vpop.f32.mrf.mxu0
        %v4313 = vadd.f32 0.0, %v4312
        %4314 = vmatmul.bf16.gmra.mxu0 %v4214
        %v4315 = vpop.f32.mrf.mxu0
        %v4316 = vadd.f32 0.0, %v4315
        %v4317 = vpop.f32.mrf.mxu0
        %v4318 = vadd.f32 0.0, %v4317
        %4319 = vmatmul.bf16.gmra.mxu0 %v4215
        %v4320 = vpop.f32.mrf.mxu0
        %v4321 = vadd.f32 0.0, %v4320
        %v4322 = vpop.f32.mrf.mxu0
        %v4323 = vadd.f32 0.0, %v4322
        %4324 = vmatmul.bf16.gmra.mxu0 %v4216
        %v4325 = vpop.f32.mrf.mxu0
        %v4326 = vadd.f32 0.0, %v4325
        %v4327 = vpop.f32.mrf.mxu0
        %v4328 = vadd.f32 0.0, %v4327
        %4329 = vmatmul.bf16.gmra.mxu0 %v4217
        %v4330 = vpop.f32.mrf.mxu0
        %v4331 = vadd.f32 0.0, %v4330
        %v4332 = vpop.f32.mrf.mxu0
        %v4333 = vadd.f32 0.0, %v4332
        %4334 = vmatmul.bf16.gmra.mxu0 %v4218
        %v4335 = vpop.f32.mrf.mxu0
        %v4336 = vadd.f32 0.0, %v4335
        %v4337 = vpop.f32.mrf.mxu0
        %v4338 = vadd.f32 0.0, %v4337
        %4339 = vmatmul.bf16.gmra.mxu0 %v4219
        %v4340 = vpop.f32.mrf.mxu0
        %v4341 = vadd.f32 0.0, %v4340
        %v4342 = vpop.f32.mrf.mxu0
        %v4343 = vadd.f32 0.0, %v4342
        %4344 = vmatmul.bf16.gmra.mxu0 %v4220
        %v4345 = vpop.f32.mrf.mxu0
        %v4346 = vadd.f32 0.0, %v4345
        %v4347 = vpop.f32.mrf.mxu0
        %v4348 = vadd.f32 0.0, %v4347
        %4349 = vmatmul.bf16.gmra.mxu0 %v4221
        %v4350 = vpop.f32.mrf.mxu0
        %v4351 = vadd.f32 0.0, %v4350
        %v4352 = vpop.f32.mrf.mxu0
        %v4353 = vadd.f32 0.0, %v4352
        %4354 = vmatmul.bf16.gmra.mxu0 %v4222
        %v4355 = vpop.f32.mrf.mxu0
        %v4356 = vadd.f32 0.0, %v4355
        %v4357 = vpop.f32.mrf.mxu0
        %v4358 = vadd.f32 0.0, %v4357
        %4359 = vmatmul.bf16.gmra.mxu0 %v4223
        %v4360 = vpop.f32.mrf.mxu0
        %v4361 = vadd.f32 0.0, %v4360
        %v4362 = vpop.f32.mrf.mxu0
        %v4363 = vadd.f32 0.0, %v4362
        %4364 = vmatmul.bf16.gmra.mxu0 %v4224
        %v4365 = vpop.f32.mrf.mxu0
        %v4366 = vadd.f32 0.0, %v4365
        %v4367 = vpop.f32.mrf.mxu0
        %v4368 = vadd.f32 0.0, %v4367
        %4369 = vmatmul.bf16.gmra.mxu0 %v4225
        %v4370 = vpop.f32.mrf.mxu0
        %v4371 = vadd.f32 0.0, %v4370
        %v4372 = vpop.f32.mrf.mxu0
        %v4373 = vadd.f32 0.0, %v4372
        %4374 = vmatmul.bf16.gmra.mxu0 %v4226
        %v4375 = vpop.f32.mrf.mxu0
        %v4376 = vadd.f32 0.0, %v4375
        %v4377 = vpop.f32.mrf.mxu0
        %v4378 = vadd.f32 0.0, %v4377
        %4379 = vdwg.mxu0
        %v4380 = vadd.f32 %v3954, %v4301
        %v4381 = vadd.f32 %v3955, %v4303
        %v4382 = vadd.f32 %v3956, %v4306
        %v4383 = vadd.f32 %v3957, %v4308
        %v4384 = vadd.f32 %v3958, %v4311
        %v4385 = vadd.f32 %v3959, %v4313
        %v4386 = vadd.f32 %v3960, %v4316
        %v4387 = vadd.f32 %v3961, %v4318
        %v4388 = vadd.f32 %v3962, %v4321
        %v4389 = vadd.f32 %v3963, %v4323
        %v4390 = vadd.f32 %v3964, %v4326
        %v4391 = vadd.f32 %v3965, %v4328
        %v4392 = vadd.f32 %v3966, %v4331
        %v4393 = vadd.f32 %v3967, %v4333
        %v4394 = vadd.f32 %v3968, %v4336
        %v4395 = vadd.f32 %v3969, %v4338
        %v4396 = vadd.f32 %v3970, %v4341
        %v4397 = vadd.f32 %v3971, %v4343
        %v4398 = vadd.f32 %v3972, %v4346
        %v4399 = vadd.f32 %v3973, %v4348
        %v4400 = vadd.f32 %v3974, %v4351
        %v4401 = vadd.f32 %v3975, %v4353
        %v4402 = vadd.f32 %v3976, %v4356
        %v4403 = vadd.f32 %v3977, %v4358
        %v4404 = vadd.f32 %v3978, %v4361
        %v4405 = vadd.f32 %v3979, %v4363
        %v4406 = vadd.f32 %v3980, %v4366
        %v4407 = vadd.f32 %v3981, %v4368
        %v4408 = vadd.f32 %v3982, %v4371
        %v4409 = vadd.f32 %v3983, %v4373
        %v4410 = vadd.f32 %v3984, %v4376
        %v4411 = vadd.f32 %v3985, %v4378
        %v4412 = vld [vmem:[%s2] sm:$0x1]
        %v4414 = vperm.slane %v4412, 0
        %v4416 = vadd.f32 %v4380, %v4414
        %v4417 = vadd.f32 %v4381, %v4414
        %v4418 = vadd.f32 %v4382, %v4414
        %v4419 = vadd.f32 %v4383, %v4414
        %v4420 = vadd.f32 %v4384, %v4414
        %v4421 = vadd.f32 %v4385, %v4414
        %v4422 = vadd.f32 %v4386, %v4414
        %v4423 = vadd.f32 %v4387, %v4414
        %v4424 = vadd.f32 %v4388, %v4414
        %v4425 = vadd.f32 %v4389, %v4414
        %v4426 = vadd.f32 %v4390, %v4414
        %v4427 = vadd.f32 %v4391, %v4414
        %v4428 = vadd.f32 %v4392, %v4414
        %v4429 = vadd.f32 %v4393, %v4414
        %v4430 = vadd.f32 %v4394, %v4414
        %v4431 = vadd.f32 %v4395, %v4414
        %v4432 = vadd.f32 %v4396, %v4414
        %v4433 = vadd.f32 %v4397, %v4414
        %v4434 = vadd.f32 %v4398, %v4414
        %v4435 = vadd.f32 %v4399, %v4414
        %v4436 = vadd.f32 %v4400, %v4414
        %v4437 = vadd.f32 %v4401, %v4414
        %v4438 = vadd.f32 %v4402, %v4414
        %v4439 = vadd.f32 %v4403, %v4414
        %v4440 = vadd.f32 %v4404, %v4414
        %v4441 = vadd.f32 %v4405, %v4414
        %v4442 = vadd.f32 %v4406, %v4414
        %v4443 = vadd.f32 %v4407, %v4414
        %v4444 = vadd.f32 %v4408, %v4414
        %v4445 = vadd.f32 %v4409, %v4414
        %v4446 = vadd.f32 %v4410, %v4414
        %v4447 = vadd.f32 %v4411, %v4414
        %v4448 = vadd.f32 %v4416, %v4417
        %v4449 = vadd.f32 %v4448, %v4418
        %v4450 = vadd.f32 %v4449, %v4419
        %v4451 = vadd.f32 %v4450, %v4420
        %v4452 = vadd.f32 %v4451, %v4421
        %v4453 = vadd.f32 %v4452, %v4422
        %v4454 = vadd.f32 %v4453, %v4423
        %v4455 = vadd.f32 %v4454, %v4424
        %v4456 = vadd.f32 %v4455, %v4425
        %v4457 = vadd.f32 %v4456, %v4426
        %v4458 = vadd.f32 %v4457, %v4427
        %v4459 = vadd.f32 %v4458, %v4428
        %v4460 = vadd.f32 %v4459, %v4429
        %v4461 = vadd.f32 %v4460, %v4430
        %v4462 = vadd.f32 %v4461, %v4431
        %v4463 = vadd.f32 %v4462, %v4432
        %v4464 = vadd.f32 %v4463, %v4433
        %v4465 = vadd.f32 %v4464, %v4434
        %v4466 = vadd.f32 %v4465, %v4435
        %v4467 = vadd.f32 %v4466, %v4436
        %v4468 = vadd.f32 %v4467, %v4437
        %v4469 = vadd.f32 %v4468, %v4438
        %v4470 = vadd.f32 %v4469, %v4439
        %v4471 = vadd.f32 %v4470, %v4440
        %v4472 = vadd.f32 %v4471, %v4441
        %v4473 = vadd.f32 %v4472, %v4442
        %v4474 = vadd.f32 %v4473, %v4443
        %v4475 = vadd.f32 %v4474, %v4444
        %v4476 = vadd.f32 %v4475, %v4445
        %v4477 = vadd.f32 %v4476, %v4446
        %v4478 = vadd.f32 %v4477, %v4447
        %v4479 = vrot.slane %v4478, 4
        %v4480 = vadd.f32 %v4478, %v4479
        %v4481 = vrot.slane %v4480, 2
        %v4482 = vadd.f32 %v4480, %v4481
        %v4483 = vrot.slane %v4482, 1
        %v4484 = vadd.f32 %v4482, %v4483
        %v4485 = vrcp.pop 256.0
        %v4486 = vmul.f32 256.0, %v4485
        %v4487 = vsub.f32 1.0, %v4486
        %v4488 = vmul.f32 %v4485, %v4487
        %v4489 = vadd.f32 %v4485, %v4488
        %vm4490 = vweird.f32 %v4485
        %v4491 = vsel %vm4490, %v4485, %v4489
        %v4492 = vmul.f32 %v4484, %v4491
        %v4493 = vsub.f32 %v4416, %v4492
        %v4494 = vsub.f32 %v4417, %v4492
        %v4495 = vsub.f32 %v4418, %v4492
        %v4496 = vsub.f32 %v4419, %v4492
        %v4497 = vsub.f32 %v4420, %v4492
        %v4498 = vsub.f32 %v4421, %v4492
        %v4499 = vsub.f32 %v4422, %v4492
        %v4500 = vsub.f32 %v4423, %v4492
        %v4501 = vsub.f32 %v4424, %v4492
        %v4502 = vsub.f32 %v4425, %v4492
        %v4503 = vsub.f32 %v4426, %v4492
        %v4504 = vsub.f32 %v4427, %v4492
        %v4505 = vsub.f32 %v4428, %v4492
        %v4506 = vsub.f32 %v4429, %v4492
        %v4507 = vsub.f32 %v4430, %v4492
        %v4508 = vsub.f32 %v4431, %v4492
        %v4509 = vsub.f32 %v4432, %v4492
        %v4510 = vsub.f32 %v4433, %v4492
        %v4511 = vsub.f32 %v4434, %v4492
        %v4512 = vsub.f32 %v4435, %v4492
        %v4513 = vsub.f32 %v4436, %v4492
        %v4514 = vsub.f32 %v4437, %v4492
        %v4515 = vsub.f32 %v4438, %v4492
        %v4516 = vsub.f32 %v4439, %v4492
        %v4517 = vsub.f32 %v4440, %v4492
        %v4518 = vsub.f32 %v4441, %v4492
        %v4519 = vsub.f32 %v4442, %v4492
        %v4520 = vsub.f32 %v4443, %v4492
        %v4521 = vsub.f32 %v4444, %v4492
        %v4522 = vsub.f32 %v4445, %v4492
        %v4523 = vsub.f32 %v4446, %v4492
        %v4524 = vsub.f32 %v4447, %v4492
        %v4525 = vmul.f32 %v4493, %v4493
        %v4526 = vmul.f32 %v4494, %v4494
        %v4527 = vmul.f32 %v4495, %v4495
        %v4528 = vmul.f32 %v4496, %v4496
        %v4529 = vmul.f32 %v4497, %v4497
        %v4530 = vmul.f32 %v4498, %v4498
        %v4531 = vmul.f32 %v4499, %v4499
        %v4532 = vmul.f32 %v4500, %v4500
        %v4533 = vmul.f32 %v4501, %v4501
        %v4534 = vmul.f32 %v4502, %v4502
        %v4535 = vmul.f32 %v4503, %v4503
        %v4536 = vmul.f32 %v4504, %v4504
        %v4537 = vmul.f32 %v4505, %v4505
        %v4538 = vmul.f32 %v4506, %v4506
        %v4539 = vmul.f32 %v4507, %v4507
        %v4540 = vmul.f32 %v4508, %v4508
        %v4541 = vmul.f32 %v4509, %v4509
        %v4542 = vmul.f32 %v4510, %v4510
        %v4543 = vmul.f32 %v4511, %v4511
        %v4544 = vmul.f32 %v4512, %v4512
        %v4545 = vmul.f32 %v4513, %v4513
        %v4546 = vmul.f32 %v4514, %v4514
        %v4547 = vmul.f32 %v4515, %v4515
        %v4548 = vmul.f32 %v4516, %v4516
        %v4549 = vmul.f32 %v4517, %v4517
        %v4550 = vmul.f32 %v4518, %v4518
        %v4551 = vmul.f32 %v4519, %v4519
        %v4552 = vmul.f32 %v4520, %v4520
        %v4553 = vmul.f32 %v4521, %v4521
        %v4554 = vmul.f32 %v4522, %v4522
        %v4555 = vmul.f32 %v4523, %v4523
        %v4556 = vmul.f32 %v4524, %v4524
        %v4557 = vadd.f32 %v4525, %v4526
        %v4558 = vadd.f32 %v4557, %v4527
        %v4559 = vadd.f32 %v4558, %v4528
        %v4560 = vadd.f32 %v4559, %v4529
        %v4561 = vadd.f32 %v4560, %v4530
        %v4562 = vadd.f32 %v4561, %v4531
        %v4563 = vadd.f32 %v4562, %v4532
        %v4564 = vadd.f32 %v4563, %v4533
        %v4565 = vadd.f32 %v4564, %v4534
        %v4566 = vadd.f32 %v4565, %v4535
        %v4567 = vadd.f32 %v4566, %v4536
        %v4568 = vadd.f32 %v4567, %v4537
        %v4569 = vadd.f32 %v4568, %v4538
        %v4570 = vadd.f32 %v4569, %v4539
        %v4571 = vadd.f32 %v4570, %v4540
        %v4572 = vadd.f32 %v4571, %v4541
        %v4573 = vadd.f32 %v4572, %v4542
        %v4574 = vadd.f32 %v4573, %v4543
        %v4575 = vadd.f32 %v4574, %v4544
        %v4576 = vadd.f32 %v4575, %v4545
        %v4577 = vadd.f32 %v4576, %v4546
        %v4578 = vadd.f32 %v4577, %v4547
        %v4579 = vadd.f32 %v4578, %v4548
        %v4580 = vadd.f32 %v4579, %v4549
        %v4581 = vadd.f32 %v4580, %v4550
        %v4582 = vadd.f32 %v4581, %v4551
        %v4583 = vadd.f32 %v4582, %v4552
        %v4584 = vadd.f32 %v4583, %v4553
        %v4585 = vadd.f32 %v4584, %v4554
        %v4586 = vadd.f32 %v4585, %v4555
        %v4587 = vadd.f32 %v4586, %v4556
        %v4588 = vrot.slane %v4587, 4
        %v4589 = vadd.f32 %v4587, %v4588
        %v4590 = vrot.slane %v4589, 2
        %v4591 = vadd.f32 %v4589, %v4590
        %v4592 = vrot.slane %v4591, 1
        %v4593 = vadd.f32 %v4591, %v4592
        %v4594 = vmul.f32 %v4593, %v4491
        %v4595 = vadd.f32 %v4594, 1e-05
        %v4596 = vrsqrt.pop %v4595
        %v4597 = vmul.f32 %v4596, %v4595
        %v4598 = vmul.f32 %v4597, %v4596
        %v4599 = vmul.f32 0.5, %v4598
        %v4600 = vsub.f32 1.5, %v4599
        %v4601 = vmul.f32 %v4596, %v4600
        %vm4602 = vweird.f32 %v4595
        %vm4603 = vweird.f32 %v4596
        %vm4604 = vmor %vm4602, %vm4603
        %v4605 = vsel %vm4604, %v4596, %v4601
        %v4606 = vld [vmem:[%s247] sm:$0x1]
        %v4607 = vmul.f32 %v4605, %v4606
        %v4608 = vperm.slane %v4607, 0
        %v4609 = vmul.f32 %v4493, %v4608
        %v4610 = vmul.f32 %v4494, %v4608
        %v4611 = vmul.f32 %v4495, %v4608
        %v4612 = vmul.f32 %v4496, %v4608
        %v4613 = vmul.f32 %v4497, %v4608
        %v4614 = vmul.f32 %v4498, %v4608
        %v4615 = vmul.f32 %v4499, %v4608
        %v4616 = vmul.f32 %v4500, %v4608
        %v4617 = vmul.f32 %v4501, %v4608
        %v4618 = vmul.f32 %v4502, %v4608
        %v4619 = vmul.f32 %v4503, %v4608
        %v4620 = vmul.f32 %v4504, %v4608
        %v4621 = vmul.f32 %v4505, %v4608
        %v4622 = vmul.f32 %v4506, %v4608
        %v4623 = vmul.f32 %v4507, %v4608
        %v4624 = vmul.f32 %v4508, %v4608
        %v4625 = vmul.f32 %v4509, %v4608
        %v4626 = vmul.f32 %v4510, %v4608
        %v4627 = vmul.f32 %v4511, %v4608
        %v4628 = vmul.f32 %v4512, %v4608
        %v4629 = vmul.f32 %v4513, %v4608
        %v4630 = vmul.f32 %v4514, %v4608
        %v4631 = vmul.f32 %v4515, %v4608
        %v4632 = vmul.f32 %v4516, %v4608
        %v4633 = vmul.f32 %v4517, %v4608
        %v4634 = vmul.f32 %v4518, %v4608
        %v4635 = vmul.f32 %v4519, %v4608
        %v4636 = vmul.f32 %v4520, %v4608
        %v4637 = vmul.f32 %v4521, %v4608
        %v4638 = vmul.f32 %v4522, %v4608
        %v4639 = vmul.f32 %v4523, %v4608
        %v4640 = vmul.f32 %v4524, %v4608
        %v4641 = vld [vmem:[%s250] sm:$0x1]
        %v4643 = vperm.slane %v4641, 0
        %v4645 = vadd.f32 %v4609, %v4643
        %v4646 = vadd.f32 %v4610, %v4643
        %v4647 = vadd.f32 %v4611, %v4643
        %v4648 = vadd.f32 %v4612, %v4643
        %v4649 = vadd.f32 %v4613, %v4643
        %v4650 = vadd.f32 %v4614, %v4643
        %v4651 = vadd.f32 %v4615, %v4643
        %v4652 = vadd.f32 %v4616, %v4643
        %v4653 = vadd.f32 %v4617, %v4643
        %v4654 = vadd.f32 %v4618, %v4643
        %v4655 = vadd.f32 %v4619, %v4643
        %v4656 = vadd.f32 %v4620, %v4643
        %v4657 = vadd.f32 %v4621, %v4643
        %v4658 = vadd.f32 %v4622, %v4643
        %v4659 = vadd.f32 %v4623, %v4643
        %v4660 = vadd.f32 %v4624, %v4643
        %v4661 = vadd.f32 %v4625, %v4643
        %v4662 = vadd.f32 %v4626, %v4643
        %v4663 = vadd.f32 %v4627, %v4643
        %v4664 = vadd.f32 %v4628, %v4643
        %v4665 = vadd.f32 %v4629, %v4643
        %v4666 = vadd.f32 %v4630, %v4643
        %v4667 = vadd.f32 %v4631, %v4643
        %v4668 = vadd.f32 %v4632, %v4643
        %v4669 = vadd.f32 %v4633, %v4643
        %v4670 = vadd.f32 %v4634, %v4643
        %v4671 = vadd.f32 %v4635, %v4643
        %v4672 = vadd.f32 %v4636, %v4643
        %v4673 = vadd.f32 %v4637, %v4643
        %v4674 = vadd.f32 %v4638, %v4643
        %v4675 = vadd.f32 %v4639, %v4643
        %v4676 = vadd.f32 %v4640, %v4643
        %v4677 = vmax.f32 %v4645, 0.0
        %v4678 = vmax.f32 %v4646, 0.0
        %v4679 = vmax.f32 %v4647, 0.0
        %v4680 = vmax.f32 %v4648, 0.0
        %v4681 = vmax.f32 %v4649, 0.0
        %v4682 = vmax.f32 %v4650, 0.0
        %v4683 = vmax.f32 %v4651, 0.0
        %v4684 = vmax.f32 %v4652, 0.0
        %v4685 = vmax.f32 %v4653, 0.0
        %v4686 = vmax.f32 %v4654, 0.0
        %v4687 = vmax.f32 %v4655, 0.0
        %v4688 = vmax.f32 %v4656, 0.0
        %v4689 = vmax.f32 %v4657, 0.0
        %v4690 = vmax.f32 %v4658, 0.0
        %v4691 = vmax.f32 %v4659, 0.0
        %v4692 = vmax.f32 %v4660, 0.0
        %v4693 = vmax.f32 %v4661, 0.0
        %v4694 = vmax.f32 %v4662, 0.0
        %v4695 = vmax.f32 %v4663, 0.0
        %v4696 = vmax.f32 %v4664, 0.0
        %v4697 = vmax.f32 %v4665, 0.0
        %v4698 = vmax.f32 %v4666, 0.0
        %v4699 = vmax.f32 %v4667, 0.0
        %v4700 = vmax.f32 %v4668, 0.0
        %v4701 = vmax.f32 %v4669, 0.0
        %v4702 = vmax.f32 %v4670, 0.0
        %v4703 = vmax.f32 %v4671, 0.0
        %v4704 = vmax.f32 %v4672, 0.0
        %v4705 = vmax.f32 %v4673, 0.0
        %v4706 = vmax.f32 %v4674, 0.0
        %v4707 = vmax.f32 %v4675, 0.0
        %v4708 = vmax.f32 %v4676, 0.0
        %4709 = vst [vmem:[%s239] sm:$0xff] %v4677
        %4710 = vst [vmem:[%s239 + $0x8] sm:$0xff] %v4678
        %4711 = vst [vmem:[%s239 + $0x10] sm:$0xff] %v4679
        %4712 = vst [vmem:[%s239 + $0x18] sm:$0xff] %v4680
        %4713 = vst [vmem:[%s239 + $0x20] sm:$0xff] %v4681
        %4714 = vst [vmem:[%s239 + $0x28] sm:$0xff] %v4682
        %4715 = vst [vmem:[%s239 + $0x30] sm:$0xff] %v4683
        %4716 = vst [vmem:[%s239 + $0x38] sm:$0xff] %v4684
        %4717 = vst [vmem:[%s239 + $0x40] sm:$0xff] %v4685
        %4718 = vst [vmem:[%s239 + $0x48] sm:$0xff] %v4686
        %4719 = vst [vmem:[%s239 + $0x50] sm:$0xff] %v4687
        %4720 = vst [vmem:[%s239 + $0x58] sm:$0xff] %v4688
        %4721 = vst [vmem:[%s239 + $0x60] sm:$0xff] %v4689
        %4722 = vst [vmem:[%s239 + $0x68] sm:$0xff] %v4690
        %4723 = vst [vmem:[%s239 + $0x70] sm:$0xff] %v4691
        %4724 = vst [vmem:[%s239 + $0x78] sm:$0xff] %v4692
        %4725 = vst [vmem:[%s239 + $0x80] sm:$0xff] %v4693
        %4726 = vst [vmem:[%s239 + $0x88] sm:$0xff] %v4694
        %4727 = vst [vmem:[%s239 + $0x90] sm:$0xff] %v4695
        %4728 = vst [vmem:[%s239 + $0x98] sm:$0xff] %v4696
        %4729 = vst [vmem:[%s239 + $0xa0] sm:$0xff] %v4697
        %4730 = vst [vmem:[%s239 + $0xa8] sm:$0xff] %v4698
        %4731 = vst [vmem:[%s239 + $0xb0] sm:$0xff] %v4699
        %4732 = vst [vmem:[%s239 + $0xb8] sm:$0xff] %v4700
        %4733 = vst [vmem:[%s239 + $0xc0] sm:$0xff] %v4701
        %4734 = vst [vmem:[%s239 + $0xc8] sm:$0xff] %v4702
        %4735 = vst [vmem:[%s239 + $0xd0] sm:$0xff] %v4703
        %4736 = vst [vmem:[%s239 + $0xd8] sm:$0xff] %v4704
        %4737 = vst [vmem:[%s239 + $0xe0] sm:$0xff] %v4705
        %4738 = vst [vmem:[%s239 + $0xe8] sm:$0xff] %v4706
        %4739 = vst [vmem:[%s239 + $0xf0] sm:$0xff] %v4707
        %4740 = vst [vmem:[%s239 + $0xf8] sm:$0xff] %v4708
        %s4741 = sand.u32 %s147, 1
        %s4742 = scalar_lea.sflag [#allocation3], %s4741
        %s4743 = sand.u32 %s147, 1
        %s4744 = smul.addr %s4743, 256
        %s4745 = scalar_lea.vmem [#allocation2], %s4744
        // Predicated region
        $region41: #{conv2d_block_pallas.1} parent=39 // pred_check
          %p4746 = pneg %p157
        $region42: #{conv2d_block_pallas.1} parent=39 // pred_check_branch
          %4748 = sbr.rel (%p4746) target = $region44
        $region43: #{conv2d_block_pallas.1} parent=39 // pred_region
          %4750 = vsyncadd %s4742, 0
          %s4751 = smul.addr %s19, 32
          %s4752 = smul.addr %s4751, 8
          %s4753 = scalar_lea.hbm %s5, %s4752
          %s4754 = sshll.u32 %s4745, 4
          %s4755 = int_to_ptr.vmem [resolvable:$true] %s4754
          %s4756 = sshll.u32 %s4753, 4
          %s4757 = int_to_ptr.hbm [resolvable:$true] %s4756
          %4762 = dma.vmem_to_hbm [thread:$0]  %s4755, 4096, %s4757, %s4742, 128, 128, 8
        $region44: #{conv2d_block_pallas.1} parent=39 // pred_fallthru
          _
      $region40: #{conv2d_block_pallas.1} parent=5 // pred_fallthru
        _
      %p4763 = scmp.le.s32.totalorder 2, %s14
      // Predicated region
      $region45: #{conv2d_block_pallas.1} parent=5 // pred_check
        %p4764 = pneg %p4763
      $region46: #{conv2d_block_pallas.1} parent=5 // pred_check_branch
        %4766 = sbr.rel (%p4764) target = $region48
      $region47: #{conv2d_block_pallas.1} parent=5 // pred_region
        %s4767 = ssub.s32 %s14, 2
        // Predicated region
        $region49: #{conv2d_block_pallas.1} parent=47 // pred_check
          %p4768 = pneg %p163
        $region50: #{conv2d_block_pallas.1} parent=47 // pred_check_branch
          %4770 = sbr.rel (%p4768) target = $region52
        $region51: #{conv2d_block_pallas.1} parent=47 // pred_region
          %s4771 = sand.u32 %s148, 1
          %s4772 = scalar_lea.sflag [#allocation3], %s4771
          %s4773 = sand.u32 %s148, 1
          %s4774 = smul.addr %s4773, 256
          %s4775 = scalar_lea.vmem [#allocation2], %s4774
          %4777 = dma.done %s4772, 4096
        $region52: #{conv2d_block_pallas.1} parent=47 // pred_fallthru
          _
      $region48: #{conv2d_block_pallas.1} parent=5 // pred_fallthru
        _
    $region6: #{conv2d_block_pallas.1} parent=1 // loop_footer
      %s18 = sadd.s32 1, %s14
    $region7: #{conv2d_block_pallas.1} parent=1 // loop_footer_branch
      %13 = sbr.rel target = $region3
    $region8: #{conv2d_block_pallas.1} parent=1 // loop_exit
      _
    %4778 = vsyncpa [#allocation3], 1
    %s4779 = scalar_lea.sflag [#allocation3], 1
    %4780 = vsyncpa %s4779, 1

</llo_original>
